<compile_context>
chip_gen: v7x
topology: tpu7x:2x2x1
jax: 0.10.0
libtpu: 0.0.40
codegen_flags: <defaults>
</compile_context>

<pallas_src>
import jax
import jax.numpy as jnp
import numpy as np
from jax import lax
from jax.experimental import pallas as pl
from jax.experimental.pallas import tpu as pltpu


def make_mlkd_kernel(temps, batch_size, class_num):
    """temps = (T, 3.0, 5.0, 2.0, 6.0) -- static Python floats baked in."""
    temps = tuple(float(t) for t in temps)
    inv_b = 1.0 / float(batch_size)
    inv_c = 1.0 / float(class_num)

    def softmax_with_log(x, temp):
        # One exp / one rowmax / one rowsum shared between p and log_p.
        z = x * (1.0 / temp)
        z = z - jnp.max(z, axis=1, keepdims=True)
        e = jnp.exp(z)
        s = jnp.sum(e, axis=1, keepdims=True)
        p = e / s
        log_p = z - jnp.log(s)
        return p, log_p

    def gram_cc(p):  # p.T @ p -> (C, C), contraction folded into the MXU op
        return lax.dot_general(p, p, (((0,), (0,)), ((), ())),
                               preferred_element_type=jnp.float32)

    def gram_bc(p):  # p @ p.T -> (B, B), contraction folded into the MXU op
        return lax.dot_general(p, p, (((1,), (1,)), ((), ())),
                               preferred_element_type=jnp.float32)

    def kernel(sw_ref, tw_ref, ss_ref, ts_ref, sums_ref, conf_ref, cconf_ref):
        sw = sw_ref[...].astype(jnp.float32)   # student weak   (B, C)
        tw = tw_ref[...].astype(jnp.float32)   # teacher weak   (B, C)
        ss = ss_ref[...].astype(jnp.float32)   # student strong (B, C)
        ts = ts_ref[...].astype(jnp.float32)   # teacher strong (B, C)

        # --- teacher-weak confidence statistics (temperature 1.0) ----------
        pt1, _ = softmax_with_log(tw, 1.0)
        conf_ref[...] = jnp.max(pt1, axis=1, keepdims=True)    # (B, 1)
        cconf_ref[...] = jnp.sum(pt1, axis=0, keepdims=True)   # (1, C)

        # --- elementwise accumulators: one final reduction per loss family -
        kl_weak = jnp.zeros((batch_size, class_num), jnp.float32)
        kl_strong = jnp.zeros((batch_size, class_num), jnp.float32)
        cc_acc = jnp.zeros((class_num, class_num), jnp.float32)
        bc_acc = jnp.zeros((batch_size, batch_size), jnp.float32)

        # NOTE: at production B*C, restructure this unrolled temperature loop
        # as a size-5 grid axis / fori_loop to bound VMEM/vreg pressure
        # (v7x has 64 MiB VMEM); at toy sizes unrolling is cheapest.

        # Weak pair: shared softmaxes feed kd, cc and bc at every temperature.
        for ti, temp in enumerate(temps):
            ps, log_ps = softmax_with_log(sw, temp)
            pt, log_pt = softmax_with_log(tw, temp)

            kl = (temp * temp) * (pt * (log_pt - log_ps))
            kl_weak = kl_weak + kl
            if ti >= 3:  # temps 2.0 and 6.0 also feed loss_kd_strong
                kl_strong = kl_strong + kl

            dcc = gram_cc(pt) - gram_cc(ps)
            cc_acc = cc_acc + dcc * dcc
            dbc = gram_bc(pt) - gram_bc(ps)
            bc_acc = bc_acc + dbc * dbc

        # Strong pair: kd only, at temps (T, 3, 5).
        for temp in temps[:3]:
            ps, log_ps = softmax_with_log(ss, temp)
            pt, log_pt = softmax_with_log(ts, temp)
            kl_strong = kl_strong + (temp * temp) * (pt * (log_pt - log_ps))

        sums_ref[0] = jnp.sum(kl_weak) * inv_b     # kd_weak   (pre-mask)
        sums_ref[1] = jnp.sum(kl_strong) * inv_b   # kd_strong
        sums_ref[2] = jnp.sum(cc_acc) * inv_c      # cc_weak   (pre-mask)
        sums_ref[3] = jnp.sum(bc_acc) * inv_b      # bc_weak   (pre-mask)

    return kernel


def mlkd_loss(y_s, y_t, T=4.0):
    """Pallas implementation of MLKD.forward (logit_stand=False, mlogit_temp=False)."""
    logits_student_w, logits_student_s = y_s
    logits_teacher_w, logits_teacher_s = y_t
    B, C = logits_student_w.shape

    temps = (float(T), 3.0, 5.0, 2.0, 6.0)
    kernel = make_mlkd_kernel(temps, B, C)

    sums, conf, cconf = pl.pallas_call(
        kernel,
        out_shape=(
            jax.ShapeDtypeStruct((4,), jnp.float32),      # per-family sums
            jax.ShapeDtypeStruct((B, 1), jnp.float32),    # row confidence
            jax.ShapeDtypeStruct((1, C), jnp.float32),    # class confidence
        ),
        in_specs=[
            pl.BlockSpec(memory_space=pltpu.MemorySpace.VMEM),  # student weak
            pl.BlockSpec(memory_space=pltpu.MemorySpace.VMEM),  # teacher weak
            pl.BlockSpec(memory_space=pltpu.MemorySpace.VMEM),  # student strong
            pl.BlockSpec(memory_space=pltpu.MemorySpace.VMEM),  # teacher strong
        ],
        out_specs=(
            pl.BlockSpec(memory_space=pltpu.MemorySpace.SMEM),
            pl.BlockSpec(memory_space=pltpu.MemorySpace.VMEM),
            pl.BlockSpec(memory_space=pltpu.MemorySpace.VMEM),
        ),
    )(
        logits_student_w.astype(jnp.float32),
        logits_teacher_w.astype(jnp.float32),
        logits_student_s.astype(jnp.float32),
        logits_teacher_s.astype(jnp.float32),
    )

    # --- plain-JAX glue: percentile-based confidence masking ----------------
    # TODO(synk): np.percentile (median w/ linear interpolation) needs a sort,
    # which has no clean Pallas equivalent; only the sort + two scalar
    # mask-means remain outside the kernel.
    confidence = conf[:, 0]
    class_confidence = cconf[0, :]
    conf_thresh = jnp.percentile(confidence, 50.0)
    mask_mean = jnp.mean((confidence <= conf_thresh).astype(jnp.float32))
    class_conf_thresh = jnp.percentile(class_confidence, 50.0)
    cmask_mean = jnp.mean((class_confidence <= class_conf_thresh).astype(jnp.float32))

    # (scalar * mask).mean() == scalar * mask.mean()
    return sums[0] * mask_mean + sums[1] + sums[2] * cmask_mean + sums[3] * mask_mean


# ---------------------------------------------------------------------------
# Pure-JAX reference (direct transcription of the PyTorch module) for checking
# ---------------------------------------------------------------------------
def _kd_ref(s, t, temp):
    log_ps = jax.nn.log_softmax(s / temp, axis=1)
    pt = jax.nn.softmax(t / temp, axis=1)
    kl = pt * (jnp.log(pt) - log_ps) * temp ** 2
    return jnp.mean(jnp.sum(kl, axis=1))


def _cc_ref(s, t, temp):
    ps = jax.nn.softmax(s / temp, axis=1)
    pt = jax.nn.softmax(t / temp, axis=1)
    return jnp.sum((pt.T @ pt - ps.T @ ps) ** 2) / s.shape[1]


def _bc_ref(s, t, temp):
    ps = jax.nn.softmax(s / temp, axis=1)
    pt = jax.nn.softmax(t / temp, axis=1)
    return jnp.sum((pt @ pt.T - ps @ ps.T) ** 2) / s.shape[0]


def mlkd_reference(y_s, y_t, T=4.0):
    sw, ss = y_s
    tw, ts = y_t
    pred_tw = jax.nn.softmax(tw, axis=1)
    confidence = jnp.max(pred_tw, axis=1)
    mask = (confidence <= jnp.percentile(confidence, 50.0)).astype(jnp.float32)
    class_conf = jnp.sum(pred_tw, axis=0)
    cmask = (class_conf <= jnp.percentile(class_conf, 50.0)).astype(jnp.float32)

    temps = (float(T), 3.0, 5.0, 2.0, 6.0)
    loss_kd_weak = sum(jnp.mean(_kd_ref(sw, tw, t) * mask) for t in temps)
    loss_kd_strong = (_kd_ref(ss, ts, temps[0]) + _kd_ref(ss, ts, 3.0)
                      + _kd_ref(ss, ts, 5.0) + _kd_ref(sw, tw, 2.0)
                      + _kd_ref(sw, tw, 6.0))
    loss_cc_weak = sum(jnp.mean(_cc_ref(sw, tw, t) * cmask) for t in temps)
    loss_bc_weak = sum(jnp.mean(_bc_ref(sw, tw, t) * mask) for t in temps)
    return (loss_kd_weak + loss_kd_strong) + loss_cc_weak + loss_bc_weak


if __name__ == "__main__":
    B, C = 8, 32
    T = 4.0
    key = jax.random.PRNGKey(0)
    k1, k2, k3, k4 = jax.random.split(key, 4)
    logits_student_w = 2.0 * jax.random.normal(k1, (B, C), dtype=jnp.float32)
    logits_teacher_w = 2.0 * jax.random.normal(k2, (B, C), dtype=jnp.float32)
    logits_student_s = 2.0 * jax.random.normal(k3, (B, C), dtype=jnp.float32)
    logits_teacher_s = 2.0 * jax.random.normal(k4, (B, C), dtype=jnp.float32)

    y_s = (logits_student_w, logits_student_s)
    y_t = (logits_teacher_w, logits_teacher_s)

    out = mlkd_loss(y_s, y_t, T=T)
    out = jax.block_until_ready(out)

    ref = jax.block_until_ready(mlkd_reference(y_s, y_t, T=T))
    np.testing.assert_allclose(np.asarray(out), np.asarray(ref), rtol=1e-4, atol=1e-5)

    print("KERNEL_OK")
</pallas_src>

<mosaic_0001>
module attributes {stable_mosaic.version = 11 : i64} {
  func.func @kernel(%arg0: memref<8x32xf32, #tpu.memory_space<vmem>>, %arg1: memref<8x32xf32, #tpu.memory_space<vmem>>, %arg2: memref<8x32xf32, #tpu.memory_space<vmem>>, %arg3: memref<8x32xf32, #tpu.memory_space<vmem>>, %arg4: memref<4xf32, #tpu.memory_space<smem>>, %arg5: memref<8x1xf32, #tpu.memory_space<vmem>>, %arg6: memref<1x32xf32, #tpu.memory_space<vmem>>) attributes {dimension_semantics = [], scalar_prefetch = 0 : i64, scratch_operands = 0 : i64, tpu.core_type = #tpu.core_type<tc>} {
    %c0 = arith.constant 0 : index
    %c0_0 = arith.constant 0 : index
    %0 = vector.load %arg0[%c0, %c0_0] : memref<8x32xf32, #tpu.memory_space<vmem>>, vector<8x32xf32>
    %c0_1 = arith.constant 0 : index
    %c0_2 = arith.constant 0 : index
    %1 = vector.load %arg1[%c0_1, %c0_2] : memref<8x32xf32, #tpu.memory_space<vmem>>, vector<8x32xf32>
    %c0_3 = arith.constant 0 : index
    %c0_4 = arith.constant 0 : index
    %2 = vector.load %arg2[%c0_3, %c0_4] : memref<8x32xf32, #tpu.memory_space<vmem>>, vector<8x32xf32>
    %c0_5 = arith.constant 0 : index
    %c0_6 = arith.constant 0 : index
    %3 = vector.load %arg3[%c0_5, %c0_6] : memref<8x32xf32, #tpu.memory_space<vmem>>, vector<8x32xf32>
    %cst = arith.constant 1.000000e+00 : f32
    %4 = vector.broadcast %cst : f32 to vector<8x32xf32>
    %5 = arith.mulf %1, %4 : vector<8x32xf32>
    %cst_7 = arith.constant dense<0xFF800000> : vector<8xf32>
    %6 = vector.multi_reduction <maximumf>, %5, %cst_7 [1] : vector<8x32xf32> to vector<8xf32>
    %7 = vector.shape_cast %6 : vector<8xf32> to vector<8x1xf32>
    %8 = vector.broadcast %7 : vector<8x1xf32> to vector<8x32xf32>
    %9 = arith.subf %5, %8 : vector<8x32xf32>
    %10 = math.exp %9 : vector<8x32xf32>
    %cst_8 = arith.constant dense<0.000000e+00> : vector<8xf32>
    %11 = vector.multi_reduction <add>, %10, %cst_8 [1] : vector<8x32xf32> to vector<8xf32>
    %12 = vector.shape_cast %11 : vector<8xf32> to vector<8x1xf32>
    %13 = vector.broadcast %12 : vector<8x1xf32> to vector<8x32xf32>
    %14 = arith.divf %10, %13 : vector<8x32xf32>
    %cst_9 = arith.constant dense<0xFF800000> : vector<8xf32>
    %15 = vector.multi_reduction <maximumf>, %14, %cst_9 [1] : vector<8x32xf32> to vector<8xf32>
    %16 = vector.shape_cast %15 : vector<8xf32> to vector<8x1xf32>
    %c0_10 = arith.constant 0 : index
    %c0_11 = arith.constant 0 : index
    %17 = vector.load %arg5[%c0_10, %c0_11] : memref<8x1xf32, #tpu.memory_space<vmem>>, vector<8x1xf32>
    tpu.vector_store %arg5[%c0_10, %c0_11], %16 {strides = array<i32>} : memref<8x1xf32, #tpu.memory_space<vmem>>, vector<8x1xf32>,
    %cst_12 = arith.constant dense<0.000000e+00> : vector<32xf32>
    %18 = vector.multi_reduction <add>, %14, %cst_12 [0] : vector<8x32xf32> to vector<32xf32>
    %19 = vector.shape_cast %18 : vector<32xf32> to vector<1x32xf32>
    %c0_13 = arith.constant 0 : index
    %c0_14 = arith.constant 0 : index
    %20 = vector.load %arg6[%c0_13, %c0_14] : memref<1x32xf32, #tpu.memory_space<vmem>>, vector<1x32xf32>
    tpu.vector_store %arg6[%c0_13, %c0_14], %19 {strides = array<i32>} : memref<1x32xf32, #tpu.memory_space<vmem>>, vector<1x32xf32>,
    %cst_15 = arith.constant 0.000000e+00 : f32
    %21 = vector.broadcast %cst_15 : f32 to vector<8x32xf32>
    %cst_16 = arith.constant 0.000000e+00 : f32
    %22 = vector.broadcast %cst_16 : f32 to vector<8x32xf32>
    %cst_17 = arith.constant 0.000000e+00 : f32
    %23 = vector.broadcast %cst_17 : f32 to vector<32x32xf32>
    %cst_18 = arith.constant 0.000000e+00 : f32
    %24 = vector.broadcast %cst_18 : f32 to vector<8x8xf32>
    %cst_19 = arith.constant 2.500000e-01 : f32
    %25 = vector.broadcast %cst_19 : f32 to vector<8x32xf32>
    %26 = arith.mulf %0, %25 : vector<8x32xf32>
    %cst_20 = arith.constant dense<0xFF800000> : vector<8xf32>
    %27 = vector.multi_reduction <maximumf>, %26, %cst_20 [1] : vector<8x32xf32> to vector<8xf32>
    %28 = vector.shape_cast %27 : vector<8xf32> to vector<8x1xf32>
    %29 = vector.broadcast %28 : vector<8x1xf32> to vector<8x32xf32>
    %30 = arith.subf %26, %29 : vector<8x32xf32>
    %31 = math.exp %30 : vector<8x32xf32>
    %cst_21 = arith.constant dense<0.000000e+00> : vector<8xf32>
    %32 = vector.multi_reduction <add>, %31, %cst_21 [1] : vector<8x32xf32> to vector<8xf32>
    %33 = vector.shape_cast %32 : vector<8xf32> to vector<8x1xf32>
    %34 = vector.broadcast %33 : vector<8x1xf32> to vector<8x32xf32>
    %35 = arith.divf %31, %34 : vector<8x32xf32>
    %36 = math.log %33 : vector<8x1xf32>
    %37 = vector.broadcast %36 : vector<8x1xf32> to vector<8x32xf32>
    %38 = arith.subf %30, %37 : vector<8x32xf32>
    %cst_22 = arith.constant 2.500000e-01 : f32
    %39 = vector.broadcast %cst_22 : f32 to vector<8x32xf32>
    %40 = arith.mulf %1, %39 : vector<8x32xf32>
    %cst_23 = arith.constant dense<0xFF800000> : vector<8xf32>
    %41 = vector.multi_reduction <maximumf>, %40, %cst_23 [1] : vector<8x32xf32> to vector<8xf32>
    %42 = vector.shape_cast %41 : vector<8xf32> to vector<8x1xf32>
    %43 = vector.broadcast %42 : vector<8x1xf32> to vector<8x32xf32>
    %44 = arith.subf %40, %43 : vector<8x32xf32>
    %45 = math.exp %44 : vector<8x32xf32>
    %cst_24 = arith.constant dense<0.000000e+00> : vector<8xf32>
    %46 = vector.multi_reduction <add>, %45, %cst_24 [1] : vector<8x32xf32> to vector<8xf32>
    %47 = vector.shape_cast %46 : vector<8xf32> to vector<8x1xf32>
    %48 = vector.broadcast %47 : vector<8x1xf32> to vector<8x32xf32>
    %49 = arith.divf %45, %48 : vector<8x32xf32>
    %50 = math.log %47 : vector<8x1xf32>
    %51 = vector.broadcast %50 : vector<8x1xf32> to vector<8x32xf32>
    %52 = arith.subf %44, %51 : vector<8x32xf32>
    %53 = arith.subf %52, %38 : vector<8x32xf32>
    %54 = arith.mulf %49, %53 : vector<8x32xf32>
    %cst_25 = arith.constant 1.600000e+01 : f32
    %55 = vector.broadcast %cst_25 : f32 to vector<8x32xf32>
    %56 = arith.mulf %55, %54 : vector<8x32xf32>
    %57 = arith.addf %21, %56 : vector<8x32xf32>
    %cst_26 = arith.constant dense<0.000000e+00> : vector<32x32xf32>
    %58 = tpu.matmul %49, %49, %cst_26 {dimension_numbers = #tpu.dot_dimension_numbers<[0], [0], [1], [1], [0, 1, 1, 1], [], []>} : vector<8x32xf32>, vector<8x32xf32>, vector<32x32xf32> -> vector<32x32xf32>
    %cst_27 = arith.constant dense<0.000000e+00> : vector<32x32xf32>
    %59 = tpu.matmul %35, %35, %cst_27 {dimension_numbers = #tpu.dot_dimension_numbers<[0], [0], [1], [1], [0, 1, 1, 1], [], []>} : vector<8x32xf32>, vector<8x32xf32>, vector<32x32xf32> -> vector<32x32xf32>
    %60 = arith.subf %58, %59 : vector<32x32xf32>
    %61 = arith.mulf %60, %60 : vector<32x32xf32>
    %62 = arith.addf %23, %61 : vector<32x32xf32>
    %cst_28 = arith.constant dense<0.000000e+00> : vector<8x8xf32>
    %63 = tpu.matmul %49, %49, %cst_28 {dimension_numbers = #tpu.dot_dimension_numbers<[1], [1], [0], [0], [0, 0, 1, 0], [], []>} : vector<8x32xf32>, vector<8x32xf32>, vector<8x8xf32> -> vector<8x8xf32>
    %cst_29 = arith.constant dense<0.000000e+00> : vector<8x8xf32>
    %64 = tpu.matmul %35, %35, %cst_29 {dimension_numbers = #tpu.dot_dimension_numbers<[1], [1], [0], [0], [0, 0, 1, 0], [], []>} : vector<8x32xf32>, vector<8x32xf32>, vector<8x8xf32> -> vector<8x8xf32>
    %65 = arith.subf %63, %64 : vector<8x8xf32>
    %66 = arith.mulf %65, %65 : vector<8x8xf32>
    %67 = arith.addf %24, %66 : vector<8x8xf32>
    %cst_30 = arith.constant 0.333333343 : f32
    %68 = vector.broadcast %cst_30 : f32 to vector<8x32xf32>
    %69 = arith.mulf %0, %68 : vector<8x32xf32>
    %cst_31 = arith.constant dense<0xFF800000> : vector<8xf32>
    %70 = vector.multi_reduction <maximumf>, %69, %cst_31 [1] : vector<8x32xf32> to vector<8xf32>
    %71 = vector.shape_cast %70 : vector<8xf32> to vector<8x1xf32>
    %72 = vector.broadcast %71 : vector<8x1xf32> to vector<8x32xf32>
    %73 = arith.subf %69, %72 : vector<8x32xf32>
    %74 = math.exp %73 : vector<8x32xf32>
    %cst_32 = arith.constant dense<0.000000e+00> : vector<8xf32>
    %75 = vector.multi_reduction <add>, %74, %cst_32 [1] : vector<8x32xf32> to vector<8xf32>
    %76 = vector.shape_cast %75 : vector<8xf32> to vector<8x1xf32>
    %77 = vector.broadcast %76 : vector<8x1xf32> to vector<8x32xf32>
    %78 = arith.divf %74, %77 : vector<8x32xf32>
    %79 = math.log %76 : vector<8x1xf32>
    %80 = vector.broadcast %79 : vector<8x1xf32> to vector<8x32xf32>
    %81 = arith.subf %73, %80 : vector<8x32xf32>
    %cst_33 = arith.constant 0.333333343 : f32
    %82 = vector.broadcast %cst_33 : f32 to vector<8x32xf32>
    %83 = arith.mulf %1, %82 : vector<8x32xf32>
    %cst_34 = arith.constant dense<0xFF800000> : vector<8xf32>
    %84 = vector.multi_reduction <maximumf>, %83, %cst_34 [1] : vector<8x32xf32> to vector<8xf32>
    %85 = vector.shape_cast %84 : vector<8xf32> to vector<8x1xf32>
    %86 = vector.broadcast %85 : vector<8x1xf32> to vector<8x32xf32>
    %87 = arith.subf %83, %86 : vector<8x32xf32>
    %88 = math.exp %87 : vector<8x32xf32>
    %cst_35 = arith.constant dense<0.000000e+00> : vector<8xf32>
    %89 = vector.multi_reduction <add>, %88, %cst_35 [1] : vector<8x32xf32> to vector<8xf32>
    %90 = vector.shape_cast %89 : vector<8xf32> to vector<8x1xf32>
    %91 = vector.broadcast %90 : vector<8x1xf32> to vector<8x32xf32>
    %92 = arith.divf %88, %91 : vector<8x32xf32>
    %93 = math.log %90 : vector<8x1xf32>
    %94 = vector.broadcast %93 : vector<8x1xf32> to vector<8x32xf32>
    %95 = arith.subf %87, %94 : vector<8x32xf32>
    %96 = arith.subf %95, %81 : vector<8x32xf32>
    %97 = arith.mulf %92, %96 : vector<8x32xf32>
    %cst_36 = arith.constant 9.000000e+00 : f32
    %98 = vector.broadcast %cst_36 : f32 to vector<8x32xf32>
    %99 = arith.mulf %98, %97 : vector<8x32xf32>
    %100 = arith.addf %57, %99 : vector<8x32xf32>
    %cst_37 = arith.constant dense<0.000000e+00> : vector<32x32xf32>
    %101 = tpu.matmul %92, %92, %cst_37 {dimension_numbers = #tpu.dot_dimension_numbers<[0], [0], [1], [1], [0, 1, 1, 1], [], []>} : vector<8x32xf32>, vector<8x32xf32>, vector<32x32xf32> -> vector<32x32xf32>
    %cst_38 = arith.constant dense<0.000000e+00> : vector<32x32xf32>
    %102 = tpu.matmul %78, %78, %cst_38 {dimension_numbers = #tpu.dot_dimension_numbers<[0], [0], [1], [1], [0, 1, 1, 1], [], []>} : vector<8x32xf32>, vector<8x32xf32>, vector<32x32xf32> -> vector<32x32xf32>
    %103 = arith.subf %101, %102 : vector<32x32xf32>
    %104 = arith.mulf %103, %103 : vector<32x32xf32>
    %105 = arith.addf %62, %104 : vector<32x32xf32>
    %cst_39 = arith.constant dense<0.000000e+00> : vector<8x8xf32>
    %106 = tpu.matmul %92, %92, %cst_39 {dimension_numbers = #tpu.dot_dimension_numbers<[1], [1], [0], [0], [0, 0, 1, 0], [], []>} : vector<8x32xf32>, vector<8x32xf32>, vector<8x8xf32> -> vector<8x8xf32>
    %cst_40 = arith.constant dense<0.000000e+00> : vector<8x8xf32>
    %107 = tpu.matmul %78, %78, %cst_40 {dimension_numbers = #tpu.dot_dimension_numbers<[1], [1], [0], [0], [0, 0, 1, 0], [], []>} : vector<8x32xf32>, vector<8x32xf32>, vector<8x8xf32> -> vector<8x8xf32>
    %108 = arith.subf %106, %107 : vector<8x8xf32>
    %109 = arith.mulf %108, %108 : vector<8x8xf32>
    %110 = arith.addf %67, %109 : vector<8x8xf32>
    %cst_41 = arith.constant 2.000000e-01 : f32
    %111 = vector.broadcast %cst_41 : f32 to vector<8x32xf32>
    %112 = arith.mulf %0, %111 : vector<8x32xf32>
    %cst_42 = arith.constant dense<0xFF800000> : vector<8xf32>
    %113 = vector.multi_reduction <maximumf>, %112, %cst_42 [1] : vector<8x32xf32> to vector<8xf32>
    %114 = vector.shape_cast %113 : vector<8xf32> to vector<8x1xf32>
    %115 = vector.broadcast %114 : vector<8x1xf32> to vector<8x32xf32>
    %116 = arith.subf %112, %115 : vector<8x32xf32>
    %117 = math.exp %116 : vector<8x32xf32>
    %cst_43 = arith.constant dense<0.000000e+00> : vector<8xf32>
    %118 = vector.multi_reduction <add>, %117, %cst_43 [1] : vector<8x32xf32> to vector<8xf32>
    %119 = vector.shape_cast %118 : vector<8xf32> to vector<8x1xf32>
    %120 = vector.broadcast %119 : vector<8x1xf32> to vector<8x32xf32>
    %121 = arith.divf %117, %120 : vector<8x32xf32>
    %122 = math.log %119 : vector<8x1xf32>
    %123 = vector.broadcast %122 : vector<8x1xf32> to vector<8x32xf32>
    %124 = arith.subf %116, %123 : vector<8x32xf32>
    %cst_44 = arith.constant 2.000000e-01 : f32
    %125 = vector.broadcast %cst_44 : f32 to vector<8x32xf32>
    %126 = arith.mulf %1, %125 : vector<8x32xf32>
    %cst_45 = arith.constant dense<0xFF800000> : vector<8xf32>
    %127 = vector.multi_reduction <maximumf>, %126, %cst_45 [1] : vector<8x32xf32> to vector<8xf32>
    %128 = vector.shape_cast %127 : vector<8xf32> to vector<8x1xf32>
    %129 = vector.broadcast %128 : vector<8x1xf32> to vector<8x32xf32>
    %130 = arith.subf %126, %129 : vector<8x32xf32>
    %131 = math.exp %130 : vector<8x32xf32>
    %cst_46 = arith.constant dense<0.000000e+00> : vector<8xf32>
    %132 = vector.multi_reduction <add>, %131, %cst_46 [1] : vector<8x32xf32> to vector<8xf32>
    %133 = vector.shape_cast %132 : vector<8xf32> to vector<8x1xf32>
    %134 = vector.broadcast %133 : vector<8x1xf32> to vector<8x32xf32>
    %135 = arith.divf %131, %134 : vector<8x32xf32>
    %136 = math.log %133 : vector<8x1xf32>
    %137 = vector.broadcast %136 : vector<8x1xf32> to vector<8x32xf32>
    %138 = arith.subf %130, %137 : vector<8x32xf32>
    %139 = arith.subf %138, %124 : vector<8x32xf32>
    %140 = arith.mulf %135, %139 : vector<8x32xf32>
    %cst_47 = arith.constant 2.500000e+01 : f32
    %141 = vector.broadcast %cst_47 : f32 to vector<8x32xf32>
    %142 = arith.mulf %141, %140 : vector<8x32xf32>
    %143 = arith.addf %100, %142 : vector<8x32xf32>
    %cst_48 = arith.constant dense<0.000000e+00> : vector<32x32xf32>
    %144 = tpu.matmul %135, %135, %cst_48 {dimension_numbers = #tpu.dot_dimension_numbers<[0], [0], [1], [1], [0, 1, 1, 1], [], []>} : vector<8x32xf32>, vector<8x32xf32>, vector<32x32xf32> -> vector<32x32xf32>
    %cst_49 = arith.constant dense<0.000000e+00> : vector<32x32xf32>
    %145 = tpu.matmul %121, %121, %cst_49 {dimension_numbers = #tpu.dot_dimension_numbers<[0], [0], [1], [1], [0, 1, 1, 1], [], []>} : vector<8x32xf32>, vector<8x32xf32>, vector<32x32xf32> -> vector<32x32xf32>
    %146 = arith.subf %144, %145 : vector<32x32xf32>
    %147 = arith.mulf %146, %146 : vector<32x32xf32>
    %148 = arith.addf %105, %147 : vector<32x32xf32>
    %cst_50 = arith.constant dense<0.000000e+00> : vector<8x8xf32>
    %149 = tpu.matmul %135, %135, %cst_50 {dimension_numbers = #tpu.dot_dimension_numbers<[1], [1], [0], [0], [0, 0, 1, 0], [], []>} : vector<8x32xf32>, vector<8x32xf32>, vector<8x8xf32> -> vector<8x8xf32>
    %cst_51 = arith.constant dense<0.000000e+00> : vector<8x8xf32>
    %150 = tpu.matmul %121, %121, %cst_51 {dimension_numbers = #tpu.dot_dimension_numbers<[1], [1], [0], [0], [0, 0, 1, 0], [], []>} : vector<8x32xf32>, vector<8x32xf32>, vector<8x8xf32> -> vector<8x8xf32>
    %151 = arith.subf %149, %150 : vector<8x8xf32>
    %152 = arith.mulf %151, %151 : vector<8x8xf32>
    %153 = arith.addf %110, %152 : vector<8x8xf32>
    %cst_52 = arith.constant 5.000000e-01 : f32
    %154 = vector.broadcast %cst_52 : f32 to vector<8x32xf32>
    %155 = arith.mulf %0, %154 : vector<8x32xf32>
    %cst_53 = arith.constant dense<0xFF800000> : vector<8xf32>
    %156 = vector.multi_reduction <maximumf>, %155, %cst_53 [1] : vector<8x32xf32> to vector<8xf32>
    %157 = vector.shape_cast %156 : vector<8xf32> to vector<8x1xf32>
    %158 = vector.broadcast %157 : vector<8x1xf32> to vector<8x32xf32>
    %159 = arith.subf %155, %158 : vector<8x32xf32>
    %160 = math.exp %159 : vector<8x32xf32>
    %cst_54 = arith.constant dense<0.000000e+00> : vector<8xf32>
    %161 = vector.multi_reduction <add>, %160, %cst_54 [1] : vector<8x32xf32> to vector<8xf32>
    %162 = vector.shape_cast %161 : vector<8xf32> to vector<8x1xf32>
    %163 = vector.broadcast %162 : vector<8x1xf32> to vector<8x32xf32>
    %164 = arith.divf %160, %163 : vector<8x32xf32>
    %165 = math.log %162 : vector<8x1xf32>
    %166 = vector.broadcast %165 : vector<8x1xf32> to vector<8x32xf32>
    %167 = arith.subf %159, %166 : vector<8x32xf32>
    %cst_55 = arith.constant 5.000000e-01 : f32
    %168 = vector.broadcast %cst_55 : f32 to vector<8x32xf32>
    %169 = arith.mulf %1, %168 : vector<8x32xf32>
    %cst_56 = arith.constant dense<0xFF800000> : vector<8xf32>
    %170 = vector.multi_reduction <maximumf>, %169, %cst_56 [1] : vector<8x32xf32> to vector<8xf32>
    %171 = vector.shape_cast %170 : vector<8xf32> to vector<8x1xf32>
    %172 = vector.broadcast %171 : vector<8x1xf32> to vector<8x32xf32>
    %173 = arith.subf %169, %172 : vector<8x32xf32>
    %174 = math.exp %173 : vector<8x32xf32>
    %cst_57 = arith.constant dense<0.000000e+00> : vector<8xf32>
    %175 = vector.multi_reduction <add>, %174, %cst_57 [1] : vector<8x32xf32> to vector<8xf32>
    %176 = vector.shape_cast %175 : vector<8xf32> to vector<8x1xf32>
    %177 = vector.broadcast %176 : vector<8x1xf32> to vector<8x32xf32>
    %178 = arith.divf %174, %177 : vector<8x32xf32>
    %179 = math.log %176 : vector<8x1xf32>
    %180 = vector.broadcast %179 : vector<8x1xf32> to vector<8x32xf32>
    %181 = arith.subf %173, %180 : vector<8x32xf32>
    %182 = arith.subf %181, %167 : vector<8x32xf32>
    %183 = arith.mulf %178, %182 : vector<8x32xf32>
    %cst_58 = arith.constant 4.000000e+00 : f32
    %184 = vector.broadcast %cst_58 : f32 to vector<8x32xf32>
    %185 = arith.mulf %184, %183 : vector<8x32xf32>
    %186 = arith.addf %143, %185 : vector<8x32xf32>
    %187 = arith.addf %22, %185 : vector<8x32xf32>
    %cst_59 = arith.constant dense<0.000000e+00> : vector<32x32xf32>
    %188 = tpu.matmul %178, %178, %cst_59 {dimension_numbers = #tpu.dot_dimension_numbers<[0], [0], [1], [1], [0, 1, 1, 1], [], []>} : vector<8x32xf32>, vector<8x32xf32>, vector<32x32xf32> -> vector<32x32xf32>
    %cst_60 = arith.constant dense<0.000000e+00> : vector<32x32xf32>
    %189 = tpu.matmul %164, %164, %cst_60 {dimension_numbers = #tpu.dot_dimension_numbers<[0], [0], [1], [1], [0, 1, 1, 1], [], []>} : vector<8x32xf32>, vector<8x32xf32>, vector<32x32xf32> -> vector<32x32xf32>
    %190 = arith.subf %188, %189 : vector<32x32xf32>
    %191 = arith.mulf %190, %190 : vector<32x32xf32>
    %192 = arith.addf %148, %191 : vector<32x32xf32>
    %cst_61 = arith.constant dense<0.000000e+00> : vector<8x8xf32>
    %193 = tpu.matmul %178, %178, %cst_61 {dimension_numbers = #tpu.dot_dimension_numbers<[1], [1], [0], [0], [0, 0, 1, 0], [], []>} : vector<8x32xf32>, vector<8x32xf32>, vector<8x8xf32> -> vector<8x8xf32>
    %cst_62 = arith.constant dense<0.000000e+00> : vector<8x8xf32>
    %194 = tpu.matmul %164, %164, %cst_62 {dimension_numbers = #tpu.dot_dimension_numbers<[1], [1], [0], [0], [0, 0, 1, 0], [], []>} : vector<8x32xf32>, vector<8x32xf32>, vector<8x8xf32> -> vector<8x8xf32>
    %195 = arith.subf %193, %194 : vector<8x8xf32>
    %196 = arith.mulf %195, %195 : vector<8x8xf32>
    %197 = arith.addf %153, %196 : vector<8x8xf32>
    %cst_63 = arith.constant 0.166666672 : f32
    %198 = vector.broadcast %cst_63 : f32 to vector<8x32xf32>
    %199 = arith.mulf %0, %198 : vector<8x32xf32>
    %cst_64 = arith.constant dense<0xFF800000> : vector<8xf32>
    %200 = vector.multi_reduction <maximumf>, %199, %cst_64 [1] : vector<8x32xf32> to vector<8xf32>
    %201 = vector.shape_cast %200 : vector<8xf32> to vector<8x1xf32>
    %202 = vector.broadcast %201 : vector<8x1xf32> to vector<8x32xf32>
    %203 = arith.subf %199, %202 : vector<8x32xf32>
    %204 = math.exp %203 : vector<8x32xf32>
    %cst_65 = arith.constant dense<0.000000e+00> : vector<8xf32>
    %205 = vector.multi_reduction <add>, %204, %cst_65 [1] : vector<8x32xf32> to vector<8xf32>
    %206 = vector.shape_cast %205 : vector<8xf32> to vector<8x1xf32>
    %207 = vector.broadcast %206 : vector<8x1xf32> to vector<8x32xf32>
    %208 = arith.divf %204, %207 : vector<8x32xf32>
    %209 = math.log %206 : vector<8x1xf32>
    %210 = vector.broadcast %209 : vector<8x1xf32> to vector<8x32xf32>
    %211 = arith.subf %203, %210 : vector<8x32xf32>
    %cst_66 = arith.constant 0.166666672 : f32
    %212 = vector.broadcast %cst_66 : f32 to vector<8x32xf32>
    %213 = arith.mulf %1, %212 : vector<8x32xf32>
    %cst_67 = arith.constant dense<0xFF800000> : vector<8xf32>
    %214 = vector.multi_reduction <maximumf>, %213, %cst_67 [1] : vector<8x32xf32> to vector<8xf32>
    %215 = vector.shape_cast %214 : vector<8xf32> to vector<8x1xf32>
    %216 = vector.broadcast %215 : vector<8x1xf32> to vector<8x32xf32>
    %217 = arith.subf %213, %216 : vector<8x32xf32>
    %218 = math.exp %217 : vector<8x32xf32>
    %cst_68 = arith.constant dense<0.000000e+00> : vector<8xf32>
    %219 = vector.multi_reduction <add>, %218, %cst_68 [1] : vector<8x32xf32> to vector<8xf32>
    %220 = vector.shape_cast %219 : vector<8xf32> to vector<8x1xf32>
    %221 = vector.broadcast %220 : vector<8x1xf32> to vector<8x32xf32>
    %222 = arith.divf %218, %221 : vector<8x32xf32>
    %223 = math.log %220 : vector<8x1xf32>
    %224 = vector.broadcast %223 : vector<8x1xf32> to vector<8x32xf32>
    %225 = arith.subf %217, %224 : vector<8x32xf32>
    %226 = arith.subf %225, %211 : vector<8x32xf32>
    %227 = arith.mulf %222, %226 : vector<8x32xf32>
    %cst_69 = arith.constant 3.600000e+01 : f32
    %228 = vector.broadcast %cst_69 : f32 to vector<8x32xf32>
    %229 = arith.mulf %228, %227 : vector<8x32xf32>
    %230 = arith.addf %186, %229 : vector<8x32xf32>
    %231 = arith.addf %187, %229 : vector<8x32xf32>
    %cst_70 = arith.constant dense<0.000000e+00> : vector<32x32xf32>
    %232 = tpu.matmul %222, %222, %cst_70 {dimension_numbers = #tpu.dot_dimension_numbers<[0], [0], [1], [1], [0, 1, 1, 1], [], []>} : vector<8x32xf32>, vector<8x32xf32>, vector<32x32xf32> -> vector<32x32xf32>
    %cst_71 = arith.constant dense<0.000000e+00> : vector<32x32xf32>
    %233 = tpu.matmul %208, %208, %cst_71 {dimension_numbers = #tpu.dot_dimension_numbers<[0], [0], [1], [1], [0, 1, 1, 1], [], []>} : vector<8x32xf32>, vector<8x32xf32>, vector<32x32xf32> -> vector<32x32xf32>
    %234 = arith.subf %232, %233 : vector<32x32xf32>
    %235 = arith.mulf %234, %234 : vector<32x32xf32>
    %236 = arith.addf %192, %235 : vector<32x32xf32>
    %cst_72 = arith.constant dense<0.000000e+00> : vector<8x8xf32>
    %237 = tpu.matmul %222, %222, %cst_72 {dimension_numbers = #tpu.dot_dimension_numbers<[1], [1], [0], [0], [0, 0, 1, 0], [], []>} : vector<8x32xf32>, vector<8x32xf32>, vector<8x8xf32> -> vector<8x8xf32>
    %cst_73 = arith.constant dense<0.000000e+00> : vector<8x8xf32>
    %238 = tpu.matmul %208, %208, %cst_73 {dimension_numbers = #tpu.dot_dimension_numbers<[1], [1], [0], [0], [0, 0, 1, 0], [], []>} : vector<8x32xf32>, vector<8x32xf32>, vector<8x8xf32> -> vector<8x8xf32>
    %239 = arith.subf %237, %238 : vector<8x8xf32>
    %240 = arith.mulf %239, %239 : vector<8x8xf32>
    %241 = arith.addf %197, %240 : vector<8x8xf32>
    %cst_74 = arith.constant 2.500000e-01 : f32
    %242 = vector.broadcast %cst_74 : f32 to vector<8x32xf32>
    %243 = arith.mulf %2, %242 : vector<8x32xf32>
    %cst_75 = arith.constant dense<0xFF800000> : vector<8xf32>
    %244 = vector.multi_reduction <maximumf>, %243, %cst_75 [1] : vector<8x32xf32> to vector<8xf32>
    %245 = vector.shape_cast %244 : vector<8xf32> to vector<8x1xf32>
    %246 = vector.broadcast %245 : vector<8x1xf32> to vector<8x32xf32>
    %247 = arith.subf %243, %246 : vector<8x32xf32>
    %248 = math.exp %247 : vector<8x32xf32>
    %cst_76 = arith.constant dense<0.000000e+00> : vector<8xf32>
    %249 = vector.multi_reduction <add>, %248, %cst_76 [1] : vector<8x32xf32> to vector<8xf32>
    %250 = vector.shape_cast %249 : vector<8xf32> to vector<8x1xf32>
    %251 = math.log %250 : vector<8x1xf32>
    %252 = vector.broadcast %251 : vector<8x1xf32> to vector<8x32xf32>
    %253 = arith.subf %247, %252 : vector<8x32xf32>
    %cst_77 = arith.constant 2.500000e-01 : f32
    %254 = vector.broadcast %cst_77 : f32 to vector<8x32xf32>
    %255 = arith.mulf %3, %254 : vector<8x32xf32>
    %cst_78 = arith.constant dense<0xFF800000> : vector<8xf32>
    %256 = vector.multi_reduction <maximumf>, %255, %cst_78 [1] : vector<8x32xf32> to vector<8xf32>
    %257 = vector.shape_cast %256 : vector<8xf32> to vector<8x1xf32>
    %258 = vector.broadcast %257 : vector<8x1xf32> to vector<8x32xf32>
    %259 = arith.subf %255, %258 : vector<8x32xf32>
    %260 = math.exp %259 : vector<8x32xf32>
    %cst_79 = arith.constant dense<0.000000e+00> : vector<8xf32>
    %261 = vector.multi_reduction <add>, %260, %cst_79 [1] : vector<8x32xf32> to vector<8xf32>
    %262 = vector.shape_cast %261 : vector<8xf32> to vector<8x1xf32>
    %263 = vector.broadcast %262 : vector<8x1xf32> to vector<8x32xf32>
    %264 = arith.divf %260, %263 : vector<8x32xf32>
    %265 = math.log %262 : vector<8x1xf32>
    %266 = vector.broadcast %265 : vector<8x1xf32> to vector<8x32xf32>
    %267 = arith.subf %259, %266 : vector<8x32xf32>
    %268 = arith.subf %267, %253 : vector<8x32xf32>
    %269 = arith.mulf %264, %268 : vector<8x32xf32>
    %cst_80 = arith.constant 1.600000e+01 : f32
    %270 = vector.broadcast %cst_80 : f32 to vector<8x32xf32>
    %271 = arith.mulf %270, %269 : vector<8x32xf32>
    %272 = arith.addf %231, %271 : vector<8x32xf32>
    %cst_81 = arith.constant 0.333333343 : f32
    %273 = vector.broadcast %cst_81 : f32 to vector<8x32xf32>
    %274 = arith.mulf %2, %273 : vector<8x32xf32>
    %cst_82 = arith.constant dense<0xFF800000> : vector<8xf32>
    %275 = vector.multi_reduction <maximumf>, %274, %cst_82 [1] : vector<8x32xf32> to vector<8xf32>
    %276 = vector.shape_cast %275 : vector<8xf32> to vector<8x1xf32>
    %277 = vector.broadcast %276 : vector<8x1xf32> to vector<8x32xf32>
    %278 = arith.subf %274, %277 : vector<8x32xf32>
    %279 = math.exp %278 : vector<8x32xf32>
    %cst_83 = arith.constant dense<0.000000e+00> : vector<8xf32>
    %280 = vector.multi_reduction <add>, %279, %cst_83 [1] : vector<8x32xf32> to vector<8xf32>
    %281 = vector.shape_cast %280 : vector<8xf32> to vector<8x1xf32>
    %282 = math.log %281 : vector<8x1xf32>
    %283 = vector.broadcast %282 : vector<8x1xf32> to vector<8x32xf32>
    %284 = arith.subf %278, %283 : vector<8x32xf32>
    %cst_84 = arith.constant 0.333333343 : f32
    %285 = vector.broadcast %cst_84 : f32 to vector<8x32xf32>
    %286 = arith.mulf %3, %285 : vector<8x32xf32>
    %cst_85 = arith.constant dense<0xFF800000> : vector<8xf32>
    %287 = vector.multi_reduction <maximumf>, %286, %cst_85 [1] : vector<8x32xf32> to vector<8xf32>
    %288 = vector.shape_cast %287 : vector<8xf32> to vector<8x1xf32>
    %289 = vector.broadcast %288 : vector<8x1xf32> to vector<8x32xf32>
    %290 = arith.subf %286, %289 : vector<8x32xf32>
    %291 = math.exp %290 : vector<8x32xf32>
    %cst_86 = arith.constant dense<0.000000e+00> : vector<8xf32>
    %292 = vector.multi_reduction <add>, %291, %cst_86 [1] : vector<8x32xf32> to vector<8xf32>
    %293 = vector.shape_cast %292 : vector<8xf32> to vector<8x1xf32>
    %294 = vector.broadcast %293 : vector<8x1xf32> to vector<8x32xf32>
    %295 = arith.divf %291, %294 : vector<8x32xf32>
    %296 = math.log %293 : vector<8x1xf32>
    %297 = vector.broadcast %296 : vector<8x1xf32> to vector<8x32xf32>
    %298 = arith.subf %290, %297 : vector<8x32xf32>
    %299 = arith.subf %298, %284 : vector<8x32xf32>
    %300 = arith.mulf %295, %299 : vector<8x32xf32>
    %cst_87 = arith.constant 9.000000e+00 : f32
    %301 = vector.broadcast %cst_87 : f32 to vector<8x32xf32>
    %302 = arith.mulf %301, %300 : vector<8x32xf32>
    %303 = arith.addf %272, %302 : vector<8x32xf32>
    %cst_88 = arith.constant 2.000000e-01 : f32
    %304 = vector.broadcast %cst_88 : f32 to vector<8x32xf32>
    %305 = arith.mulf %2, %304 : vector<8x32xf32>
    %cst_89 = arith.constant dense<0xFF800000> : vector<8xf32>
    %306 = vector.multi_reduction <maximumf>, %305, %cst_89 [1] : vector<8x32xf32> to vector<8xf32>
    %307 = vector.shape_cast %306 : vector<8xf32> to vector<8x1xf32>
    %308 = vector.broadcast %307 : vector<8x1xf32> to vector<8x32xf32>
    %309 = arith.subf %305, %308 : vector<8x32xf32>
    %310 = math.exp %309 : vector<8x32xf32>
    %cst_90 = arith.constant dense<0.000000e+00> : vector<8xf32>
    %311 = vector.multi_reduction <add>, %310, %cst_90 [1] : vector<8x32xf32> to vector<8xf32>
    %312 = vector.shape_cast %311 : vector<8xf32> to vector<8x1xf32>
    %313 = math.log %312 : vector<8x1xf32>
    %314 = vector.broadcast %313 : vector<8x1xf32> to vector<8x32xf32>
    %315 = arith.subf %309, %314 : vector<8x32xf32>
    %cst_91 = arith.constant 2.000000e-01 : f32
    %316 = vector.broadcast %cst_91 : f32 to vector<8x32xf32>
    %317 = arith.mulf %3, %316 : vector<8x32xf32>
    %cst_92 = arith.constant dense<0xFF800000> : vector<8xf32>
    %318 = vector.multi_reduction <maximumf>, %317, %cst_92 [1] : vector<8x32xf32> to vector<8xf32>
    %319 = vector.shape_cast %318 : vector<8xf32> to vector<8x1xf32>
    %320 = vector.broadcast %319 : vector<8x1xf32> to vector<8x32xf32>
    %321 = arith.subf %317, %320 : vector<8x32xf32>
    %322 = math.exp %321 : vector<8x32xf32>
    %cst_93 = arith.constant dense<0.000000e+00> : vector<8xf32>
    %323 = vector.multi_reduction <add>, %322, %cst_93 [1] : vector<8x32xf32> to vector<8xf32>
    %324 = vector.shape_cast %323 : vector<8xf32> to vector<8x1xf32>
    %325 = vector.broadcast %324 : vector<8x1xf32> to vector<8x32xf32>
    %326 = arith.divf %322, %325 : vector<8x32xf32>
    %327 = math.log %324 : vector<8x1xf32>
    %328 = vector.broadcast %327 : vector<8x1xf32> to vector<8x32xf32>
    %329 = arith.subf %321, %328 : vector<8x32xf32>
    %330 = arith.subf %329, %315 : vector<8x32xf32>
    %331 = arith.mulf %326, %330 : vector<8x32xf32>
    %cst_94 = arith.constant 2.500000e+01 : f32
    %332 = vector.broadcast %cst_94 : f32 to vector<8x32xf32>
    %333 = arith.mulf %332, %331 : vector<8x32xf32>
    %334 = arith.addf %303, %333 : vector<8x32xf32>
    %335 = vector.shape_cast %230 : vector<8x32xf32> to vector<1x8x32xf32>
    %cst_95 = arith.constant dense<0.000000e+00> : vector<1xf32>
    %336 = vector.multi_reduction <add>, %335, %cst_95 [1, 2] : vector<1x8x32xf32> to vector<1xf32>
    %337 = vector.shape_cast %336 : vector<1xf32> to vector<1x1x1xf32>
    %338 = vector.extract %337[0, 0, 0] : f32 from vector<1x1x1xf32>
    %cst_96 = arith.constant 1.250000e-01 : f32
    %339 = arith.mulf %338, %cst_96 : f32
    %c0_97 = arith.constant 0 : index
    %340 = memref.load %arg4[%c0_97] : memref<4xf32, #tpu.memory_space<smem>>
    memref.store %339, %arg4[%c0_97] : memref<4xf32, #tpu.memory_space<smem>>
    %341 = vector.shape_cast %334 : vector<8x32xf32> to vector<1x8x32xf32>
    %cst_98 = arith.constant dense<0.000000e+00> : vector<1xf32>
    %342 = vector.multi_reduction <add>, %341, %cst_98 [1, 2] : vector<1x8x32xf32> to vector<1xf32>
    %343 = vector.shape_cast %342 : vector<1xf32> to vector<1x1x1xf32>
    %344 = vector.extract %343[0, 0, 0] : f32 from vector<1x1x1xf32>
    %cst_99 = arith.constant 1.250000e-01 : f32
    %345 = arith.mulf %344, %cst_99 : f32
    %c1 = arith.constant 1 : index
    %346 = memref.load %arg4[%c1] : memref<4xf32, #tpu.memory_space<smem>>
    memref.store %345, %arg4[%c1] : memref<4xf32, #tpu.memory_space<smem>>
    %347 = vector.shape_cast %236 : vector<32x32xf32> to vector<1x32x32xf32>
    %cst_100 = arith.constant dense<0.000000e+00> : vector<1xf32>
    %348 = vector.multi_reduction <add>, %347, %cst_100 [1, 2] : vector<1x32x32xf32> to vector<1xf32>
    %349 = vector.shape_cast %348 : vector<1xf32> to vector<1x1x1xf32>
    %350 = vector.extract %349[0, 0, 0] : f32 from vector<1x1x1xf32>
    %cst_101 = arith.constant 3.125000e-02 : f32
    %351 = arith.mulf %350, %cst_101 : f32
    %c2 = arith.constant 2 : index
    %352 = memref.load %arg4[%c2] : memref<4xf32, #tpu.memory_space<smem>>
    memref.store %351, %arg4[%c2] : memref<4xf32, #tpu.memory_space<smem>>
    %353 = vector.shape_cast %241 : vector<8x8xf32> to vector<1x8x8xf32>
    %cst_102 = arith.constant dense<0.000000e+00> : vector<1xf32>
    %354 = vector.multi_reduction <add>, %353, %cst_102 [1, 2] : vector<1x8x8xf32> to vector<1xf32>
    %355 = vector.shape_cast %354 : vector<1xf32> to vector<1x1x1xf32>
    %356 = vector.extract %355[0, 0, 0] : f32 from vector<1x1x1xf32>
    %cst_103 = arith.constant 1.250000e-01 : f32
    %357 = arith.mulf %356, %cst_103 : f32
    %c3 = arith.constant 3 : index
    %358 = memref.load %arg4[%c3] : memref<4xf32, #tpu.memory_space<smem>>
    memref.store %357, %arg4[%c3] : memref<4xf32, #tpu.memory_space<smem>>
    return
  }
}

</mosaic_0001>

<llo_original>
// kernel: tpu_custom_call.1
$region0: #{tpu_custom_call.1}
  #allocation0 [shape = 'u32[]', space=smem, size = 0x4, offset = 0x4, fixed_abs, tag = 'smem constant byte address 0x4 - core index']
  #allocation1 [shape = 'u32[144,128]{1,0:T(1,128)}', space=vmem, size = 0x12000, scoped, tag = 'internal scratch']
  %s0 = inlined_call_operand.hbm [shape: f32[8,32], index: 0, kind: input, shape index: {}]
  %s1 = inlined_call_operand.hbm [shape: f32[8,32], index: 1, kind: input, shape index: {}]
  %s2 = inlined_call_operand.hbm [shape: f32[8,32], index: 2, kind: input, shape index: {}]
  %s3 = inlined_call_operand.vmem [shape: f32[8,32], index: 3, kind: input, shape index: {}]
  %s4 = inlined_call_operand.hbm [shape: f32[4], index: 4, kind: output, shape index: {0}]
  %s5 = inlined_call_operand.vmem [shape: f32[8,1], index: 5, kind: output, shape index: {1}]
  %s6 = inlined_call_operand.hbm [shape: f32[1,32], index: 6, kind: output, shape index: {2}]
  %7 = xla_tuple %s4, %s5, %s6
  %s8 = sld [smem:[#allocation0]]
  $region54: #{tpu_custom_call.1} parent=0
    _
  %s10 = ssub.s32 1, %s8
  %s11 = scalar_select 0, %s10, %s8
  $region1: #{tpu_custom_call.1} parent=0
    #allocation2 [shape = 'u8[4096]{0}', space=vmem, size = 0x1000, scoped, tag = 'input window, operand 0, single buffered']
    #allocation3 [shape = 's32[1]{0}', space=sflag, size = 0x4, scoped, tag = 'scoped memory for tpu_custom_call.1']
    #allocation4 [shape = 's32[1]{0}', space=sflag, size = 0x4, scoped, tag = 'scoped memory for tpu_custom_call.1']
    #allocation5 [shape = 's32[1]{0}', space=sflag, size = 0x4, scoped, tag = 'scoped memory for tpu_custom_call.1']
    #allocation6 [shape = 'u8[4096]{0}', space=vmem, size = 0x1000, scoped, tag = 'input window, operand 1, single buffered']
    #allocation7 [shape = 's32[1]{0}', space=sflag, size = 0x4, scoped, tag = 'scoped memory for tpu_custom_call.1']
    #allocation8 [shape = 'u8[4096]{0}', space=vmem, size = 0x1000, scoped, tag = 'input window, operand 2, single buffered']
    #allocation9 [shape = 'u8[512]{0}', space=smem, size = 0x200, scoped, tag = 'output window, operand 0, single buffered']
    #allocation10 [shape = 'u8[512]{0}', space=vmem, size = 0x400, scoped, tag = 'output window, operand 2, single buffered']
    %12 = vsyncpa [#allocation3], 0
    %13 = vsyncpa [#allocation7], 0
    %14 = vsyncpa [#allocation5], 0
    %15 = vsyncpa [#allocation4], 0
    // Predicated region
    $region2: #{tpu_custom_call.1} parent=1 // pred_check
      _
    $region3: #{tpu_custom_call.1} parent=1 // pred_check_branch
      %17 = sbr.rel (0) target = $region5
    $region4: #{tpu_custom_call.1} parent=1 // pred_region
      %s19 = ssub.s32 128, 128
      %20 = vsyncadd [#allocation3], %s19
      %s22 = sshll.u32 [#allocation2], 4
      %s23 = int_to_ptr.vmem [resolvable:$true] %s22
      %25 = dma.hbm_to_vmem [thread:$0]  %s0, 128, %s23, [#allocation3]
    $region5: #{tpu_custom_call.1} parent=1 // pred_fallthru
      _
    // Predicated region
    $region6: #{tpu_custom_call.1} parent=1 // pred_check
      _
    $region7: #{tpu_custom_call.1} parent=1 // pred_check_branch
      %27 = sbr.rel (0) target = $region9
    $region8: #{tpu_custom_call.1} parent=1 // pred_region
      %s29 = ssub.s32 128, 128
      %30 = vsyncadd [#allocation7], %s29
      %s32 = sshll.u32 [#allocation6], 4
      %s33 = int_to_ptr.vmem [resolvable:$true] %s32
      %35 = dma.hbm_to_vmem [thread:$0]  %s1, 128, %s33, [#allocation7]
    $region9: #{tpu_custom_call.1} parent=1 // pred_fallthru
      _
    // Predicated region
    $region10: #{tpu_custom_call.1} parent=1 // pred_check
      _
    $region11: #{tpu_custom_call.1} parent=1 // pred_check_branch
      %37 = sbr.rel (0) target = $region13
    $region12: #{tpu_custom_call.1} parent=1 // pred_region
      %s39 = ssub.s32 128, 128
      %40 = vsyncadd [#allocation7], %s39
      %s42 = sshll.u32 [#allocation8], 4
      %s43 = int_to_ptr.vmem [resolvable:$true] %s42
      %45 = dma.hbm_to_vmem [thread:$0]  %s2, 128, %s43, [#allocation7]
    $region13: #{tpu_custom_call.1} parent=1 // pred_fallthru
      _
    // Predicated region
    $region14: #{tpu_custom_call.1} parent=1 // pred_check
      _
    $region15: #{tpu_custom_call.1} parent=1 // pred_check_branch
      %47 = sbr.rel (0) target = $region17
    $region16: #{tpu_custom_call.1} parent=1 // pred_region
      _
    $region17: #{tpu_custom_call.1} parent=1 // pred_fallthru
      _
    // Predicated region
    $region18: #{tpu_custom_call.1} parent=1 // pred_check
      _
    $region19: #{tpu_custom_call.1} parent=1 // pred_check_branch
      %49 = sbr.rel (0) target = $region21
    $region20: #{tpu_custom_call.1} parent=1 // pred_region
      %50 = dma.done [#allocation3], 128
    $region21: #{tpu_custom_call.1} parent=1 // pred_fallthru
      _
    // Predicated region
    $region22: #{tpu_custom_call.1} parent=1 // pred_check
      _
    $region23: #{tpu_custom_call.1} parent=1 // pred_check_branch
      %52 = sbr.rel (0) target = $region25
    $region24: #{tpu_custom_call.1} parent=1 // pred_region
      %53 = dma.done [#allocation7], 128
    $region25: #{tpu_custom_call.1} parent=1 // pred_fallthru
      _
    // Predicated region
    $region26: #{tpu_custom_call.1} parent=1 // pred_check
      _
    $region27: #{tpu_custom_call.1} parent=1 // pred_check_branch
      %55 = sbr.rel (0) target = $region29
    $region28: #{tpu_custom_call.1} parent=1 // pred_region
      %56 = dma.done [#allocation7], 128
    $region29: #{tpu_custom_call.1} parent=1 // pred_fallthru
      _
    %v57 = vld [vmem:[#allocation2] sm:$0xff]
    %v58 = vld [vmem:[#allocation6] sm:$0xff]
    %v59 = vld [vmem:[#allocation8] sm:$0xff]
    %v60 = vld [vmem:[%s3] sm:$0xff]
    %vm61 = vcmask 261120
    %v62 = vsel %vm61, %v58, -inf
    %63 = vmax.xlane.f32.xlu0 %v62
    %v64 = vpop.xlane.xlu0 %63
    %v65 = vsub.f32 %v58, %v64
    %v66 = vmul.f32 %v65, 1.442695
    %v67 = vpow.pop %v66
    %v68 = vsel %vm61, %v67, 0.0
    %69 = vadd.xlane.f32.xlu0 %v68
    %v70 = vpop.xlane.xlu0 %69
    %v71 = vrcp.pop %v70
    %v72 = vmul.f32 %v67, %v71
    %v73 = vsel %vm61, %v72, -inf
    %74 = vmax.xlane.f32.xlu0 %v73
    %v75 = vpop.xlane.xlu0 %74
    %vm76 = vcmask 7168
    %77 = vst.msk [vmem:[%s5] sm:$0xff] %vm76, %v75
    %v78 = vsel %vm61, %v72, 0.0
    %v79 = vrot.slane %v78, 4
    %v80 = vadd.f32 %v78, %v79
    %v81 = vrot.slane %v80, 2
    %v82 = vadd.f32 %v80, %v81
    %v83 = vrot.slane %v82, 1
    %v84 = vadd.f32 %v82, %v83
    %vm85 = vcmask 253952
    %86 = vst.msk [vmem:[#allocation10] sm:$0x1] %vm85, %v84
    %v87 = vmul.f32 %v57, 0.25
    %v88 = vsel %vm61, %v87, -inf
    %89 = vmax.xlane.f32.xlu0 %v88
    %v90 = vpop.xlane.xlu0 %89
    %v91 = vsub.f32 %v87, %v90
    %v92 = vmul.f32 %v91, 1.442695
    %v93 = vpow.pop %v92
    %v94 = vsel %vm61, %v93, 0.0
    %95 = vadd.xlane.f32.xlu0 %v94
    %v96 = vpop.xlane.xlu0 %95
    %v97 = vrcp.pop %v96
    %v98 = vmul.f32 %v93, %v97
    %v99 = vlog2.pop %v96
    %v100 = vmul.f32 %v99, 0.6931472
    %v101 = vsub.f32 %v91, %v100
    %v102 = vmul.f32 %v58, 0.25
    %v103 = vsel %vm61, %v102, -inf
    %104 = vmax.xlane.f32.xlu0 %v103
    %v105 = vpop.xlane.xlu0 %104
    %v106 = vsub.f32 %v102, %v105
    %v107 = vmul.f32 %v106, 1.442695
    %v108 = vpow.pop %v107
    %v109 = vsel %vm61, %v108, 0.0
    %110 = vadd.xlane.f32.xlu0 %v109
    %v111 = vpop.xlane.xlu0 %110
    %v112 = vrcp.pop %v111
    %v113 = vmul.f32 %v108, %v112
    %v114 = vlog2.pop %v111
    %v115 = vmul.f32 %v114, 0.6931472
    %v116 = vsub.f32 %v106, %v115
    %v117 = vsub.f32 %v116, %v101
    %v118 = vmul.f32 %v113, %v117
    %v119 = vmul.f32 %v118, 16.0
    %v120 = vadd.f32 %v119, 0.0
    %121 = vxpose.xlu0.b32.start [1/16] %v113, 128
    %122 = vxpose.xlu0.b32.cont [2/16] 0.0, 128
    %123 = vxpose.xlu0.b32.cont [3/16] 0.0, 128
    %124 = vxpose.xlu0.b32.cont [4/16] 0.0, 128
    %125 = vxpose.xlu0.b32.cont [5/16] 0.0, 128
    %126 = vxpose.xlu0.b32.cont [6/16] 0.0, 128
    %127 = vxpose.xlu0.b32.cont [7/16] 0.0, 128
    %128 = vxpose.xlu0.b32.cont [8/16] 0.0, 128
    %129 = vxpose.xlu0.b32.cont [9/16] 0.0, 128
    %130 = vxpose.xlu0.b32.cont [10/16] 0.0, 128
    %131 = vxpose.xlu0.b32.cont [11/16] 0.0, 128
    %132 = vxpose.xlu0.b32.cont [12/16] 0.0, 128
    %133 = vxpose.xlu0.b32.cont [13/16] 0.0, 128
    %134 = vxpose.xlu0.b32.cont [14/16] 0.0, 128
    %135 = vxpose.xlu0.b32.cont [15/16] 0.0, 128
    %136 = vxpose.xlu0.b32.end [16/16] 0.0, 128
    %v137 = vpop.trf.xlu0
    %v138 = vpop.trf.xlu0
    %v139 = vpop.trf.xlu0
    %v140 = vpop.trf.xlu0
    %v141 = vpop.trf.xlu0
    %v142 = vpop.trf.xlu0
    %v143 = vpop.trf.xlu0
    %v144 = vpop.trf.xlu0
    %v145 = vpop.trf.xlu0
    %v146 = vpop.trf.xlu0
    %v147 = vpop.trf.xlu0
    %v148 = vpop.trf.xlu0
    %v149 = vpop.trf.xlu0
    %v150 = vpop.trf.xlu0
    %v151 = vpop.trf.xlu0
    %v152 = vpop.trf.xlu0
    %vm153 = vcmask 64512
    %v155 = vsel %vm153, %v137, 0
    %v158 = vsel %vm153, %v138, 0
    %v161 = vsel %vm153, %v139, 0
    %v164 = vsel %vm153, %v140, 0
    %166 = vmatprep.subr.mxu0 0.0
    %167 = vmatpush1.msra.mxu0 %v113
    %168 = vmatprep.subr.mxu0 0.0
    %169 = vmatpush1.msra.mxu0 0.0
    %170 = vmatprep.subr.mxu0 0.0
    %171 = vmatpush1.msra.mxu0 0.0
    %172 = vmatprep.subr.mxu0 0.0
    %173 = vmatpush1.msra.mxu0 0.0
    %174 = vmatprep.subr.mxu0 0.0
    %175 = vmatpush1.msra.mxu0 0.0
    %176 = vmatprep.subr.mxu0 0.0
    %177 = vmatpush1.msra.mxu0 0.0
    %178 = vmatprep.subr.mxu0 0.0
    %179 = vmatpush1.msra.mxu0 0.0
    %180 = vmatprep.subr.mxu0 0.0
    %181 = vmatpush1.msra.mxu0 0.0
    %182 = vmatprep.subr.mxu0 0.0
    %183 = vmatpush1.msra.mxu0 0.0
    %184 = vmatprep.subr.mxu0 0.0
    %185 = vmatpush1.msra.mxu0 0.0
    %186 = vmatprep.subr.mxu0 0.0
    %187 = vmatpush1.msra.mxu0 0.0
    %188 = vmatprep.subr.mxu0 0.0
    %189 = vmatpush1.msra.mxu0 0.0
    %190 = vmatprep.subr.mxu0 0.0
    %191 = vmatpush1.msra.mxu0 0.0
    %192 = vmatprep.subr.mxu0 0.0
    %193 = vmatpush1.msra.mxu0 0.0
    %194 = vmatprep.subr.mxu0 0.0
    %195 = vmatpush1.msra.mxu0 0.0
    %196 = vmatprep.subr.mxu0 0.0
    %197 = vmatpush1.msra.mxu0 0.0
    %198 = vmatprep.subr.mxu0 0.0
    %199 = vmatpush1.msra.mxu0 0.0
    %200 = vmatprep.subr.mxu0 0.0
    %201 = vmatpush1.msra.mxu0 0.0
    %202 = vmatprep.subr.mxu0 0.0
    %203 = vmatpush1.msra.mxu0 0.0
    %204 = vmatprep.subr.mxu0 0.0
    %205 = vmatpush1.msra.mxu0 0.0
    %206 = vmatprep.subr.mxu0 0.0
    %207 = vmatpush1.msra.mxu0 0.0
    %208 = vmatprep.subr.mxu0 0.0
    %209 = vmatpush1.msra.mxu0 0.0
    %210 = vmatprep.subr.mxu0 0.0
    %211 = vmatpush1.msra.mxu0 0.0
    %212 = vmatprep.subr.mxu0 0.0
    %213 = vmatpush1.msra.mxu0 0.0
    %214 = vmatprep.subr.mxu0 0.0
    %215 = vmatpush1.msra.mxu0 0.0
    %216 = vmatprep.subr.mxu0 0.0
    %217 = vmatpush1.msra.mxu0 0.0
    %218 = vmatprep.subr.mxu0 0.0
    %219 = vmatpush1.msra.mxu0 0.0
    %220 = vmatprep.subr.mxu0 0.0
    %221 = vmatpush1.msra.mxu0 0.0
    %222 = vmatprep.subr.mxu0 0.0
    %223 = vmatpush1.msra.mxu0 0.0
    %224 = vmatprep.subr.mxu0 0.0
    %225 = vmatpush1.msra.mxu0 0.0
    %226 = vmatprep.subr.mxu0 0.0
    %227 = vmatpush1.msra.mxu0 0.0
    %228 = vmatprep.subr.mxu0 0.0
    %229 = vmatpush1.msra.mxu0 0.0
    %230 = vmatprep.mubr.f32.mxu0 0.0
    %231 = vmatmul.mubr.f32.gmra.mrb[0].mxu0 %v155
    %v232 = vpop.f32.mrb[0].mxu0
    %v233 = vadd.f32 0.0, %v232
    %v234 = vpop.f32.mrb[0].mxu0
    %235 = vmatprep.mubr.f32.mxu0 0.0
    %236 = vmatmul.mubr.f32.gmra.mrb[0].mxu0 %v158
    %v237 = vpop.f32.mrb[0].mxu0
    %v238 = vadd.f32 0.0, %v237
    %v239 = vpop.f32.mrb[0].mxu0
    %240 = vmatprep.mubr.f32.mxu0 0.0
    %241 = vmatmul.mubr.f32.gmra.mrb[0].mxu0 %v161
    %v242 = vpop.f32.mrb[0].mxu0
    %v243 = vadd.f32 0.0, %v242
    %v244 = vpop.f32.mrb[0].mxu0
    %245 = vmatprep.mubr.f32.mxu0 0.0
    %246 = vmatmul.mubr.f32.gmra.mrb[0].mxu0 %v164
    %v247 = vpop.f32.mrb[0].mxu0
    %v248 = vadd.f32 0.0, %v247
    %v249 = vpop.f32.mrb[0].mxu0
    %250 = vdwg.mxu0
    %251 = vxpose.xlu0.b32.start [1/16] %v98, 128
    %252 = vxpose.xlu0.b32.cont [2/16] 0.0, 128
    %253 = vxpose.xlu0.b32.cont [3/16] 0.0, 128
    %254 = vxpose.xlu0.b32.cont [4/16] 0.0, 128
    %255 = vxpose.xlu0.b32.cont [5/16] 0.0, 128
    %256 = vxpose.xlu0.b32.cont [6/16] 0.0, 128
    %257 = vxpose.xlu0.b32.cont [7/16] 0.0, 128
    %258 = vxpose.xlu0.b32.cont [8/16] 0.0, 128
    %259 = vxpose.xlu0.b32.cont [9/16] 0.0, 128
    %260 = vxpose.xlu0.b32.cont [10/16] 0.0, 128
    %261 = vxpose.xlu0.b32.cont [11/16] 0.0, 128
    %262 = vxpose.xlu0.b32.cont [12/16] 0.0, 128
    %263 = vxpose.xlu0.b32.cont [13/16] 0.0, 128
    %264 = vxpose.xlu0.b32.cont [14/16] 0.0, 128
    %265 = vxpose.xlu0.b32.cont [15/16] 0.0, 128
    %266 = vxpose.xlu0.b32.end [16/16] 0.0, 128
    %v267 = vpop.trf.xlu0
    %v268 = vpop.trf.xlu0
    %v269 = vpop.trf.xlu0
    %v270 = vpop.trf.xlu0
    %v271 = vpop.trf.xlu0
    %v272 = vpop.trf.xlu0
    %v273 = vpop.trf.xlu0
    %v274 = vpop.trf.xlu0
    %v275 = vpop.trf.xlu0
    %v276 = vpop.trf.xlu0
    %v277 = vpop.trf.xlu0
    %v278 = vpop.trf.xlu0
    %v279 = vpop.trf.xlu0
    %v280 = vpop.trf.xlu0
    %v281 = vpop.trf.xlu0
    %v282 = vpop.trf.xlu0
    %v284 = vsel %vm153, %v267, 0
    %v287 = vsel %vm153, %v268, 0
    %v290 = vsel %vm153, %v269, 0
    %v293 = vsel %vm153, %v270, 0
    %295 = vmatprep.subr.mxu0 0.0
    %296 = vmatpush1.msra.mxu0 %v98
    %297 = vmatprep.subr.mxu0 0.0
    %298 = vmatpush1.msra.mxu0 0.0
    %299 = vmatprep.subr.mxu0 0.0
    %300 = vmatpush1.msra.mxu0 0.0
    %301 = vmatprep.subr.mxu0 0.0
    %302 = vmatpush1.msra.mxu0 0.0
    %303 = vmatprep.subr.mxu0 0.0
    %304 = vmatpush1.msra.mxu0 0.0
    %305 = vmatprep.subr.mxu0 0.0
    %306 = vmatpush1.msra.mxu0 0.0
    %307 = vmatprep.subr.mxu0 0.0
    %308 = vmatpush1.msra.mxu0 0.0
    %309 = vmatprep.subr.mxu0 0.0
    %310 = vmatpush1.msra.mxu0 0.0
    %311 = vmatprep.subr.mxu0 0.0
    %312 = vmatpush1.msra.mxu0 0.0
    %313 = vmatprep.subr.mxu0 0.0
    %314 = vmatpush1.msra.mxu0 0.0
    %315 = vmatprep.subr.mxu0 0.0
    %316 = vmatpush1.msra.mxu0 0.0
    %317 = vmatprep.subr.mxu0 0.0
    %318 = vmatpush1.msra.mxu0 0.0
    %319 = vmatprep.subr.mxu0 0.0
    %320 = vmatpush1.msra.mxu0 0.0
    %321 = vmatprep.subr.mxu0 0.0
    %322 = vmatpush1.msra.mxu0 0.0
    %323 = vmatprep.subr.mxu0 0.0
    %324 = vmatpush1.msra.mxu0 0.0
    %325 = vmatprep.subr.mxu0 0.0
    %326 = vmatpush1.msra.mxu0 0.0
    %327 = vmatprep.subr.mxu0 0.0
    %328 = vmatpush1.msra.mxu0 0.0
    %329 = vmatprep.subr.mxu0 0.0
    %330 = vmatpush1.msra.mxu0 0.0
    %331 = vmatprep.subr.mxu0 0.0
    %332 = vmatpush1.msra.mxu0 0.0
    %333 = vmatprep.subr.mxu0 0.0
    %334 = vmatpush1.msra.mxu0 0.0
    %335 = vmatprep.subr.mxu0 0.0
    %336 = vmatpush1.msra.mxu0 0.0
    %337 = vmatprep.subr.mxu0 0.0
    %338 = vmatpush1.msra.mxu0 0.0
    %339 = vmatprep.subr.mxu0 0.0
    %340 = vmatpush1.msra.mxu0 0.0
    %341 = vmatprep.subr.mxu0 0.0
    %342 = vmatpush1.msra.mxu0 0.0
    %343 = vmatprep.subr.mxu0 0.0
    %344 = vmatpush1.msra.mxu0 0.0
    %345 = vmatprep.subr.mxu0 0.0
    %346 = vmatpush1.msra.mxu0 0.0
    %347 = vmatprep.subr.mxu0 0.0
    %348 = vmatpush1.msra.mxu0 0.0
    %349 = vmatprep.subr.mxu0 0.0
    %350 = vmatpush1.msra.mxu0 0.0
    %351 = vmatprep.subr.mxu0 0.0
    %352 = vmatpush1.msra.mxu0 0.0
    %353 = vmatprep.subr.mxu0 0.0
    %354 = vmatpush1.msra.mxu0 0.0
    %355 = vmatprep.subr.mxu0 0.0
    %356 = vmatpush1.msra.mxu0 0.0
    %357 = vmatprep.subr.mxu0 0.0
    %358 = vmatpush1.msra.mxu0 0.0
    %359 = vmatprep.mubr.f32.mxu0 0.0
    %360 = vmatmul.mubr.f32.gmra.mrb[0].mxu0 %v284
    %v361 = vpop.f32.mrb[0].mxu0
    %v362 = vadd.f32 0.0, %v361
    %v363 = vpop.f32.mrb[0].mxu0
    %364 = vmatprep.mubr.f32.mxu0 0.0
    %365 = vmatmul.mubr.f32.gmra.mrb[0].mxu0 %v287
    %v366 = vpop.f32.mrb[0].mxu0
    %v367 = vadd.f32 0.0, %v366
    %v368 = vpop.f32.mrb[0].mxu0
    %369 = vmatprep.mubr.f32.mxu0 0.0
    %370 = vmatmul.mubr.f32.gmra.mrb[0].mxu0 %v290
    %v371 = vpop.f32.mrb[0].mxu0
    %v372 = vadd.f32 0.0, %v371
    %v373 = vpop.f32.mrb[0].mxu0
    %374 = vmatprep.mubr.f32.mxu0 0.0
    %375 = vmatmul.mubr.f32.gmra.mrb[0].mxu0 %v293
    %v376 = vpop.f32.mrb[0].mxu0
    %v377 = vadd.f32 0.0, %v376
    %v378 = vpop.f32.mrb[0].mxu0
    %379 = vdwg.mxu0
    %v380 = vsub.f32 %v233, %v362
    %v381 = vsub.f32 %v238, %v367
    %v382 = vsub.f32 %v243, %v372
    %v383 = vsub.f32 %v248, %v377
    %v384 = vmul.f32 %v380, %v380
    %v385 = vmul.f32 %v381, %v381
    %v386 = vmul.f32 %v382, %v382
    %v387 = vmul.f32 %v383, %v383
    %v388 = vadd.f32 %v384, 0.0
    %v389 = vadd.f32 %v385, 0.0
    %v390 = vadd.f32 %v386, 0.0
    %v391 = vadd.f32 %v387, 0.0
    %v393 = vsel %vm61, %v113, 0
    %395 = vmatprep.subr.mxu0 0.0
    %396 = vmatpush1.xpose.msra.mxu0 %v393
    %397 = vmatprep.subr.mxu0 0.0
    %398 = vmatpush1.xpose.msra.mxu0 0.0
    %399 = vmatprep.subr.mxu0 0.0
    %400 = vmatpush1.xpose.msra.mxu0 0.0
    %401 = vmatprep.subr.mxu0 0.0
    %402 = vmatpush1.xpose.msra.mxu0 0.0
    %403 = vmatprep.subr.mxu0 0.0
    %404 = vmatpush1.xpose.msra.mxu0 0.0
    %405 = vmatprep.subr.mxu0 0.0
    %406 = vmatpush1.xpose.msra.mxu0 0.0
    %407 = vmatprep.subr.mxu0 0.0
    %408 = vmatpush1.xpose.msra.mxu0 0.0
    %409 = vmatprep.subr.mxu0 0.0
    %410 = vmatpush1.xpose.msra.mxu0 0.0
    %411 = vmatprep.subr.mxu0 0.0
    %412 = vmatpush1.xpose.msra.mxu0 0.0
    %413 = vmatprep.subr.mxu0 0.0
    %414 = vmatpush1.xpose.msra.mxu0 0.0
    %415 = vmatprep.subr.mxu0 0.0
    %416 = vmatpush1.xpose.msra.mxu0 0.0
    %417 = vmatprep.subr.mxu0 0.0
    %418 = vmatpush1.xpose.msra.mxu0 0.0
    %419 = vmatprep.subr.mxu0 0.0
    %420 = vmatpush1.xpose.msra.mxu0 0.0
    %421 = vmatprep.subr.mxu0 0.0
    %422 = vmatpush1.xpose.msra.mxu0 0.0
    %423 = vmatprep.subr.mxu0 0.0
    %424 = vmatpush1.xpose.msra.mxu0 0.0
    %425 = vmatprep.subr.mxu0 0.0
    %426 = vmatpush1.xpose.msra.mxu0 0.0
    %427 = vmatprep.subr.mxu0 0.0
    %428 = vmatpush1.xpose.msra.mxu0 0.0
    %429 = vmatprep.subr.mxu0 0.0
    %430 = vmatpush1.xpose.msra.mxu0 0.0
    %431 = vmatprep.subr.mxu0 0.0
    %432 = vmatpush1.xpose.msra.mxu0 0.0
    %433 = vmatprep.subr.mxu0 0.0
    %434 = vmatpush1.xpose.msra.mxu0 0.0
    %435 = vmatprep.subr.mxu0 0.0
    %436 = vmatpush1.xpose.msra.mxu0 0.0
    %437 = vmatprep.subr.mxu0 0.0
    %438 = vmatpush1.xpose.msra.mxu0 0.0
    %439 = vmatprep.subr.mxu0 0.0
    %440 = vmatpush1.xpose.msra.mxu0 0.0
    %441 = vmatprep.subr.mxu0 0.0
    %442 = vmatpush1.xpose.msra.mxu0 0.0
    %443 = vmatprep.subr.mxu0 0.0
    %444 = vmatpush1.xpose.msra.mxu0 0.0
    %445 = vmatprep.subr.mxu0 0.0
    %446 = vmatpush1.xpose.msra.mxu0 0.0
    %447 = vmatprep.subr.mxu0 0.0
    %448 = vmatpush1.xpose.msra.mxu0 0.0
    %449 = vmatprep.subr.mxu0 0.0
    %450 = vmatpush1.xpose.msra.mxu0 0.0
    %451 = vmatprep.subr.mxu0 0.0
    %452 = vmatpush1.xpose.msra.mxu0 0.0
    %453 = vmatprep.subr.mxu0 0.0
    %454 = vmatpush1.xpose.msra.mxu0 0.0
    %455 = vmatprep.subr.mxu0 0.0
    %456 = vmatpush1.xpose.msra.mxu0 0.0
    %457 = vmatprep.subr.mxu0 0.0
    %458 = vmatpush1.xpose.msra.mxu0 0.0
    %459 = vmatprep.mubr.f32.mxu0 0.0
    %460 = vmatmul.mubr.f32.gmra.mrb[0].mxu0 %v393
    %v461 = vpop.f32.mrb[0].mxu0
    %v462 = vadd.f32 0.0, %v461
    %v463 = vpop.f32.mrb[0].mxu0
    %464 = vdwg.mxu0
    %v466 = vsel %vm61, %v98, 0
    %468 = vmatprep.subr.mxu0 0.0
    %469 = vmatpush1.xpose.msra.mxu0 %v466
    %470 = vmatprep.subr.mxu0 0.0
    %471 = vmatpush1.xpose.msra.mxu0 0.0
    %472 = vmatprep.subr.mxu0 0.0
    %473 = vmatpush1.xpose.msra.mxu0 0.0
    %474 = vmatprep.subr.mxu0 0.0
    %475 = vmatpush1.xpose.msra.mxu0 0.0
    %476 = vmatprep.subr.mxu0 0.0
    %477 = vmatpush1.xpose.msra.mxu0 0.0
    %478 = vmatprep.subr.mxu0 0.0
    %479 = vmatpush1.xpose.msra.mxu0 0.0
    %480 = vmatprep.subr.mxu0 0.0
    %481 = vmatpush1.xpose.msra.mxu0 0.0
    %482 = vmatprep.subr.mxu0 0.0
    %483 = vmatpush1.xpose.msra.mxu0 0.0
    %484 = vmatprep.subr.mxu0 0.0
    %485 = vmatpush1.xpose.msra.mxu0 0.0
    %486 = vmatprep.subr.mxu0 0.0
    %487 = vmatpush1.xpose.msra.mxu0 0.0
    %488 = vmatprep.subr.mxu0 0.0
    %489 = vmatpush1.xpose.msra.mxu0 0.0
    %490 = vmatprep.subr.mxu0 0.0
    %491 = vmatpush1.xpose.msra.mxu0 0.0
    %492 = vmatprep.subr.mxu0 0.0
    %493 = vmatpush1.xpose.msra.mxu0 0.0
    %494 = vmatprep.subr.mxu0 0.0
    %495 = vmatpush1.xpose.msra.mxu0 0.0
    %496 = vmatprep.subr.mxu0 0.0
    %497 = vmatpush1.xpose.msra.mxu0 0.0
    %498 = vmatprep.subr.mxu0 0.0
    %499 = vmatpush1.xpose.msra.mxu0 0.0
    %500 = vmatprep.subr.mxu0 0.0
    %501 = vmatpush1.xpose.msra.mxu0 0.0
    %502 = vmatprep.subr.mxu0 0.0
    %503 = vmatpush1.xpose.msra.mxu0 0.0
    %504 = vmatprep.subr.mxu0 0.0
    %505 = vmatpush1.xpose.msra.mxu0 0.0
    %506 = vmatprep.subr.mxu0 0.0
    %507 = vmatpush1.xpose.msra.mxu0 0.0
    %508 = vmatprep.subr.mxu0 0.0
    %509 = vmatpush1.xpose.msra.mxu0 0.0
    %510 = vmatprep.subr.mxu0 0.0
    %511 = vmatpush1.xpose.msra.mxu0 0.0
    %512 = vmatprep.subr.mxu0 0.0
    %513 = vmatpush1.xpose.msra.mxu0 0.0
    %514 = vmatprep.subr.mxu0 0.0
    %515 = vmatpush1.xpose.msra.mxu0 0.0
    %516 = vmatprep.subr.mxu0 0.0
    %517 = vmatpush1.xpose.msra.mxu0 0.0
    %518 = vmatprep.subr.mxu0 0.0
    %519 = vmatpush1.xpose.msra.mxu0 0.0
    %520 = vmatprep.subr.mxu0 0.0
    %521 = vmatpush1.xpose.msra.mxu0 0.0
    %522 = vmatprep.subr.mxu0 0.0
    %523 = vmatpush1.xpose.msra.mxu0 0.0
    %524 = vmatprep.subr.mxu0 0.0
    %525 = vmatpush1.xpose.msra.mxu0 0.0
    %526 = vmatprep.subr.mxu0 0.0
    %527 = vmatpush1.xpose.msra.mxu0 0.0
    %528 = vmatprep.subr.mxu0 0.0
    %529 = vmatpush1.xpose.msra.mxu0 0.0
    %530 = vmatprep.subr.mxu0 0.0
    %531 = vmatpush1.xpose.msra.mxu0 0.0
    %532 = vmatprep.mubr.f32.mxu0 0.0
    %533 = vmatmul.mubr.f32.gmra.mrb[0].mxu0 %v466
    %v534 = vpop.f32.mrb[0].mxu0
    %v535 = vadd.f32 0.0, %v534
    %v536 = vpop.f32.mrb[0].mxu0
    %537 = vdwg.mxu0
    %v538 = vsub.f32 %v462, %v535
    %v539 = vmul.f32 %v538, %v538
    %v540 = vadd.f32 %v539, 0.0
    %v541 = vmul.f32 %v57, 0.33333334
    %v542 = vsel %vm61, %v541, -inf
    %543 = vmax.xlane.f32.xlu0 %v542
    %v544 = vpop.xlane.xlu0 %543
    %v545 = vsub.f32 %v541, %v544
    %v546 = vmul.f32 %v545, 1.442695
    %v547 = vpow.pop %v546
    %v548 = vsel %vm61, %v547, 0.0
    %549 = vadd.xlane.f32.xlu0 %v548
    %v550 = vpop.xlane.xlu0 %549
    %v551 = vrcp.pop %v550
    %v552 = vmul.f32 %v547, %v551
    %v553 = vlog2.pop %v550
    %v554 = vmul.f32 %v553, 0.6931472
    %v555 = vsub.f32 %v545, %v554
    %v556 = vmul.f32 %v58, 0.33333334
    %v557 = vsel %vm61, %v556, -inf
    %558 = vmax.xlane.f32.xlu0 %v557
    %v559 = vpop.xlane.xlu0 %558
    %v560 = vsub.f32 %v556, %v559
    %v561 = vmul.f32 %v560, 1.442695
    %v562 = vpow.pop %v561
    %v563 = vsel %vm61, %v562, 0.0
    %564 = vadd.xlane.f32.xlu0 %v563
    %v565 = vpop.xlane.xlu0 %564
    %v566 = vrcp.pop %v565
    %v567 = vmul.f32 %v562, %v566
    %v568 = vlog2.pop %v565
    %v569 = vmul.f32 %v568, 0.6931472
    %v570 = vsub.f32 %v560, %v569
    %v571 = vsub.f32 %v570, %v555
    %v572 = vmul.f32 %v567, %v571
    %v573 = vmul.f32 %v572, 9.0
    %v574 = vadd.f32 %v120, %v573
    %575 = vxpose.xlu0.b32.start [1/16] %v567, 128
    %576 = vxpose.xlu0.b32.cont [2/16] 0.0, 128
    %577 = vxpose.xlu0.b32.cont [3/16] 0.0, 128
    %578 = vxpose.xlu0.b32.cont [4/16] 0.0, 128
    %579 = vxpose.xlu0.b32.cont [5/16] 0.0, 128
    %580 = vxpose.xlu0.b32.cont [6/16] 0.0, 128
    %581 = vxpose.xlu0.b32.cont [7/16] 0.0, 128
    %582 = vxpose.xlu0.b32.cont [8/16] 0.0, 128
    %583 = vxpose.xlu0.b32.cont [9/16] 0.0, 128
    %584 = vxpose.xlu0.b32.cont [10/16] 0.0, 128
    %585 = vxpose.xlu0.b32.cont [11/16] 0.0, 128
    %586 = vxpose.xlu0.b32.cont [12/16] 0.0, 128
    %587 = vxpose.xlu0.b32.cont [13/16] 0.0, 128
    %588 = vxpose.xlu0.b32.cont [14/16] 0.0, 128
    %589 = vxpose.xlu0.b32.cont [15/16] 0.0, 128
    %590 = vxpose.xlu0.b32.end [16/16] 0.0, 128
    %v591 = vpop.trf.xlu0
    %v592 = vpop.trf.xlu0
    %v593 = vpop.trf.xlu0
    %v594 = vpop.trf.xlu0
    %v595 = vpop.trf.xlu0
    %v596 = vpop.trf.xlu0
    %v597 = vpop.trf.xlu0
    %v598 = vpop.trf.xlu0
    %v599 = vpop.trf.xlu0
    %v600 = vpop.trf.xlu0
    %v601 = vpop.trf.xlu0
    %v602 = vpop.trf.xlu0
    %v603 = vpop.trf.xlu0
    %v604 = vpop.trf.xlu0
    %v605 = vpop.trf.xlu0
    %v606 = vpop.trf.xlu0
    %v608 = vsel %vm153, %v591, 0
    %v611 = vsel %vm153, %v592, 0
    %v614 = vsel %vm153, %v593, 0
    %v617 = vsel %vm153, %v594, 0
    %619 = vmatprep.subr.mxu0 0.0
    %620 = vmatpush1.msra.mxu0 %v567
    %621 = vmatprep.subr.mxu0 0.0
    %622 = vmatpush1.msra.mxu0 0.0
    %623 = vmatprep.subr.mxu0 0.0
    %624 = vmatpush1.msra.mxu0 0.0
    %625 = vmatprep.subr.mxu0 0.0
    %626 = vmatpush1.msra.mxu0 0.0
    %627 = vmatprep.subr.mxu0 0.0
    %628 = vmatpush1.msra.mxu0 0.0
    %629 = vmatprep.subr.mxu0 0.0
    %630 = vmatpush1.msra.mxu0 0.0
    %631 = vmatprep.subr.mxu0 0.0
    %632 = vmatpush1.msra.mxu0 0.0
    %633 = vmatprep.subr.mxu0 0.0
    %634 = vmatpush1.msra.mxu0 0.0
    %635 = vmatprep.subr.mxu0 0.0
    %636 = vmatpush1.msra.mxu0 0.0
    %637 = vmatprep.subr.mxu0 0.0
    %638 = vmatpush1.msra.mxu0 0.0
    %639 = vmatprep.subr.mxu0 0.0
    %640 = vmatpush1.msra.mxu0 0.0
    %641 = vmatprep.subr.mxu0 0.0
    %642 = vmatpush1.msra.mxu0 0.0
    %643 = vmatprep.subr.mxu0 0.0
    %644 = vmatpush1.msra.mxu0 0.0
    %645 = vmatprep.subr.mxu0 0.0
    %646 = vmatpush1.msra.mxu0 0.0
    %647 = vmatprep.subr.mxu0 0.0
    %648 = vmatpush1.msra.mxu0 0.0
    %649 = vmatprep.subr.mxu0 0.0
    %650 = vmatpush1.msra.mxu0 0.0
    %651 = vmatprep.subr.mxu0 0.0
    %652 = vmatpush1.msra.mxu0 0.0
    %653 = vmatprep.subr.mxu0 0.0
    %654 = vmatpush1.msra.mxu0 0.0
    %655 = vmatprep.subr.mxu0 0.0
    %656 = vmatpush1.msra.mxu0 0.0
    %657 = vmatprep.subr.mxu0 0.0
    %658 = vmatpush1.msra.mxu0 0.0
    %659 = vmatprep.subr.mxu0 0.0
    %660 = vmatpush1.msra.mxu0 0.0
    %661 = vmatprep.subr.mxu0 0.0
    %662 = vmatpush1.msra.mxu0 0.0
    %663 = vmatprep.subr.mxu0 0.0
    %664 = vmatpush1.msra.mxu0 0.0
    %665 = vmatprep.subr.mxu0 0.0
    %666 = vmatpush1.msra.mxu0 0.0
    %667 = vmatprep.subr.mxu0 0.0
    %668 = vmatpush1.msra.mxu0 0.0
    %669 = vmatprep.subr.mxu0 0.0
    %670 = vmatpush1.msra.mxu0 0.0
    %671 = vmatprep.subr.mxu0 0.0
    %672 = vmatpush1.msra.mxu0 0.0
    %673 = vmatprep.subr.mxu0 0.0
    %674 = vmatpush1.msra.mxu0 0.0
    %675 = vmatprep.subr.mxu0 0.0
    %676 = vmatpush1.msra.mxu0 0.0
    %677 = vmatprep.subr.mxu0 0.0
    %678 = vmatpush1.msra.mxu0 0.0
    %679 = vmatprep.subr.mxu0 0.0
    %680 = vmatpush1.msra.mxu0 0.0
    %681 = vmatprep.subr.mxu0 0.0
    %682 = vmatpush1.msra.mxu0 0.0
    %683 = vmatprep.mubr.f32.mxu0 0.0
    %684 = vmatmul.mubr.f32.gmra.mrb[0].mxu0 %v608
    %v685 = vpop.f32.mrb[0].mxu0
    %v686 = vadd.f32 0.0, %v685
    %v687 = vpop.f32.mrb[0].mxu0
    %688 = vmatprep.mubr.f32.mxu0 0.0
    %689 = vmatmul.mubr.f32.gmra.mrb[0].mxu0 %v611
    %v690 = vpop.f32.mrb[0].mxu0
    %v691 = vadd.f32 0.0, %v690
    %v692 = vpop.f32.mrb[0].mxu0
    %693 = vmatprep.mubr.f32.mxu0 0.0
    %694 = vmatmul.mubr.f32.gmra.mrb[0].mxu0 %v614
    %v695 = vpop.f32.mrb[0].mxu0
    %v696 = vadd.f32 0.0, %v695
    %v697 = vpop.f32.mrb[0].mxu0
    %698 = vmatprep.mubr.f32.mxu0 0.0
    %699 = vmatmul.mubr.f32.gmra.mrb[0].mxu0 %v617
    %v700 = vpop.f32.mrb[0].mxu0
    %v701 = vadd.f32 0.0, %v700
    %v702 = vpop.f32.mrb[0].mxu0
    %703 = vdwg.mxu0
    %704 = vxpose.xlu0.b32.start [1/16] %v552, 128
    %705 = vxpose.xlu0.b32.cont [2/16] 0.0, 128
    %706 = vxpose.xlu0.b32.cont [3/16] 0.0, 128
    %707 = vxpose.xlu0.b32.cont [4/16] 0.0, 128
    %708 = vxpose.xlu0.b32.cont [5/16] 0.0, 128
    %709 = vxpose.xlu0.b32.cont [6/16] 0.0, 128
    %710 = vxpose.xlu0.b32.cont [7/16] 0.0, 128
    %711 = vxpose.xlu0.b32.cont [8/16] 0.0, 128
    %712 = vxpose.xlu0.b32.cont [9/16] 0.0, 128
    %713 = vxpose.xlu0.b32.cont [10/16] 0.0, 128
    %714 = vxpose.xlu0.b32.cont [11/16] 0.0, 128
    %715 = vxpose.xlu0.b32.cont [12/16] 0.0, 128
    %716 = vxpose.xlu0.b32.cont [13/16] 0.0, 128
    %717 = vxpose.xlu0.b32.cont [14/16] 0.0, 128
    %718 = vxpose.xlu0.b32.cont [15/16] 0.0, 128
    %719 = vxpose.xlu0.b32.end [16/16] 0.0, 128
    %v720 = vpop.trf.xlu0
    %v721 = vpop.trf.xlu0
    %v722 = vpop.trf.xlu0
    %v723 = vpop.trf.xlu0
    %v724 = vpop.trf.xlu0
    %v725 = vpop.trf.xlu0
    %v726 = vpop.trf.xlu0
    %v727 = vpop.trf.xlu0
    %v728 = vpop.trf.xlu0
    %v729 = vpop.trf.xlu0
    %v730 = vpop.trf.xlu0
    %v731 = vpop.trf.xlu0
    %v732 = vpop.trf.xlu0
    %v733 = vpop.trf.xlu0
    %v734 = vpop.trf.xlu0
    %v735 = vpop.trf.xlu0
    %v737 = vsel %vm153, %v720, 0
    %v740 = vsel %vm153, %v721, 0
    %v743 = vsel %vm153, %v722, 0
    %v746 = vsel %vm153, %v723, 0
    %748 = vmatprep.subr.mxu0 0.0
    %749 = vmatpush1.msra.mxu0 %v552
    %750 = vmatprep.subr.mxu0 0.0
    %751 = vmatpush1.msra.mxu0 0.0
    %752 = vmatprep.subr.mxu0 0.0
    %753 = vmatpush1.msra.mxu0 0.0
    %754 = vmatprep.subr.mxu0 0.0
    %755 = vmatpush1.msra.mxu0 0.0
    %756 = vmatprep.subr.mxu0 0.0
    %757 = vmatpush1.msra.mxu0 0.0
    %758 = vmatprep.subr.mxu0 0.0
    %759 = vmatpush1.msra.mxu0 0.0
    %760 = vmatprep.subr.mxu0 0.0
    %761 = vmatpush1.msra.mxu0 0.0
    %762 = vmatprep.subr.mxu0 0.0
    %763 = vmatpush1.msra.mxu0 0.0
    %764 = vmatprep.subr.mxu0 0.0
    %765 = vmatpush1.msra.mxu0 0.0
    %766 = vmatprep.subr.mxu0 0.0
    %767 = vmatpush1.msra.mxu0 0.0
    %768 = vmatprep.subr.mxu0 0.0
    %769 = vmatpush1.msra.mxu0 0.0
    %770 = vmatprep.subr.mxu0 0.0
    %771 = vmatpush1.msra.mxu0 0.0
    %772 = vmatprep.subr.mxu0 0.0
    %773 = vmatpush1.msra.mxu0 0.0
    %774 = vmatprep.subr.mxu0 0.0
    %775 = vmatpush1.msra.mxu0 0.0
    %776 = vmatprep.subr.mxu0 0.0
    %777 = vmatpush1.msra.mxu0 0.0
    %778 = vmatprep.subr.mxu0 0.0
    %779 = vmatpush1.msra.mxu0 0.0
    %780 = vmatprep.subr.mxu0 0.0
    %781 = vmatpush1.msra.mxu0 0.0
    %782 = vmatprep.subr.mxu0 0.0
    %783 = vmatpush1.msra.mxu0 0.0
    %784 = vmatprep.subr.mxu0 0.0
    %785 = vmatpush1.msra.mxu0 0.0
    %786 = vmatprep.subr.mxu0 0.0
    %787 = vmatpush1.msra.mxu0 0.0
    %788 = vmatprep.subr.mxu0 0.0
    %789 = vmatpush1.msra.mxu0 0.0
    %790 = vmatprep.subr.mxu0 0.0
    %791 = vmatpush1.msra.mxu0 0.0
    %792 = vmatprep.subr.mxu0 0.0
    %793 = vmatpush1.msra.mxu0 0.0
    %794 = vmatprep.subr.mxu0 0.0
    %795 = vmatpush1.msra.mxu0 0.0
    %796 = vmatprep.subr.mxu0 0.0
    %797 = vmatpush1.msra.mxu0 0.0
    %798 = vmatprep.subr.mxu0 0.0
    %799 = vmatpush1.msra.mxu0 0.0
    %800 = vmatprep.subr.mxu0 0.0
    %801 = vmatpush1.msra.mxu0 0.0
    %802 = vmatprep.subr.mxu0 0.0
    %803 = vmatpush1.msra.mxu0 0.0
    %804 = vmatprep.subr.mxu0 0.0
    %805 = vmatpush1.msra.mxu0 0.0
    %806 = vmatprep.subr.mxu0 0.0
    %807 = vmatpush1.msra.mxu0 0.0
    %808 = vmatprep.subr.mxu0 0.0
    %809 = vmatpush1.msra.mxu0 0.0
    %810 = vmatprep.subr.mxu0 0.0
    %811 = vmatpush1.msra.mxu0 0.0
    %812 = vmatprep.mubr.f32.mxu0 0.0
    %813 = vmatmul.mubr.f32.gmra.mrb[0].mxu0 %v737
    %v814 = vpop.f32.mrb[0].mxu0
    %v815 = vadd.f32 0.0, %v814
    %v816 = vpop.f32.mrb[0].mxu0
    %817 = vmatprep.mubr.f32.mxu0 0.0
    %818 = vmatmul.mubr.f32.gmra.mrb[0].mxu0 %v740
    %v819 = vpop.f32.mrb[0].mxu0
    %v820 = vadd.f32 0.0, %v819
    %v821 = vpop.f32.mrb[0].mxu0
    %822 = vmatprep.mubr.f32.mxu0 0.0
    %823 = vmatmul.mubr.f32.gmra.mrb[0].mxu0 %v743
    %v824 = vpop.f32.mrb[0].mxu0
    %v825 = vadd.f32 0.0, %v824
    %v826 = vpop.f32.mrb[0].mxu0
    %827 = vmatprep.mubr.f32.mxu0 0.0
    %828 = vmatmul.mubr.f32.gmra.mrb[0].mxu0 %v746
    %v829 = vpop.f32.mrb[0].mxu0
    %v830 = vadd.f32 0.0, %v829
    %v831 = vpop.f32.mrb[0].mxu0
    %832 = vdwg.mxu0
    %v833 = vsub.f32 %v686, %v815
    %v834 = vsub.f32 %v691, %v820
    %v835 = vsub.f32 %v696, %v825
    %v836 = vsub.f32 %v701, %v830
    %v837 = vmul.f32 %v833, %v833
    %v838 = vmul.f32 %v834, %v834
    %v839 = vmul.f32 %v835, %v835
    %v840 = vmul.f32 %v836, %v836
    %v841 = vadd.f32 %v388, %v837
    %v842 = vadd.f32 %v389, %v838
    %v843 = vadd.f32 %v390, %v839
    %v844 = vadd.f32 %v391, %v840
    %v846 = vsel %vm61, %v567, 0
    %848 = vmatprep.subr.mxu0 0.0
    %849 = vmatpush1.xpose.msra.mxu0 %v846
    %850 = vmatprep.subr.mxu0 0.0
    %851 = vmatpush1.xpose.msra.mxu0 0.0
    %852 = vmatprep.subr.mxu0 0.0
    %853 = vmatpush1.xpose.msra.mxu0 0.0
    %854 = vmatprep.subr.mxu0 0.0
    %855 = vmatpush1.xpose.msra.mxu0 0.0
    %856 = vmatprep.subr.mxu0 0.0
    %857 = vmatpush1.xpose.msra.mxu0 0.0
    %858 = vmatprep.subr.mxu0 0.0
    %859 = vmatpush1.xpose.msra.mxu0 0.0
    %860 = vmatprep.subr.mxu0 0.0
    %861 = vmatpush1.xpose.msra.mxu0 0.0
    %862 = vmatprep.subr.mxu0 0.0
    %863 = vmatpush1.xpose.msra.mxu0 0.0
    %864 = vmatprep.subr.mxu0 0.0
    %865 = vmatpush1.xpose.msra.mxu0 0.0
    %866 = vmatprep.subr.mxu0 0.0
    %867 = vmatpush1.xpose.msra.mxu0 0.0
    %868 = vmatprep.subr.mxu0 0.0
    %869 = vmatpush1.xpose.msra.mxu0 0.0
    %870 = vmatprep.subr.mxu0 0.0
    %871 = vmatpush1.xpose.msra.mxu0 0.0
    %872 = vmatprep.subr.mxu0 0.0
    %873 = vmatpush1.xpose.msra.mxu0 0.0
    %874 = vmatprep.subr.mxu0 0.0
    %875 = vmatpush1.xpose.msra.mxu0 0.0
    %876 = vmatprep.subr.mxu0 0.0
    %877 = vmatpush1.xpose.msra.mxu0 0.0
    %878 = vmatprep.subr.mxu0 0.0
    %879 = vmatpush1.xpose.msra.mxu0 0.0
    %880 = vmatprep.subr.mxu0 0.0
    %881 = vmatpush1.xpose.msra.mxu0 0.0
    %882 = vmatprep.subr.mxu0 0.0
    %883 = vmatpush1.xpose.msra.mxu0 0.0
    %884 = vmatprep.subr.mxu0 0.0
    %885 = vmatpush1.xpose.msra.mxu0 0.0
    %886 = vmatprep.subr.mxu0 0.0
    %887 = vmatpush1.xpose.msra.mxu0 0.0
    %888 = vmatprep.subr.mxu0 0.0
    %889 = vmatpush1.xpose.msra.mxu0 0.0
    %890 = vmatprep.subr.mxu0 0.0
    %891 = vmatpush1.xpose.msra.mxu0 0.0
    %892 = vmatprep.subr.mxu0 0.0
    %893 = vmatpush1.xpose.msra.mxu0 0.0
    %894 = vmatprep.subr.mxu0 0.0
    %895 = vmatpush1.xpose.msra.mxu0 0.0
    %896 = vmatprep.subr.mxu0 0.0
    %897 = vmatpush1.xpose.msra.mxu0 0.0
    %898 = vmatprep.subr.mxu0 0.0
    %899 = vmatpush1.xpose.msra.mxu0 0.0
    %900 = vmatprep.subr.mxu0 0.0
    %901 = vmatpush1.xpose.msra.mxu0 0.0
    %902 = vmatprep.subr.mxu0 0.0
    %903 = vmatpush1.xpose.msra.mxu0 0.0
    %904 = vmatprep.subr.mxu0 0.0
    %905 = vmatpush1.xpose.msra.mxu0 0.0
    %906 = vmatprep.subr.mxu0 0.0
    %907 = vmatpush1.xpose.msra.mxu0 0.0
    %908 = vmatprep.subr.mxu0 0.0
    %909 = vmatpush1.xpose.msra.mxu0 0.0
    %910 = vmatprep.subr.mxu0 0.0
    %911 = vmatpush1.xpose.msra.mxu0 0.0
    %912 = vmatprep.mubr.f32.mxu0 0.0
    %913 = vmatmul.mubr.f32.gmra.mrb[0].mxu0 %v846
    %v914 = vpop.f32.mrb[0].mxu0
    %v915 = vadd.f32 0.0, %v914
    %v916 = vpop.f32.mrb[0].mxu0
    %917 = vdwg.mxu0
    %v919 = vsel %vm61, %v552, 0
    %921 = vmatprep.subr.mxu0 0.0
    %922 = vmatpush1.xpose.msra.mxu0 %v919
    %923 = vmatprep.subr.mxu0 0.0
    %924 = vmatpush1.xpose.msra.mxu0 0.0
    %925 = vmatprep.subr.mxu0 0.0
    %926 = vmatpush1.xpose.msra.mxu0 0.0
    %927 = vmatprep.subr.mxu0 0.0
    %928 = vmatpush1.xpose.msra.mxu0 0.0
    %929 = vmatprep.subr.mxu0 0.0
    %930 = vmatpush1.xpose.msra.mxu0 0.0
    %931 = vmatprep.subr.mxu0 0.0
    %932 = vmatpush1.xpose.msra.mxu0 0.0
    %933 = vmatprep.subr.mxu0 0.0
    %934 = vmatpush1.xpose.msra.mxu0 0.0
    %935 = vmatprep.subr.mxu0 0.0
    %936 = vmatpush1.xpose.msra.mxu0 0.0
    %937 = vmatprep.subr.mxu0 0.0
    %938 = vmatpush1.xpose.msra.mxu0 0.0
    %939 = vmatprep.subr.mxu0 0.0
    %940 = vmatpush1.xpose.msra.mxu0 0.0
    %941 = vmatprep.subr.mxu0 0.0
    %942 = vmatpush1.xpose.msra.mxu0 0.0
    %943 = vmatprep.subr.mxu0 0.0
    %944 = vmatpush1.xpose.msra.mxu0 0.0
    %945 = vmatprep.subr.mxu0 0.0
    %946 = vmatpush1.xpose.msra.mxu0 0.0
    %947 = vmatprep.subr.mxu0 0.0
    %948 = vmatpush1.xpose.msra.mxu0 0.0
    %949 = vmatprep.subr.mxu0 0.0
    %950 = vmatpush1.xpose.msra.mxu0 0.0
    %951 = vmatprep.subr.mxu0 0.0
    %952 = vmatpush1.xpose.msra.mxu0 0.0
    %953 = vmatprep.subr.mxu0 0.0
    %954 = vmatpush1.xpose.msra.mxu0 0.0
    %955 = vmatprep.subr.mxu0 0.0
    %956 = vmatpush1.xpose.msra.mxu0 0.0
    %957 = vmatprep.subr.mxu0 0.0
    %958 = vmatpush1.xpose.msra.mxu0 0.0
    %959 = vmatprep.subr.mxu0 0.0
    %960 = vmatpush1.xpose.msra.mxu0 0.0
    %961 = vmatprep.subr.mxu0 0.0
    %962 = vmatpush1.xpose.msra.mxu0 0.0
    %963 = vmatprep.subr.mxu0 0.0
    %964 = vmatpush1.xpose.msra.mxu0 0.0
    %965 = vmatprep.subr.mxu0 0.0
    %966 = vmatpush1.xpose.msra.mxu0 0.0
    %967 = vmatprep.subr.mxu0 0.0
    %968 = vmatpush1.xpose.msra.mxu0 0.0
    %969 = vmatprep.subr.mxu0 0.0
    %970 = vmatpush1.xpose.msra.mxu0 0.0
    %971 = vmatprep.subr.mxu0 0.0
    %972 = vmatpush1.xpose.msra.mxu0 0.0
    %973 = vmatprep.subr.mxu0 0.0
    %974 = vmatpush1.xpose.msra.mxu0 0.0
    %975 = vmatprep.subr.mxu0 0.0
    %976 = vmatpush1.xpose.msra.mxu0 0.0
    %977 = vmatprep.subr.mxu0 0.0
    %978 = vmatpush1.xpose.msra.mxu0 0.0
    %979 = vmatprep.subr.mxu0 0.0
    %980 = vmatpush1.xpose.msra.mxu0 0.0
    %981 = vmatprep.subr.mxu0 0.0
    %982 = vmatpush1.xpose.msra.mxu0 0.0
    %983 = vmatprep.subr.mxu0 0.0
    %984 = vmatpush1.xpose.msra.mxu0 0.0
    %985 = vmatprep.mubr.f32.mxu0 0.0
    %986 = vmatmul.mubr.f32.gmra.mrb[0].mxu0 %v919
    %v987 = vpop.f32.mrb[0].mxu0
    %v988 = vadd.f32 0.0, %v987
    %v989 = vpop.f32.mrb[0].mxu0
    %990 = vdwg.mxu0
    %v991 = vsub.f32 %v915, %v988
    %v992 = vmul.f32 %v991, %v991
    %v993 = vadd.f32 %v540, %v992
    %v994 = vmul.f32 %v57, 0.2
    %v995 = vsel %vm61, %v994, -inf
    %996 = vmax.xlane.f32.xlu0 %v995
    %v997 = vpop.xlane.xlu0 %996
    %v998 = vsub.f32 %v994, %v997
    %v999 = vmul.f32 %v998, 1.442695
    %v1000 = vpow.pop %v999
    %v1001 = vsel %vm61, %v1000, 0.0
    %1002 = vadd.xlane.f32.xlu0 %v1001
    %v1003 = vpop.xlane.xlu0 %1002
    %v1004 = vrcp.pop %v1003
    %v1005 = vmul.f32 %v1000, %v1004
    %v1006 = vlog2.pop %v1003
    %v1007 = vmul.f32 %v1006, 0.6931472
    %v1008 = vsub.f32 %v998, %v1007
    %v1009 = vmul.f32 %v58, 0.2
    %v1010 = vsel %vm61, %v1009, -inf
    %1011 = vmax.xlane.f32.xlu0 %v1010
    %v1012 = vpop.xlane.xlu0 %1011
    %v1013 = vsub.f32 %v1009, %v1012
    %v1014 = vmul.f32 %v1013, 1.442695
    %v1015 = vpow.pop %v1014
    %v1016 = vsel %vm61, %v1015, 0.0
    %1017 = vadd.xlane.f32.xlu0 %v1016
    %v1018 = vpop.xlane.xlu0 %1017
    %v1019 = vrcp.pop %v1018
    %v1020 = vmul.f32 %v1015, %v1019
    %v1021 = vlog2.pop %v1018
    %v1022 = vmul.f32 %v1021, 0.6931472
    %v1023 = vsub.f32 %v1013, %v1022
    %v1024 = vsub.f32 %v1023, %v1008
    %v1025 = vmul.f32 %v1020, %v1024
    %v1026 = vmul.f32 %v1025, 25.0
    %v1027 = vadd.f32 %v574, %v1026
    %1028 = vxpose.xlu0.b32.start [1/16] %v1020, 128
    %1029 = vxpose.xlu0.b32.cont [2/16] 0.0, 128
    %1030 = vxpose.xlu0.b32.cont [3/16] 0.0, 128
    %1031 = vxpose.xlu0.b32.cont [4/16] 0.0, 128
    %1032 = vxpose.xlu0.b32.cont [5/16] 0.0, 128
    %1033 = vxpose.xlu0.b32.cont [6/16] 0.0, 128
    %1034 = vxpose.xlu0.b32.cont [7/16] 0.0, 128
    %1035 = vxpose.xlu0.b32.cont [8/16] 0.0, 128
    %1036 = vxpose.xlu0.b32.cont [9/16] 0.0, 128
    %1037 = vxpose.xlu0.b32.cont [10/16] 0.0, 128
    %1038 = vxpose.xlu0.b32.cont [11/16] 0.0, 128
    %1039 = vxpose.xlu0.b32.cont [12/16] 0.0, 128
    %1040 = vxpose.xlu0.b32.cont [13/16] 0.0, 128
    %1041 = vxpose.xlu0.b32.cont [14/16] 0.0, 128
    %1042 = vxpose.xlu0.b32.cont [15/16] 0.0, 128
    %1043 = vxpose.xlu0.b32.end [16/16] 0.0, 128
    %v1044 = vpop.trf.xlu0
    %v1045 = vpop.trf.xlu0
    %v1046 = vpop.trf.xlu0
    %v1047 = vpop.trf.xlu0
    %v1048 = vpop.trf.xlu0
    %v1049 = vpop.trf.xlu0
    %v1050 = vpop.trf.xlu0
    %v1051 = vpop.trf.xlu0
    %v1052 = vpop.trf.xlu0
    %v1053 = vpop.trf.xlu0
    %v1054 = vpop.trf.xlu0
    %v1055 = vpop.trf.xlu0
    %v1056 = vpop.trf.xlu0
    %v1057 = vpop.trf.xlu0
    %v1058 = vpop.trf.xlu0
    %v1059 = vpop.trf.xlu0
    %v1061 = vsel %vm153, %v1044, 0
    %v1064 = vsel %vm153, %v1045, 0
    %v1067 = vsel %vm153, %v1046, 0
    %v1070 = vsel %vm153, %v1047, 0
    %1072 = vmatprep.subr.mxu0 0.0
    %1073 = vmatpush1.msra.mxu0 %v1020
    %1074 = vmatprep.subr.mxu0 0.0
    %1075 = vmatpush1.msra.mxu0 0.0
    %1076 = vmatprep.subr.mxu0 0.0
    %1077 = vmatpush1.msra.mxu0 0.0
    %1078 = vmatprep.subr.mxu0 0.0
    %1079 = vmatpush1.msra.mxu0 0.0
    %1080 = vmatprep.subr.mxu0 0.0
    %1081 = vmatpush1.msra.mxu0 0.0
    %1082 = vmatprep.subr.mxu0 0.0
    %1083 = vmatpush1.msra.mxu0 0.0
    %1084 = vmatprep.subr.mxu0 0.0
    %1085 = vmatpush1.msra.mxu0 0.0
    %1086 = vmatprep.subr.mxu0 0.0
    %1087 = vmatpush1.msra.mxu0 0.0
    %1088 = vmatprep.subr.mxu0 0.0
    %1089 = vmatpush1.msra.mxu0 0.0
    %1090 = vmatprep.subr.mxu0 0.0
    %1091 = vmatpush1.msra.mxu0 0.0
    %1092 = vmatprep.subr.mxu0 0.0
    %1093 = vmatpush1.msra.mxu0 0.0
    %1094 = vmatprep.subr.mxu0 0.0
    %1095 = vmatpush1.msra.mxu0 0.0
    %1096 = vmatprep.subr.mxu0 0.0
    %1097 = vmatpush1.msra.mxu0 0.0
    %1098 = vmatprep.subr.mxu0 0.0
    %1099 = vmatpush1.msra.mxu0 0.0
    %1100 = vmatprep.subr.mxu0 0.0
    %1101 = vmatpush1.msra.mxu0 0.0
    %1102 = vmatprep.subr.mxu0 0.0
    %1103 = vmatpush1.msra.mxu0 0.0
    %1104 = vmatprep.subr.mxu0 0.0
    %1105 = vmatpush1.msra.mxu0 0.0
    %1106 = vmatprep.subr.mxu0 0.0
    %1107 = vmatpush1.msra.mxu0 0.0
    %1108 = vmatprep.subr.mxu0 0.0
    %1109 = vmatpush1.msra.mxu0 0.0
    %1110 = vmatprep.subr.mxu0 0.0
    %1111 = vmatpush1.msra.mxu0 0.0
    %1112 = vmatprep.subr.mxu0 0.0
    %1113 = vmatpush1.msra.mxu0 0.0
    %1114 = vmatprep.subr.mxu0 0.0
    %1115 = vmatpush1.msra.mxu0 0.0
    %1116 = vmatprep.subr.mxu0 0.0
    %1117 = vmatpush1.msra.mxu0 0.0
    %1118 = vmatprep.subr.mxu0 0.0
    %1119 = vmatpush1.msra.mxu0 0.0
    %1120 = vmatprep.subr.mxu0 0.0
    %1121 = vmatpush1.msra.mxu0 0.0
    %1122 = vmatprep.subr.mxu0 0.0
    %1123 = vmatpush1.msra.mxu0 0.0
    %1124 = vmatprep.subr.mxu0 0.0
    %1125 = vmatpush1.msra.mxu0 0.0
    %1126 = vmatprep.subr.mxu0 0.0
    %1127 = vmatpush1.msra.mxu0 0.0
    %1128 = vmatprep.subr.mxu0 0.0
    %1129 = vmatpush1.msra.mxu0 0.0
    %1130 = vmatprep.subr.mxu0 0.0
    %1131 = vmatpush1.msra.mxu0 0.0
    %1132 = vmatprep.subr.mxu0 0.0
    %1133 = vmatpush1.msra.mxu0 0.0
    %1134 = vmatprep.subr.mxu0 0.0
    %1135 = vmatpush1.msra.mxu0 0.0
    %1136 = vmatprep.mubr.f32.mxu0 0.0
    %1137 = vmatmul.mubr.f32.gmra.mrb[0].mxu0 %v1061
    %v1138 = vpop.f32.mrb[0].mxu0
    %v1139 = vadd.f32 0.0, %v1138
    %v1140 = vpop.f32.mrb[0].mxu0
    %1141 = vmatprep.mubr.f32.mxu0 0.0
    %1142 = vmatmul.mubr.f32.gmra.mrb[0].mxu0 %v1064
    %v1143 = vpop.f32.mrb[0].mxu0
    %v1144 = vadd.f32 0.0, %v1143
    %v1145 = vpop.f32.mrb[0].mxu0
    %1146 = vmatprep.mubr.f32.mxu0 0.0
    %1147 = vmatmul.mubr.f32.gmra.mrb[0].mxu0 %v1067
    %v1148 = vpop.f32.mrb[0].mxu0
    %v1149 = vadd.f32 0.0, %v1148
    %v1150 = vpop.f32.mrb[0].mxu0
    %1151 = vmatprep.mubr.f32.mxu0 0.0
    %1152 = vmatmul.mubr.f32.gmra.mrb[0].mxu0 %v1070
    %v1153 = vpop.f32.mrb[0].mxu0
    %v1154 = vadd.f32 0.0, %v1153
    %v1155 = vpop.f32.mrb[0].mxu0
    %1156 = vdwg.mxu0
    %1157 = vxpose.xlu0.b32.start [1/16] %v1005, 128
    %1158 = vxpose.xlu0.b32.cont [2/16] 0.0, 128
    %1159 = vxpose.xlu0.b32.cont [3/16] 0.0, 128
    %1160 = vxpose.xlu0.b32.cont [4/16] 0.0, 128
    %1161 = vxpose.xlu0.b32.cont [5/16] 0.0, 128
    %1162 = vxpose.xlu0.b32.cont [6/16] 0.0, 128
    %1163 = vxpose.xlu0.b32.cont [7/16] 0.0, 128
    %1164 = vxpose.xlu0.b32.cont [8/16] 0.0, 128
    %1165 = vxpose.xlu0.b32.cont [9/16] 0.0, 128
    %1166 = vxpose.xlu0.b32.cont [10/16] 0.0, 128
    %1167 = vxpose.xlu0.b32.cont [11/16] 0.0, 128
    %1168 = vxpose.xlu0.b32.cont [12/16] 0.0, 128
    %1169 = vxpose.xlu0.b32.cont [13/16] 0.0, 128
    %1170 = vxpose.xlu0.b32.cont [14/16] 0.0, 128
    %1171 = vxpose.xlu0.b32.cont [15/16] 0.0, 128
    %1172 = vxpose.xlu0.b32.end [16/16] 0.0, 128
    %v1173 = vpop.trf.xlu0
    %v1174 = vpop.trf.xlu0
    %v1175 = vpop.trf.xlu0
    %v1176 = vpop.trf.xlu0
    %v1177 = vpop.trf.xlu0
    %v1178 = vpop.trf.xlu0
    %v1179 = vpop.trf.xlu0
    %v1180 = vpop.trf.xlu0
    %v1181 = vpop.trf.xlu0
    %v1182 = vpop.trf.xlu0
    %v1183 = vpop.trf.xlu0
    %v1184 = vpop.trf.xlu0
    %v1185 = vpop.trf.xlu0
    %v1186 = vpop.trf.xlu0
    %v1187 = vpop.trf.xlu0
    %v1188 = vpop.trf.xlu0
    %v1190 = vsel %vm153, %v1173, 0
    %v1193 = vsel %vm153, %v1174, 0
    %v1196 = vsel %vm153, %v1175, 0
    %v1199 = vsel %vm153, %v1176, 0
    %1201 = vmatprep.subr.mxu0 0.0
    %1202 = vmatpush1.msra.mxu0 %v1005
    %1203 = vmatprep.subr.mxu0 0.0
    %1204 = vmatpush1.msra.mxu0 0.0
    %1205 = vmatprep.subr.mxu0 0.0
    %1206 = vmatpush1.msra.mxu0 0.0
    %1207 = vmatprep.subr.mxu0 0.0
    %1208 = vmatpush1.msra.mxu0 0.0
    %1209 = vmatprep.subr.mxu0 0.0
    %1210 = vmatpush1.msra.mxu0 0.0
    %1211 = vmatprep.subr.mxu0 0.0
    %1212 = vmatpush1.msra.mxu0 0.0
    %1213 = vmatprep.subr.mxu0 0.0
    %1214 = vmatpush1.msra.mxu0 0.0
    %1215 = vmatprep.subr.mxu0 0.0
    %1216 = vmatpush1.msra.mxu0 0.0
    %1217 = vmatprep.subr.mxu0 0.0
    %1218 = vmatpush1.msra.mxu0 0.0
    %1219 = vmatprep.subr.mxu0 0.0
    %1220 = vmatpush1.msra.mxu0 0.0
    %1221 = vmatprep.subr.mxu0 0.0
    %1222 = vmatpush1.msra.mxu0 0.0
    %1223 = vmatprep.subr.mxu0 0.0
    %1224 = vmatpush1.msra.mxu0 0.0
    %1225 = vmatprep.subr.mxu0 0.0
    %1226 = vmatpush1.msra.mxu0 0.0
    %1227 = vmatprep.subr.mxu0 0.0
    %1228 = vmatpush1.msra.mxu0 0.0
    %1229 = vmatprep.subr.mxu0 0.0
    %1230 = vmatpush1.msra.mxu0 0.0
    %1231 = vmatprep.subr.mxu0 0.0
    %1232 = vmatpush1.msra.mxu0 0.0
    %1233 = vmatprep.subr.mxu0 0.0
    %1234 = vmatpush1.msra.mxu0 0.0
    %1235 = vmatprep.subr.mxu0 0.0
    %1236 = vmatpush1.msra.mxu0 0.0
    %1237 = vmatprep.subr.mxu0 0.0
    %1238 = vmatpush1.msra.mxu0 0.0
    %1239 = vmatprep.subr.mxu0 0.0
    %1240 = vmatpush1.msra.mxu0 0.0
    %1241 = vmatprep.subr.mxu0 0.0
    %1242 = vmatpush1.msra.mxu0 0.0
    %1243 = vmatprep.subr.mxu0 0.0
    %1244 = vmatpush1.msra.mxu0 0.0
    %1245 = vmatprep.subr.mxu0 0.0
    %1246 = vmatpush1.msra.mxu0 0.0
    %1247 = vmatprep.subr.mxu0 0.0
    %1248 = vmatpush1.msra.mxu0 0.0
    %1249 = vmatprep.subr.mxu0 0.0
    %1250 = vmatpush1.msra.mxu0 0.0
    %1251 = vmatprep.subr.mxu0 0.0
    %1252 = vmatpush1.msra.mxu0 0.0
    %1253 = vmatprep.subr.mxu0 0.0
    %1254 = vmatpush1.msra.mxu0 0.0
    %1255 = vmatprep.subr.mxu0 0.0
    %1256 = vmatpush1.msra.mxu0 0.0
    %1257 = vmatprep.subr.mxu0 0.0
    %1258 = vmatpush1.msra.mxu0 0.0
    %1259 = vmatprep.subr.mxu0 0.0
    %1260 = vmatpush1.msra.mxu0 0.0
    %1261 = vmatprep.subr.mxu0 0.0
    %1262 = vmatpush1.msra.mxu0 0.0
    %1263 = vmatprep.subr.mxu0 0.0
    %1264 = vmatpush1.msra.mxu0 0.0
    %1265 = vmatprep.mubr.f32.mxu0 0.0
    %1266 = vmatmul.mubr.f32.gmra.mrb[0].mxu0 %v1190
    %v1267 = vpop.f32.mrb[0].mxu0
    %v1268 = vadd.f32 0.0, %v1267
    %v1269 = vpop.f32.mrb[0].mxu0
    %1270 = vmatprep.mubr.f32.mxu0 0.0
    %1271 = vmatmul.mubr.f32.gmra.mrb[0].mxu0 %v1193
    %v1272 = vpop.f32.mrb[0].mxu0
    %v1273 = vadd.f32 0.0, %v1272
    %v1274 = vpop.f32.mrb[0].mxu0
    %1275 = vmatprep.mubr.f32.mxu0 0.0
    %1276 = vmatmul.mubr.f32.gmra.mrb[0].mxu0 %v1196
    %v1277 = vpop.f32.mrb[0].mxu0
    %v1278 = vadd.f32 0.0, %v1277
    %v1279 = vpop.f32.mrb[0].mxu0
    %1280 = vmatprep.mubr.f32.mxu0 0.0
    %1281 = vmatmul.mubr.f32.gmra.mrb[0].mxu0 %v1199
    %v1282 = vpop.f32.mrb[0].mxu0
    %v1283 = vadd.f32 0.0, %v1282
    %v1284 = vpop.f32.mrb[0].mxu0
    %1285 = vdwg.mxu0
    %v1286 = vsub.f32 %v1139, %v1268
    %v1287 = vsub.f32 %v1144, %v1273
    %v1288 = vsub.f32 %v1149, %v1278
    %v1289 = vsub.f32 %v1154, %v1283
    %v1290 = vmul.f32 %v1286, %v1286
    %v1291 = vmul.f32 %v1287, %v1287
    %v1292 = vmul.f32 %v1288, %v1288
    %v1293 = vmul.f32 %v1289, %v1289
    %v1294 = vadd.f32 %v841, %v1290
    %v1295 = vadd.f32 %v842, %v1291
    %v1296 = vadd.f32 %v843, %v1292
    %v1297 = vadd.f32 %v844, %v1293
    %v1299 = vsel %vm61, %v1020, 0
    %1301 = vmatprep.subr.mxu0 0.0
    %1302 = vmatpush1.xpose.msra.mxu0 %v1299
    %1303 = vmatprep.subr.mxu0 0.0
    %1304 = vmatpush1.xpose.msra.mxu0 0.0
    %1305 = vmatprep.subr.mxu0 0.0
    %1306 = vmatpush1.xpose.msra.mxu0 0.0
    %1307 = vmatprep.subr.mxu0 0.0
    %1308 = vmatpush1.xpose.msra.mxu0 0.0
    %1309 = vmatprep.subr.mxu0 0.0
    %1310 = vmatpush1.xpose.msra.mxu0 0.0
    %1311 = vmatprep.subr.mxu0 0.0
    %1312 = vmatpush1.xpose.msra.mxu0 0.0
    %1313 = vmatprep.subr.mxu0 0.0
    %1314 = vmatpush1.xpose.msra.mxu0 0.0
    %1315 = vmatprep.subr.mxu0 0.0
    %1316 = vmatpush1.xpose.msra.mxu0 0.0
    %1317 = vmatprep.subr.mxu0 0.0
    %1318 = vmatpush1.xpose.msra.mxu0 0.0
    %1319 = vmatprep.subr.mxu0 0.0
    %1320 = vmatpush1.xpose.msra.mxu0 0.0
    %1321 = vmatprep.subr.mxu0 0.0
    %1322 = vmatpush1.xpose.msra.mxu0 0.0
    %1323 = vmatprep.subr.mxu0 0.0
    %1324 = vmatpush1.xpose.msra.mxu0 0.0
    %1325 = vmatprep.subr.mxu0 0.0
    %1326 = vmatpush1.xpose.msra.mxu0 0.0
    %1327 = vmatprep.subr.mxu0 0.0
    %1328 = vmatpush1.xpose.msra.mxu0 0.0
    %1329 = vmatprep.subr.mxu0 0.0
    %1330 = vmatpush1.xpose.msra.mxu0 0.0
    %1331 = vmatprep.subr.mxu0 0.0
    %1332 = vmatpush1.xpose.msra.mxu0 0.0
    %1333 = vmatprep.subr.mxu0 0.0
    %1334 = vmatpush1.xpose.msra.mxu0 0.0
    %1335 = vmatprep.subr.mxu0 0.0
    %1336 = vmatpush1.xpose.msra.mxu0 0.0
    %1337 = vmatprep.subr.mxu0 0.0
    %1338 = vmatpush1.xpose.msra.mxu0 0.0
    %1339 = vmatprep.subr.mxu0 0.0
    %1340 = vmatpush1.xpose.msra.mxu0 0.0
    %1341 = vmatprep.subr.mxu0 0.0
    %1342 = vmatpush1.xpose.msra.mxu0 0.0
    %1343 = vmatprep.subr.mxu0 0.0
    %1344 = vmatpush1.xpose.msra.mxu0 0.0
    %1345 = vmatprep.subr.mxu0 0.0
    %1346 = vmatpush1.xpose.msra.mxu0 0.0
    %1347 = vmatprep.subr.mxu0 0.0
    %1348 = vmatpush1.xpose.msra.mxu0 0.0
    %1349 = vmatprep.subr.mxu0 0.0
    %1350 = vmatpush1.xpose.msra.mxu0 0.0
    %1351 = vmatprep.subr.mxu0 0.0
    %1352 = vmatpush1.xpose.msra.mxu0 0.0
    %1353 = vmatprep.subr.mxu0 0.0
    %1354 = vmatpush1.xpose.msra.mxu0 0.0
    %1355 = vmatprep.subr.mxu0 0.0
    %1356 = vmatpush1.xpose.msra.mxu0 0.0
    %1357 = vmatprep.subr.mxu0 0.0
    %1358 = vmatpush1.xpose.msra.mxu0 0.0
    %1359 = vmatprep.subr.mxu0 0.0
    %1360 = vmatpush1.xpose.msra.mxu0 0.0
    %1361 = vmatprep.subr.mxu0 0.0
    %1362 = vmatpush1.xpose.msra.mxu0 0.0
    %1363 = vmatprep.subr.mxu0 0.0
    %1364 = vmatpush1.xpose.msra.mxu0 0.0
    %1365 = vmatprep.mubr.f32.mxu0 0.0
    %1366 = vmatmul.mubr.f32.gmra.mrb[0].mxu0 %v1299
    %v1367 = vpop.f32.mrb[0].mxu0
    %v1368 = vadd.f32 0.0, %v1367
    %v1369 = vpop.f32.mrb[0].mxu0
    %1370 = vdwg.mxu0
    %v1372 = vsel %vm61, %v1005, 0
    %1374 = vmatprep.subr.mxu0 0.0
    %1375 = vmatpush1.xpose.msra.mxu0 %v1372
    %1376 = vmatprep.subr.mxu0 0.0
    %1377 = vmatpush1.xpose.msra.mxu0 0.0
    %1378 = vmatprep.subr.mxu0 0.0
    %1379 = vmatpush1.xpose.msra.mxu0 0.0
    %1380 = vmatprep.subr.mxu0 0.0
    %1381 = vmatpush1.xpose.msra.mxu0 0.0
    %1382 = vmatprep.subr.mxu0 0.0
    %1383 = vmatpush1.xpose.msra.mxu0 0.0
    %1384 = vmatprep.subr.mxu0 0.0
    %1385 = vmatpush1.xpose.msra.mxu0 0.0
    %1386 = vmatprep.subr.mxu0 0.0
    %1387 = vmatpush1.xpose.msra.mxu0 0.0
    %1388 = vmatprep.subr.mxu0 0.0
    %1389 = vmatpush1.xpose.msra.mxu0 0.0
    %1390 = vmatprep.subr.mxu0 0.0
    %1391 = vmatpush1.xpose.msra.mxu0 0.0
    %1392 = vmatprep.subr.mxu0 0.0
    %1393 = vmatpush1.xpose.msra.mxu0 0.0
    %1394 = vmatprep.subr.mxu0 0.0
    %1395 = vmatpush1.xpose.msra.mxu0 0.0
    %1396 = vmatprep.subr.mxu0 0.0
    %1397 = vmatpush1.xpose.msra.mxu0 0.0
    %1398 = vmatprep.subr.mxu0 0.0
    %1399 = vmatpush1.xpose.msra.mxu0 0.0
    %1400 = vmatprep.subr.mxu0 0.0
    %1401 = vmatpush1.xpose.msra.mxu0 0.0
    %1402 = vmatprep.subr.mxu0 0.0
    %1403 = vmatpush1.xpose.msra.mxu0 0.0
    %1404 = vmatprep.subr.mxu0 0.0
    %1405 = vmatpush1.xpose.msra.mxu0 0.0
    %1406 = vmatprep.subr.mxu0 0.0
    %1407 = vmatpush1.xpose.msra.mxu0 0.0
    %1408 = vmatprep.subr.mxu0 0.0
    %1409 = vmatpush1.xpose.msra.mxu0 0.0
    %1410 = vmatprep.subr.mxu0 0.0
    %1411 = vmatpush1.xpose.msra.mxu0 0.0
    %1412 = vmatprep.subr.mxu0 0.0
    %1413 = vmatpush1.xpose.msra.mxu0 0.0
    %1414 = vmatprep.subr.mxu0 0.0
    %1415 = vmatpush1.xpose.msra.mxu0 0.0
    %1416 = vmatprep.subr.mxu0 0.0
    %1417 = vmatpush1.xpose.msra.mxu0 0.0
    %1418 = vmatprep.subr.mxu0 0.0
    %1419 = vmatpush1.xpose.msra.mxu0 0.0
    %1420 = vmatprep.subr.mxu0 0.0
    %1421 = vmatpush1.xpose.msra.mxu0 0.0
    %1422 = vmatprep.subr.mxu0 0.0
    %1423 = vmatpush1.xpose.msra.mxu0 0.0
    %1424 = vmatprep.subr.mxu0 0.0
    %1425 = vmatpush1.xpose.msra.mxu0 0.0
    %1426 = vmatprep.subr.mxu0 0.0
    %1427 = vmatpush1.xpose.msra.mxu0 0.0
    %1428 = vmatprep.subr.mxu0 0.0
    %1429 = vmatpush1.xpose.msra.mxu0 0.0
    %1430 = vmatprep.subr.mxu0 0.0
    %1431 = vmatpush1.xpose.msra.mxu0 0.0
    %1432 = vmatprep.subr.mxu0 0.0
    %1433 = vmatpush1.xpose.msra.mxu0 0.0
    %1434 = vmatprep.subr.mxu0 0.0
    %1435 = vmatpush1.xpose.msra.mxu0 0.0
    %1436 = vmatprep.subr.mxu0 0.0
    %1437 = vmatpush1.xpose.msra.mxu0 0.0
    %1438 = vmatprep.mubr.f32.mxu0 0.0
    %1439 = vmatmul.mubr.f32.gmra.mrb[0].mxu0 %v1372
    %v1440 = vpop.f32.mrb[0].mxu0
    %v1441 = vadd.f32 0.0, %v1440
    %v1442 = vpop.f32.mrb[0].mxu0
    %1443 = vdwg.mxu0
    %v1444 = vsub.f32 %v1368, %v1441
    %v1445 = vmul.f32 %v1444, %v1444
    %v1446 = vadd.f32 %v993, %v1445
    %v1447 = vmul.f32 %v57, 0.5
    %v1448 = vsel %vm61, %v1447, -inf
    %1449 = vmax.xlane.f32.xlu0 %v1448
    %v1450 = vpop.xlane.xlu0 %1449
    %v1451 = vsub.f32 %v1447, %v1450
    %v1452 = vmul.f32 %v1451, 1.442695
    %v1453 = vpow.pop %v1452
    %v1454 = vsel %vm61, %v1453, 0.0
    %1455 = vadd.xlane.f32.xlu0 %v1454
    %v1456 = vpop.xlane.xlu0 %1455
    %v1457 = vrcp.pop %v1456
    %v1458 = vmul.f32 %v1453, %v1457
    %v1459 = vlog2.pop %v1456
    %v1460 = vmul.f32 %v1459, 0.6931472
    %v1461 = vsub.f32 %v1451, %v1460
    %v1462 = vmul.f32 %v58, 0.5
    %v1463 = vsel %vm61, %v1462, -inf
    %1464 = vmax.xlane.f32.xlu0 %v1463
    %v1465 = vpop.xlane.xlu0 %1464
    %v1466 = vsub.f32 %v1462, %v1465
    %v1467 = vmul.f32 %v1466, 1.442695
    %v1468 = vpow.pop %v1467
    %v1469 = vsel %vm61, %v1468, 0.0
    %1470 = vadd.xlane.f32.xlu0 %v1469
    %v1471 = vpop.xlane.xlu0 %1470
    %v1472 = vrcp.pop %v1471
    %v1473 = vmul.f32 %v1468, %v1472
    %v1474 = vlog2.pop %v1471
    %v1475 = vmul.f32 %v1474, 0.6931472
    %v1476 = vsub.f32 %v1466, %v1475
    %v1477 = vsub.f32 %v1476, %v1461
    %v1478 = vmul.f32 %v1473, %v1477
    %v1479 = vmul.f32 %v1478, 4.0
    %v1480 = vadd.f32 %v1027, %v1479
    %v1481 = vadd.f32 %v1479, 0.0
    %1482 = vxpose.xlu0.b32.start [1/16] %v1473, 128
    %1483 = vxpose.xlu0.b32.cont [2/16] 0.0, 128
    %1484 = vxpose.xlu0.b32.cont [3/16] 0.0, 128
    %1485 = vxpose.xlu0.b32.cont [4/16] 0.0, 128
    %1486 = vxpose.xlu0.b32.cont [5/16] 0.0, 128
    %1487 = vxpose.xlu0.b32.cont [6/16] 0.0, 128
    %1488 = vxpose.xlu0.b32.cont [7/16] 0.0, 128
    %1489 = vxpose.xlu0.b32.cont [8/16] 0.0, 128
    %1490 = vxpose.xlu0.b32.cont [9/16] 0.0, 128
    %1491 = vxpose.xlu0.b32.cont [10/16] 0.0, 128
    %1492 = vxpose.xlu0.b32.cont [11/16] 0.0, 128
    %1493 = vxpose.xlu0.b32.cont [12/16] 0.0, 128
    %1494 = vxpose.xlu0.b32.cont [13/16] 0.0, 128
    %1495 = vxpose.xlu0.b32.cont [14/16] 0.0, 128
    %1496 = vxpose.xlu0.b32.cont [15/16] 0.0, 128
    %1497 = vxpose.xlu0.b32.end [16/16] 0.0, 128
    %v1498 = vpop.trf.xlu0
    %v1499 = vpop.trf.xlu0
    %v1500 = vpop.trf.xlu0
    %v1501 = vpop.trf.xlu0
    %v1502 = vpop.trf.xlu0
    %v1503 = vpop.trf.xlu0
    %v1504 = vpop.trf.xlu0
    %v1505 = vpop.trf.xlu0
    %v1506 = vpop.trf.xlu0
    %v1507 = vpop.trf.xlu0
    %v1508 = vpop.trf.xlu0
    %v1509 = vpop.trf.xlu0
    %v1510 = vpop.trf.xlu0
    %v1511 = vpop.trf.xlu0
    %v1512 = vpop.trf.xlu0
    %v1513 = vpop.trf.xlu0
    %v1515 = vsel %vm153, %v1498, 0
    %v1518 = vsel %vm153, %v1499, 0
    %v1521 = vsel %vm153, %v1500, 0
    %v1524 = vsel %vm153, %v1501, 0
    %1526 = vmatprep.subr.mxu0 0.0
    %1527 = vmatpush1.msra.mxu0 %v1473
    %1528 = vmatprep.subr.mxu0 0.0
    %1529 = vmatpush1.msra.mxu0 0.0
    %1530 = vmatprep.subr.mxu0 0.0
    %1531 = vmatpush1.msra.mxu0 0.0
    %1532 = vmatprep.subr.mxu0 0.0
    %1533 = vmatpush1.msra.mxu0 0.0
    %1534 = vmatprep.subr.mxu0 0.0
    %1535 = vmatpush1.msra.mxu0 0.0
    %1536 = vmatprep.subr.mxu0 0.0
    %1537 = vmatpush1.msra.mxu0 0.0
    %1538 = vmatprep.subr.mxu0 0.0
    %1539 = vmatpush1.msra.mxu0 0.0
    %1540 = vmatprep.subr.mxu0 0.0
    %1541 = vmatpush1.msra.mxu0 0.0
    %1542 = vmatprep.subr.mxu0 0.0
    %1543 = vmatpush1.msra.mxu0 0.0
    %1544 = vmatprep.subr.mxu0 0.0
    %1545 = vmatpush1.msra.mxu0 0.0
    %1546 = vmatprep.subr.mxu0 0.0
    %1547 = vmatpush1.msra.mxu0 0.0
    %1548 = vmatprep.subr.mxu0 0.0
    %1549 = vmatpush1.msra.mxu0 0.0
    %1550 = vmatprep.subr.mxu0 0.0
    %1551 = vmatpush1.msra.mxu0 0.0
    %1552 = vmatprep.subr.mxu0 0.0
    %1553 = vmatpush1.msra.mxu0 0.0
    %1554 = vmatprep.subr.mxu0 0.0
    %1555 = vmatpush1.msra.mxu0 0.0
    %1556 = vmatprep.subr.mxu0 0.0
    %1557 = vmatpush1.msra.mxu0 0.0
    %1558 = vmatprep.subr.mxu0 0.0
    %1559 = vmatpush1.msra.mxu0 0.0
    %1560 = vmatprep.subr.mxu0 0.0
    %1561 = vmatpush1.msra.mxu0 0.0
    %1562 = vmatprep.subr.mxu0 0.0
    %1563 = vmatpush1.msra.mxu0 0.0
    %1564 = vmatprep.subr.mxu0 0.0
    %1565 = vmatpush1.msra.mxu0 0.0
    %1566 = vmatprep.subr.mxu0 0.0
    %1567 = vmatpush1.msra.mxu0 0.0
    %1568 = vmatprep.subr.mxu0 0.0
    %1569 = vmatpush1.msra.mxu0 0.0
    %1570 = vmatprep.subr.mxu0 0.0
    %1571 = vmatpush1.msra.mxu0 0.0
    %1572 = vmatprep.subr.mxu0 0.0
    %1573 = vmatpush1.msra.mxu0 0.0
    %1574 = vmatprep.subr.mxu0 0.0
    %1575 = vmatpush1.msra.mxu0 0.0
    %1576 = vmatprep.subr.mxu0 0.0
    %1577 = vmatpush1.msra.mxu0 0.0
    %1578 = vmatprep.subr.mxu0 0.0
    %1579 = vmatpush1.msra.mxu0 0.0
    %1580 = vmatprep.subr.mxu0 0.0
    %1581 = vmatpush1.msra.mxu0 0.0
    %1582 = vmatprep.subr.mxu0 0.0
    %1583 = vmatpush1.msra.mxu0 0.0
    %1584 = vmatprep.subr.mxu0 0.0
    %1585 = vmatpush1.msra.mxu0 0.0
    %1586 = vmatprep.subr.mxu0 0.0
    %1587 = vmatpush1.msra.mxu0 0.0
    %1588 = vmatprep.subr.mxu0 0.0
    %1589 = vmatpush1.msra.mxu0 0.0
    %1590 = vmatprep.mubr.f32.mxu0 0.0
    %1591 = vmatmul.mubr.f32.gmra.mrb[0].mxu0 %v1515
    %v1592 = vpop.f32.mrb[0].mxu0
    %v1593 = vadd.f32 0.0, %v1592
    %v1594 = vpop.f32.mrb[0].mxu0
    %1595 = vmatprep.mubr.f32.mxu0 0.0
    %1596 = vmatmul.mubr.f32.gmra.mrb[0].mxu0 %v1518
    %v1597 = vpop.f32.mrb[0].mxu0
    %v1598 = vadd.f32 0.0, %v1597
    %v1599 = vpop.f32.mrb[0].mxu0
    %1600 = vmatprep.mubr.f32.mxu0 0.0
    %1601 = vmatmul.mubr.f32.gmra.mrb[0].mxu0 %v1521
    %v1602 = vpop.f32.mrb[0].mxu0
    %v1603 = vadd.f32 0.0, %v1602
    %v1604 = vpop.f32.mrb[0].mxu0
    %1605 = vmatprep.mubr.f32.mxu0 0.0
    %1606 = vmatmul.mubr.f32.gmra.mrb[0].mxu0 %v1524
    %v1607 = vpop.f32.mrb[0].mxu0
    %v1608 = vadd.f32 0.0, %v1607
    %v1609 = vpop.f32.mrb[0].mxu0
    %1610 = vdwg.mxu0
    %1611 = vxpose.xlu0.b32.start [1/16] %v1458, 128
    %1612 = vxpose.xlu0.b32.cont [2/16] 0.0, 128
    %1613 = vxpose.xlu0.b32.cont [3/16] 0.0, 128
    %1614 = vxpose.xlu0.b32.cont [4/16] 0.0, 128
    %1615 = vxpose.xlu0.b32.cont [5/16] 0.0, 128
    %1616 = vxpose.xlu0.b32.cont [6/16] 0.0, 128
    %1617 = vxpose.xlu0.b32.cont [7/16] 0.0, 128
    %1618 = vxpose.xlu0.b32.cont [8/16] 0.0, 128
    %1619 = vxpose.xlu0.b32.cont [9/16] 0.0, 128
    %1620 = vxpose.xlu0.b32.cont [10/16] 0.0, 128
    %1621 = vxpose.xlu0.b32.cont [11/16] 0.0, 128
    %1622 = vxpose.xlu0.b32.cont [12/16] 0.0, 128
    %1623 = vxpose.xlu0.b32.cont [13/16] 0.0, 128
    %1624 = vxpose.xlu0.b32.cont [14/16] 0.0, 128
    %1625 = vxpose.xlu0.b32.cont [15/16] 0.0, 128
    %1626 = vxpose.xlu0.b32.end [16/16] 0.0, 128
    %v1627 = vpop.trf.xlu0
    %v1628 = vpop.trf.xlu0
    %v1629 = vpop.trf.xlu0
    %v1630 = vpop.trf.xlu0
    %v1631 = vpop.trf.xlu0
    %v1632 = vpop.trf.xlu0
    %v1633 = vpop.trf.xlu0
    %v1634 = vpop.trf.xlu0
    %v1635 = vpop.trf.xlu0
    %v1636 = vpop.trf.xlu0
    %v1637 = vpop.trf.xlu0
    %v1638 = vpop.trf.xlu0
    %v1639 = vpop.trf.xlu0
    %v1640 = vpop.trf.xlu0
    %v1641 = vpop.trf.xlu0
    %v1642 = vpop.trf.xlu0
    %v1644 = vsel %vm153, %v1627, 0
    %v1647 = vsel %vm153, %v1628, 0
    %v1650 = vsel %vm153, %v1629, 0
    %v1653 = vsel %vm153, %v1630, 0
    %1655 = vmatprep.subr.mxu0 0.0
    %1656 = vmatpush1.msra.mxu0 %v1458
    %1657 = vmatprep.subr.mxu0 0.0
    %1658 = vmatpush1.msra.mxu0 0.0
    %1659 = vmatprep.subr.mxu0 0.0
    %1660 = vmatpush1.msra.mxu0 0.0
    %1661 = vmatprep.subr.mxu0 0.0
    %1662 = vmatpush1.msra.mxu0 0.0
    %1663 = vmatprep.subr.mxu0 0.0
    %1664 = vmatpush1.msra.mxu0 0.0
    %1665 = vmatprep.subr.mxu0 0.0
    %1666 = vmatpush1.msra.mxu0 0.0
    %1667 = vmatprep.subr.mxu0 0.0
    %1668 = vmatpush1.msra.mxu0 0.0
    %1669 = vmatprep.subr.mxu0 0.0
    %1670 = vmatpush1.msra.mxu0 0.0
    %1671 = vmatprep.subr.mxu0 0.0
    %1672 = vmatpush1.msra.mxu0 0.0
    %1673 = vmatprep.subr.mxu0 0.0
    %1674 = vmatpush1.msra.mxu0 0.0
    %1675 = vmatprep.subr.mxu0 0.0
    %1676 = vmatpush1.msra.mxu0 0.0
    %1677 = vmatprep.subr.mxu0 0.0
    %1678 = vmatpush1.msra.mxu0 0.0
    %1679 = vmatprep.subr.mxu0 0.0
    %1680 = vmatpush1.msra.mxu0 0.0
    %1681 = vmatprep.subr.mxu0 0.0
    %1682 = vmatpush1.msra.mxu0 0.0
    %1683 = vmatprep.subr.mxu0 0.0
    %1684 = vmatpush1.msra.mxu0 0.0
    %1685 = vmatprep.subr.mxu0 0.0
    %1686 = vmatpush1.msra.mxu0 0.0
    %1687 = vmatprep.subr.mxu0 0.0
    %1688 = vmatpush1.msra.mxu0 0.0
    %1689 = vmatprep.subr.mxu0 0.0
    %1690 = vmatpush1.msra.mxu0 0.0
    %1691 = vmatprep.subr.mxu0 0.0
    %1692 = vmatpush1.msra.mxu0 0.0
    %1693 = vmatprep.subr.mxu0 0.0
    %1694 = vmatpush1.msra.mxu0 0.0
    %1695 = vmatprep.subr.mxu0 0.0
    %1696 = vmatpush1.msra.mxu0 0.0
    %1697 = vmatprep.subr.mxu0 0.0
    %1698 = vmatpush1.msra.mxu0 0.0
    %1699 = vmatprep.subr.mxu0 0.0
    %1700 = vmatpush1.msra.mxu0 0.0
    %1701 = vmatprep.subr.mxu0 0.0
    %1702 = vmatpush1.msra.mxu0 0.0
    %1703 = vmatprep.subr.mxu0 0.0
    %1704 = vmatpush1.msra.mxu0 0.0
    %1705 = vmatprep.subr.mxu0 0.0
    %1706 = vmatpush1.msra.mxu0 0.0
    %1707 = vmatprep.subr.mxu0 0.0
    %1708 = vmatpush1.msra.mxu0 0.0
    %1709 = vmatprep.subr.mxu0 0.0
    %1710 = vmatpush1.msra.mxu0 0.0
    %1711 = vmatprep.subr.mxu0 0.0
    %1712 = vmatpush1.msra.mxu0 0.0
    %1713 = vmatprep.subr.mxu0 0.0
    %1714 = vmatpush1.msra.mxu0 0.0
    %1715 = vmatprep.subr.mxu0 0.0
    %1716 = vmatpush1.msra.mxu0 0.0
    %1717 = vmatprep.subr.mxu0 0.0
    %1718 = vmatpush1.msra.mxu0 0.0
    %1719 = vmatprep.mubr.f32.mxu0 0.0
    %1720 = vmatmul.mubr.f32.gmra.mrb[0].mxu0 %v1644
    %v1721 = vpop.f32.mrb[0].mxu0
    %v1722 = vadd.f32 0.0, %v1721
    %v1723 = vpop.f32.mrb[0].mxu0
    %1724 = vmatprep.mubr.f32.mxu0 0.0
    %1725 = vmatmul.mubr.f32.gmra.mrb[0].mxu0 %v1647
    %v1726 = vpop.f32.mrb[0].mxu0
    %v1727 = vadd.f32 0.0, %v1726
    %v1728 = vpop.f32.mrb[0].mxu0
    %1729 = vmatprep.mubr.f32.mxu0 0.0
    %1730 = vmatmul.mubr.f32.gmra.mrb[0].mxu0 %v1650
    %v1731 = vpop.f32.mrb[0].mxu0
    %v1732 = vadd.f32 0.0, %v1731
    %v1733 = vpop.f32.mrb[0].mxu0
    %1734 = vmatprep.mubr.f32.mxu0 0.0
    %1735 = vmatmul.mubr.f32.gmra.mrb[0].mxu0 %v1653
    %v1736 = vpop.f32.mrb[0].mxu0
    %v1737 = vadd.f32 0.0, %v1736
    %v1738 = vpop.f32.mrb[0].mxu0
    %1739 = vdwg.mxu0
    %v1740 = vsub.f32 %v1593, %v1722
    %v1741 = vsub.f32 %v1598, %v1727
    %v1742 = vsub.f32 %v1603, %v1732
    %v1743 = vsub.f32 %v1608, %v1737
    %v1744 = vmul.f32 %v1740, %v1740
    %v1745 = vmul.f32 %v1741, %v1741
    %v1746 = vmul.f32 %v1742, %v1742
    %v1747 = vmul.f32 %v1743, %v1743
    %v1748 = vadd.f32 %v1294, %v1744
    %v1749 = vadd.f32 %v1295, %v1745
    %v1750 = vadd.f32 %v1296, %v1746
    %v1751 = vadd.f32 %v1297, %v1747
    %v1753 = vsel %vm61, %v1473, 0
    %1755 = vmatprep.subr.mxu0 0.0
    %1756 = vmatpush1.xpose.msra.mxu0 %v1753
    %1757 = vmatprep.subr.mxu0 0.0
    %1758 = vmatpush1.xpose.msra.mxu0 0.0
    %1759 = vmatprep.subr.mxu0 0.0
    %1760 = vmatpush1.xpose.msra.mxu0 0.0
    %1761 = vmatprep.subr.mxu0 0.0
    %1762 = vmatpush1.xpose.msra.mxu0 0.0
    %1763 = vmatprep.subr.mxu0 0.0
    %1764 = vmatpush1.xpose.msra.mxu0 0.0
    %1765 = vmatprep.subr.mxu0 0.0
    %1766 = vmatpush1.xpose.msra.mxu0 0.0
    %1767 = vmatprep.subr.mxu0 0.0
    %1768 = vmatpush1.xpose.msra.mxu0 0.0
    %1769 = vmatprep.subr.mxu0 0.0
    %1770 = vmatpush1.xpose.msra.mxu0 0.0
    %1771 = vmatprep.subr.mxu0 0.0
    %1772 = vmatpush1.xpose.msra.mxu0 0.0
    %1773 = vmatprep.subr.mxu0 0.0
    %1774 = vmatpush1.xpose.msra.mxu0 0.0
    %1775 = vmatprep.subr.mxu0 0.0
    %1776 = vmatpush1.xpose.msra.mxu0 0.0
    %1777 = vmatprep.subr.mxu0 0.0
    %1778 = vmatpush1.xpose.msra.mxu0 0.0
    %1779 = vmatprep.subr.mxu0 0.0
    %1780 = vmatpush1.xpose.msra.mxu0 0.0
    %1781 = vmatprep.subr.mxu0 0.0
    %1782 = vmatpush1.xpose.msra.mxu0 0.0
    %1783 = vmatprep.subr.mxu0 0.0
    %1784 = vmatpush1.xpose.msra.mxu0 0.0
    %1785 = vmatprep.subr.mxu0 0.0
    %1786 = vmatpush1.xpose.msra.mxu0 0.0
    %1787 = vmatprep.subr.mxu0 0.0
    %1788 = vmatpush1.xpose.msra.mxu0 0.0
    %1789 = vmatprep.subr.mxu0 0.0
    %1790 = vmatpush1.xpose.msra.mxu0 0.0
    %1791 = vmatprep.subr.mxu0 0.0
    %1792 = vmatpush1.xpose.msra.mxu0 0.0
    %1793 = vmatprep.subr.mxu0 0.0
    %1794 = vmatpush1.xpose.msra.mxu0 0.0
    %1795 = vmatprep.subr.mxu0 0.0
    %1796 = vmatpush1.xpose.msra.mxu0 0.0
    %1797 = vmatprep.subr.mxu0 0.0
    %1798 = vmatpush1.xpose.msra.mxu0 0.0
    %1799 = vmatprep.subr.mxu0 0.0
    %1800 = vmatpush1.xpose.msra.mxu0 0.0
    %1801 = vmatprep.subr.mxu0 0.0
    %1802 = vmatpush1.xpose.msra.mxu0 0.0
    %1803 = vmatprep.subr.mxu0 0.0
    %1804 = vmatpush1.xpose.msra.mxu0 0.0
    %1805 = vmatprep.subr.mxu0 0.0
    %1806 = vmatpush1.xpose.msra.mxu0 0.0
    %1807 = vmatprep.subr.mxu0 0.0
    %1808 = vmatpush1.xpose.msra.mxu0 0.0
    %1809 = vmatprep.subr.mxu0 0.0
    %1810 = vmatpush1.xpose.msra.mxu0 0.0
    %1811 = vmatprep.subr.mxu0 0.0
    %1812 = vmatpush1.xpose.msra.mxu0 0.0
    %1813 = vmatprep.subr.mxu0 0.0
    %1814 = vmatpush1.xpose.msra.mxu0 0.0
    %1815 = vmatprep.subr.mxu0 0.0
    %1816 = vmatpush1.xpose.msra.mxu0 0.0
    %1817 = vmatprep.subr.mxu0 0.0
    %1818 = vmatpush1.xpose.msra.mxu0 0.0
    %1819 = vmatprep.mubr.f32.mxu0 0.0
    %1820 = vmatmul.mubr.f32.gmra.mrb[0].mxu0 %v1753
    %v1821 = vpop.f32.mrb[0].mxu0
    %v1822 = vadd.f32 0.0, %v1821
    %v1823 = vpop.f32.mrb[0].mxu0
    %1824 = vdwg.mxu0
    %v1826 = vsel %vm61, %v1458, 0
    %1828 = vmatprep.subr.mxu0 0.0
    %1829 = vmatpush1.xpose.msra.mxu0 %v1826
    %1830 = vmatprep.subr.mxu0 0.0
    %1831 = vmatpush1.xpose.msra.mxu0 0.0
    %1832 = vmatprep.subr.mxu0 0.0
    %1833 = vmatpush1.xpose.msra.mxu0 0.0
    %1834 = vmatprep.subr.mxu0 0.0
    %1835 = vmatpush1.xpose.msra.mxu0 0.0
    %1836 = vmatprep.subr.mxu0 0.0
    %1837 = vmatpush1.xpose.msra.mxu0 0.0
    %1838 = vmatprep.subr.mxu0 0.0
    %1839 = vmatpush1.xpose.msra.mxu0 0.0
    %1840 = vmatprep.subr.mxu0 0.0
    %1841 = vmatpush1.xpose.msra.mxu0 0.0
    %1842 = vmatprep.subr.mxu0 0.0
    %1843 = vmatpush1.xpose.msra.mxu0 0.0
    %1844 = vmatprep.subr.mxu0 0.0
    %1845 = vmatpush1.xpose.msra.mxu0 0.0
    %1846 = vmatprep.subr.mxu0 0.0
    %1847 = vmatpush1.xpose.msra.mxu0 0.0
    %1848 = vmatprep.subr.mxu0 0.0
    %1849 = vmatpush1.xpose.msra.mxu0 0.0
    %1850 = vmatprep.subr.mxu0 0.0
    %1851 = vmatpush1.xpose.msra.mxu0 0.0
    %1852 = vmatprep.subr.mxu0 0.0
    %1853 = vmatpush1.xpose.msra.mxu0 0.0
    %1854 = vmatprep.subr.mxu0 0.0
    %1855 = vmatpush1.xpose.msra.mxu0 0.0
    %1856 = vmatprep.subr.mxu0 0.0
    %1857 = vmatpush1.xpose.msra.mxu0 0.0
    %1858 = vmatprep.subr.mxu0 0.0
    %1859 = vmatpush1.xpose.msra.mxu0 0.0
    %1860 = vmatprep.subr.mxu0 0.0
    %1861 = vmatpush1.xpose.msra.mxu0 0.0
    %1862 = vmatprep.subr.mxu0 0.0
    %1863 = vmatpush1.xpose.msra.mxu0 0.0
    %1864 = vmatprep.subr.mxu0 0.0
    %1865 = vmatpush1.xpose.msra.mxu0 0.0
    %1866 = vmatprep.subr.mxu0 0.0
    %1867 = vmatpush1.xpose.msra.mxu0 0.0
    %1868 = vmatprep.subr.mxu0 0.0
    %1869 = vmatpush1.xpose.msra.mxu0 0.0
    %1870 = vmatprep.subr.mxu0 0.0
    %1871 = vmatpush1.xpose.msra.mxu0 0.0
    %1872 = vmatprep.subr.mxu0 0.0
    %1873 = vmatpush1.xpose.msra.mxu0 0.0
    %1874 = vmatprep.subr.mxu0 0.0
    %1875 = vmatpush1.xpose.msra.mxu0 0.0
    %1876 = vmatprep.subr.mxu0 0.0
    %1877 = vmatpush1.xpose.msra.mxu0 0.0
    %1878 = vmatprep.subr.mxu0 0.0
    %1879 = vmatpush1.xpose.msra.mxu0 0.0
    %1880 = vmatprep.subr.mxu0 0.0
    %1881 = vmatpush1.xpose.msra.mxu0 0.0
    %1882 = vmatprep.subr.mxu0 0.0
    %1883 = vmatpush1.xpose.msra.mxu0 0.0
    %1884 = vmatprep.subr.mxu0 0.0
    %1885 = vmatpush1.xpose.msra.mxu0 0.0
    %1886 = vmatprep.subr.mxu0 0.0
    %1887 = vmatpush1.xpose.msra.mxu0 0.0
    %1888 = vmatprep.subr.mxu0 0.0
    %1889 = vmatpush1.xpose.msra.mxu0 0.0
    %1890 = vmatprep.subr.mxu0 0.0
    %1891 = vmatpush1.xpose.msra.mxu0 0.0
    %1892 = vmatprep.mubr.f32.mxu0 0.0
    %1893 = vmatmul.mubr.f32.gmra.mrb[0].mxu0 %v1826
    %v1894 = vpop.f32.mrb[0].mxu0
    %v1895 = vadd.f32 0.0, %v1894
    %v1896 = vpop.f32.mrb[0].mxu0
    %1897 = vdwg.mxu0
    %v1898 = vsub.f32 %v1822, %v1895
    %v1899 = vmul.f32 %v1898, %v1898
    %v1900 = vadd.f32 %v1446, %v1899
    %v1901 = vmul.f32 %v57, 0.16666667
    %v1902 = vsel %vm61, %v1901, -inf
    %1903 = vmax.xlane.f32.xlu0 %v1902
    %v1904 = vpop.xlane.xlu0 %1903
    %v1905 = vsub.f32 %v1901, %v1904
    %v1906 = vmul.f32 %v1905, 1.442695
    %v1907 = vpow.pop %v1906
    %v1908 = vsel %vm61, %v1907, 0.0
    %1909 = vadd.xlane.f32.xlu0 %v1908
    %v1910 = vpop.xlane.xlu0 %1909
    %v1911 = vrcp.pop %v1910
    %v1912 = vmul.f32 %v1907, %v1911
    %v1913 = vlog2.pop %v1910
    %v1914 = vmul.f32 %v1913, 0.6931472
    %v1915 = vsub.f32 %v1905, %v1914
    %v1916 = vmul.f32 %v58, 0.16666667
    %v1917 = vsel %vm61, %v1916, -inf
    %1918 = vmax.xlane.f32.xlu0 %v1917
    %v1919 = vpop.xlane.xlu0 %1918
    %v1920 = vsub.f32 %v1916, %v1919
    %v1921 = vmul.f32 %v1920, 1.442695
    %v1922 = vpow.pop %v1921
    %v1923 = vsel %vm61, %v1922, 0.0
    %1924 = vadd.xlane.f32.xlu0 %v1923
    %v1925 = vpop.xlane.xlu0 %1924
    %v1926 = vrcp.pop %v1925
    %v1927 = vmul.f32 %v1922, %v1926
    %v1928 = vlog2.pop %v1925
    %v1929 = vmul.f32 %v1928, 0.6931472
    %v1930 = vsub.f32 %v1920, %v1929
    %v1931 = vsub.f32 %v1930, %v1915
    %v1932 = vmul.f32 %v1927, %v1931
    %v1933 = vmul.f32 %v1932, 36.0
    %v1934 = vadd.f32 %v1480, %v1933
    %v1935 = vadd.f32 %v1481, %v1933
    %1936 = vxpose.xlu0.b32.start [1/16] %v1927, 128
    %1937 = vxpose.xlu0.b32.cont [2/16] 0.0, 128
    %1938 = vxpose.xlu0.b32.cont [3/16] 0.0, 128
    %1939 = vxpose.xlu0.b32.cont [4/16] 0.0, 128
    %1940 = vxpose.xlu0.b32.cont [5/16] 0.0, 128
    %1941 = vxpose.xlu0.b32.cont [6/16] 0.0, 128
    %1942 = vxpose.xlu0.b32.cont [7/16] 0.0, 128
    %1943 = vxpose.xlu0.b32.cont [8/16] 0.0, 128
    %1944 = vxpose.xlu0.b32.cont [9/16] 0.0, 128
    %1945 = vxpose.xlu0.b32.cont [10/16] 0.0, 128
    %1946 = vxpose.xlu0.b32.cont [11/16] 0.0, 128
    %1947 = vxpose.xlu0.b32.cont [12/16] 0.0, 128
    %1948 = vxpose.xlu0.b32.cont [13/16] 0.0, 128
    %1949 = vxpose.xlu0.b32.cont [14/16] 0.0, 128
    %1950 = vxpose.xlu0.b32.cont [15/16] 0.0, 128
    %1951 = vxpose.xlu0.b32.end [16/16] 0.0, 128
    %v1952 = vpop.trf.xlu0
    %v1953 = vpop.trf.xlu0
    %v1954 = vpop.trf.xlu0
    %v1955 = vpop.trf.xlu0
    %v1956 = vpop.trf.xlu0
    %v1957 = vpop.trf.xlu0
    %v1958 = vpop.trf.xlu0
    %v1959 = vpop.trf.xlu0
    %v1960 = vpop.trf.xlu0
    %v1961 = vpop.trf.xlu0
    %v1962 = vpop.trf.xlu0
    %v1963 = vpop.trf.xlu0
    %v1964 = vpop.trf.xlu0
    %v1965 = vpop.trf.xlu0
    %v1966 = vpop.trf.xlu0
    %v1967 = vpop.trf.xlu0
    %v1969 = vsel %vm153, %v1952, 0
    %v1972 = vsel %vm153, %v1953, 0
    %v1975 = vsel %vm153, %v1954, 0
    %v1978 = vsel %vm153, %v1955, 0
    %1980 = vmatprep.subr.mxu0 0.0
    %1981 = vmatpush1.msra.mxu0 %v1927
    %1982 = vmatprep.subr.mxu0 0.0
    %1983 = vmatpush1.msra.mxu0 0.0
    %1984 = vmatprep.subr.mxu0 0.0
    %1985 = vmatpush1.msra.mxu0 0.0
    %1986 = vmatprep.subr.mxu0 0.0
    %1987 = vmatpush1.msra.mxu0 0.0
    %1988 = vmatprep.subr.mxu0 0.0
    %1989 = vmatpush1.msra.mxu0 0.0
    %1990 = vmatprep.subr.mxu0 0.0
    %1991 = vmatpush1.msra.mxu0 0.0
    %1992 = vmatprep.subr.mxu0 0.0
    %1993 = vmatpush1.msra.mxu0 0.0
    %1994 = vmatprep.subr.mxu0 0.0
    %1995 = vmatpush1.msra.mxu0 0.0
    %1996 = vmatprep.subr.mxu0 0.0
    %1997 = vmatpush1.msra.mxu0 0.0
    %1998 = vmatprep.subr.mxu0 0.0
    %1999 = vmatpush1.msra.mxu0 0.0
    %2000 = vmatprep.subr.mxu0 0.0
    %2001 = vmatpush1.msra.mxu0 0.0
    %2002 = vmatprep.subr.mxu0 0.0
    %2003 = vmatpush1.msra.mxu0 0.0
    %2004 = vmatprep.subr.mxu0 0.0
    %2005 = vmatpush1.msra.mxu0 0.0
    %2006 = vmatprep.subr.mxu0 0.0
    %2007 = vmatpush1.msra.mxu0 0.0
    %2008 = vmatprep.subr.mxu0 0.0
    %2009 = vmatpush1.msra.mxu0 0.0
    %2010 = vmatprep.subr.mxu0 0.0
    %2011 = vmatpush1.msra.mxu0 0.0
    %2012 = vmatprep.subr.mxu0 0.0
    %2013 = vmatpush1.msra.mxu0 0.0
    %2014 = vmatprep.subr.mxu0 0.0
    %2015 = vmatpush1.msra.mxu0 0.0
    %2016 = vmatprep.subr.mxu0 0.0
    %2017 = vmatpush1.msra.mxu0 0.0
    %2018 = vmatprep.subr.mxu0 0.0
    %2019 = vmatpush1.msra.mxu0 0.0
    %2020 = vmatprep.subr.mxu0 0.0
    %2021 = vmatpush1.msra.mxu0 0.0
    %2022 = vmatprep.subr.mxu0 0.0
    %2023 = vmatpush1.msra.mxu0 0.0
    %2024 = vmatprep.subr.mxu0 0.0
    %2025 = vmatpush1.msra.mxu0 0.0
    %2026 = vmatprep.subr.mxu0 0.0
    %2027 = vmatpush1.msra.mxu0 0.0
    %2028 = vmatprep.subr.mxu0 0.0
    %2029 = vmatpush1.msra.mxu0 0.0
    %2030 = vmatprep.subr.mxu0 0.0
    %2031 = vmatpush1.msra.mxu0 0.0
    %2032 = vmatprep.subr.mxu0 0.0
    %2033 = vmatpush1.msra.mxu0 0.0
    %2034 = vmatprep.subr.mxu0 0.0
    %2035 = vmatpush1.msra.mxu0 0.0
    %2036 = vmatprep.subr.mxu0 0.0
    %2037 = vmatpush1.msra.mxu0 0.0
    %2038 = vmatprep.subr.mxu0 0.0
    %2039 = vmatpush1.msra.mxu0 0.0
    %2040 = vmatprep.subr.mxu0 0.0
    %2041 = vmatpush1.msra.mxu0 0.0
    %2042 = vmatprep.subr.mxu0 0.0
    %2043 = vmatpush1.msra.mxu0 0.0
    %2044 = vmatprep.mubr.f32.mxu0 0.0
    %2045 = vmatmul.mubr.f32.gmra.mrb[0].mxu0 %v1969
    %v2046 = vpop.f32.mrb[0].mxu0
    %v2047 = vadd.f32 0.0, %v2046
    %v2048 = vpop.f32.mrb[0].mxu0
    %2049 = vmatprep.mubr.f32.mxu0 0.0
    %2050 = vmatmul.mubr.f32.gmra.mrb[0].mxu0 %v1972
    %v2051 = vpop.f32.mrb[0].mxu0
    %v2052 = vadd.f32 0.0, %v2051
    %v2053 = vpop.f32.mrb[0].mxu0
    %2054 = vmatprep.mubr.f32.mxu0 0.0
    %2055 = vmatmul.mubr.f32.gmra.mrb[0].mxu0 %v1975
    %v2056 = vpop.f32.mrb[0].mxu0
    %v2057 = vadd.f32 0.0, %v2056
    %v2058 = vpop.f32.mrb[0].mxu0
    %2059 = vmatprep.mubr.f32.mxu0 0.0
    %2060 = vmatmul.mubr.f32.gmra.mrb[0].mxu0 %v1978
    %v2061 = vpop.f32.mrb[0].mxu0
    %v2062 = vadd.f32 0.0, %v2061
    %v2063 = vpop.f32.mrb[0].mxu0
    %2064 = vdwg.mxu0
    %2065 = vxpose.xlu0.b32.start [1/16] %v1912, 128
    %2066 = vxpose.xlu0.b32.cont [2/16] 0.0, 128
    %2067 = vxpose.xlu0.b32.cont [3/16] 0.0, 128
    %2068 = vxpose.xlu0.b32.cont [4/16] 0.0, 128
    %2069 = vxpose.xlu0.b32.cont [5/16] 0.0, 128
    %2070 = vxpose.xlu0.b32.cont [6/16] 0.0, 128
    %2071 = vxpose.xlu0.b32.cont [7/16] 0.0, 128
    %2072 = vxpose.xlu0.b32.cont [8/16] 0.0, 128
    %2073 = vxpose.xlu0.b32.cont [9/16] 0.0, 128
    %2074 = vxpose.xlu0.b32.cont [10/16] 0.0, 128
    %2075 = vxpose.xlu0.b32.cont [11/16] 0.0, 128
    %2076 = vxpose.xlu0.b32.cont [12/16] 0.0, 128
    %2077 = vxpose.xlu0.b32.cont [13/16] 0.0, 128
    %2078 = vxpose.xlu0.b32.cont [14/16] 0.0, 128
    %2079 = vxpose.xlu0.b32.cont [15/16] 0.0, 128
    %2080 = vxpose.xlu0.b32.end [16/16] 0.0, 128
    %v2081 = vpop.trf.xlu0
    %v2082 = vpop.trf.xlu0
    %v2083 = vpop.trf.xlu0
    %v2084 = vpop.trf.xlu0
    %v2085 = vpop.trf.xlu0
    %v2086 = vpop.trf.xlu0
    %v2087 = vpop.trf.xlu0
    %v2088 = vpop.trf.xlu0
    %v2089 = vpop.trf.xlu0
    %v2090 = vpop.trf.xlu0
    %v2091 = vpop.trf.xlu0
    %v2092 = vpop.trf.xlu0
    %v2093 = vpop.trf.xlu0
    %v2094 = vpop.trf.xlu0
    %v2095 = vpop.trf.xlu0
    %v2096 = vpop.trf.xlu0
    %v2098 = vsel %vm153, %v2081, 0
    %v2101 = vsel %vm153, %v2082, 0
    %v2104 = vsel %vm153, %v2083, 0
    %v2107 = vsel %vm153, %v2084, 0
    %2109 = vmatprep.subr.mxu0 0.0
    %2110 = vmatpush1.msra.mxu0 %v1912
    %2111 = vmatprep.subr.mxu0 0.0
    %2112 = vmatpush1.msra.mxu0 0.0
    %2113 = vmatprep.subr.mxu0 0.0
    %2114 = vmatpush1.msra.mxu0 0.0
    %2115 = vmatprep.subr.mxu0 0.0
    %2116 = vmatpush1.msra.mxu0 0.0
    %2117 = vmatprep.subr.mxu0 0.0
    %2118 = vmatpush1.msra.mxu0 0.0
    %2119 = vmatprep.subr.mxu0 0.0
    %2120 = vmatpush1.msra.mxu0 0.0
    %2121 = vmatprep.subr.mxu0 0.0
    %2122 = vmatpush1.msra.mxu0 0.0
    %2123 = vmatprep.subr.mxu0 0.0
    %2124 = vmatpush1.msra.mxu0 0.0
    %2125 = vmatprep.subr.mxu0 0.0
    %2126 = vmatpush1.msra.mxu0 0.0
    %2127 = vmatprep.subr.mxu0 0.0
    %2128 = vmatpush1.msra.mxu0 0.0
    %2129 = vmatprep.subr.mxu0 0.0
    %2130 = vmatpush1.msra.mxu0 0.0
    %2131 = vmatprep.subr.mxu0 0.0
    %2132 = vmatpush1.msra.mxu0 0.0
    %2133 = vmatprep.subr.mxu0 0.0
    %2134 = vmatpush1.msra.mxu0 0.0
    %2135 = vmatprep.subr.mxu0 0.0
    %2136 = vmatpush1.msra.mxu0 0.0
    %2137 = vmatprep.subr.mxu0 0.0
    %2138 = vmatpush1.msra.mxu0 0.0
    %2139 = vmatprep.subr.mxu0 0.0
    %2140 = vmatpush1.msra.mxu0 0.0
    %2141 = vmatprep.subr.mxu0 0.0
    %2142 = vmatpush1.msra.mxu0 0.0
    %2143 = vmatprep.subr.mxu0 0.0
    %2144 = vmatpush1.msra.mxu0 0.0
    %2145 = vmatprep.subr.mxu0 0.0
    %2146 = vmatpush1.msra.mxu0 0.0
    %2147 = vmatprep.subr.mxu0 0.0
    %2148 = vmatpush1.msra.mxu0 0.0
    %2149 = vmatprep.subr.mxu0 0.0
    %2150 = vmatpush1.msra.mxu0 0.0
    %2151 = vmatprep.subr.mxu0 0.0
    %2152 = vmatpush1.msra.mxu0 0.0
    %2153 = vmatprep.subr.mxu0 0.0
    %2154 = vmatpush1.msra.mxu0 0.0
    %2155 = vmatprep.subr.mxu0 0.0
    %2156 = vmatpush1.msra.mxu0 0.0
    %2157 = vmatprep.subr.mxu0 0.0
    %2158 = vmatpush1.msra.mxu0 0.0
    %2159 = vmatprep.subr.mxu0 0.0
    %2160 = vmatpush1.msra.mxu0 0.0
    %2161 = vmatprep.subr.mxu0 0.0
    %2162 = vmatpush1.msra.mxu0 0.0
    %2163 = vmatprep.subr.mxu0 0.0
    %2164 = vmatpush1.msra.mxu0 0.0
    %2165 = vmatprep.subr.mxu0 0.0
    %2166 = vmatpush1.msra.mxu0 0.0
    %2167 = vmatprep.subr.mxu0 0.0
    %2168 = vmatpush1.msra.mxu0 0.0
    %2169 = vmatprep.subr.mxu0 0.0
    %2170 = vmatpush1.msra.mxu0 0.0
    %2171 = vmatprep.subr.mxu0 0.0
    %2172 = vmatpush1.msra.mxu0 0.0
    %2173 = vmatprep.mubr.f32.mxu0 0.0
    %2174 = vmatmul.mubr.f32.gmra.mrb[0].mxu0 %v2098
    %v2175 = vpop.f32.mrb[0].mxu0
    %v2176 = vadd.f32 0.0, %v2175
    %v2177 = vpop.f32.mrb[0].mxu0
    %2178 = vmatprep.mubr.f32.mxu0 0.0
    %2179 = vmatmul.mubr.f32.gmra.mrb[0].mxu0 %v2101
    %v2180 = vpop.f32.mrb[0].mxu0
    %v2181 = vadd.f32 0.0, %v2180
    %v2182 = vpop.f32.mrb[0].mxu0
    %2183 = vmatprep.mubr.f32.mxu0 0.0
    %2184 = vmatmul.mubr.f32.gmra.mrb[0].mxu0 %v2104
    %v2185 = vpop.f32.mrb[0].mxu0
    %v2186 = vadd.f32 0.0, %v2185
    %v2187 = vpop.f32.mrb[0].mxu0
    %2188 = vmatprep.mubr.f32.mxu0 0.0
    %2189 = vmatmul.mubr.f32.gmra.mrb[0].mxu0 %v2107
    %v2190 = vpop.f32.mrb[0].mxu0
    %v2191 = vadd.f32 0.0, %v2190
    %v2192 = vpop.f32.mrb[0].mxu0
    %2193 = vdwg.mxu0
    %v2194 = vsub.f32 %v2047, %v2176
    %v2195 = vsub.f32 %v2052, %v2181
    %v2196 = vsub.f32 %v2057, %v2186
    %v2197 = vsub.f32 %v2062, %v2191
    %v2198 = vmul.f32 %v2194, %v2194
    %v2199 = vmul.f32 %v2195, %v2195
    %v2200 = vmul.f32 %v2196, %v2196
    %v2201 = vmul.f32 %v2197, %v2197
    %v2202 = vadd.f32 %v1748, %v2198
    %v2203 = vadd.f32 %v1749, %v2199
    %v2204 = vadd.f32 %v1750, %v2200
    %v2205 = vadd.f32 %v1751, %v2201
    %v2207 = vsel %vm61, %v1927, 0
    %2209 = vmatprep.subr.mxu0 0.0
    %2210 = vmatpush1.xpose.msra.mxu0 %v2207
    %2211 = vmatprep.subr.mxu0 0.0
    %2212 = vmatpush1.xpose.msra.mxu0 0.0
    %2213 = vmatprep.subr.mxu0 0.0
    %2214 = vmatpush1.xpose.msra.mxu0 0.0
    %2215 = vmatprep.subr.mxu0 0.0
    %2216 = vmatpush1.xpose.msra.mxu0 0.0
    %2217 = vmatprep.subr.mxu0 0.0
    %2218 = vmatpush1.xpose.msra.mxu0 0.0
    %2219 = vmatprep.subr.mxu0 0.0
    %2220 = vmatpush1.xpose.msra.mxu0 0.0
    %2221 = vmatprep.subr.mxu0 0.0
    %2222 = vmatpush1.xpose.msra.mxu0 0.0
    %2223 = vmatprep.subr.mxu0 0.0
    %2224 = vmatpush1.xpose.msra.mxu0 0.0
    %2225 = vmatprep.subr.mxu0 0.0
    %2226 = vmatpush1.xpose.msra.mxu0 0.0
    %2227 = vmatprep.subr.mxu0 0.0
    %2228 = vmatpush1.xpose.msra.mxu0 0.0
    %2229 = vmatprep.subr.mxu0 0.0
    %2230 = vmatpush1.xpose.msra.mxu0 0.0
    %2231 = vmatprep.subr.mxu0 0.0
    %2232 = vmatpush1.xpose.msra.mxu0 0.0
    %2233 = vmatprep.subr.mxu0 0.0
    %2234 = vmatpush1.xpose.msra.mxu0 0.0
    %2235 = vmatprep.subr.mxu0 0.0
    %2236 = vmatpush1.xpose.msra.mxu0 0.0
    %2237 = vmatprep.subr.mxu0 0.0
    %2238 = vmatpush1.xpose.msra.mxu0 0.0
    %2239 = vmatprep.subr.mxu0 0.0
    %2240 = vmatpush1.xpose.msra.mxu0 0.0
    %2241 = vmatprep.subr.mxu0 0.0
    %2242 = vmatpush1.xpose.msra.mxu0 0.0
    %2243 = vmatprep.subr.mxu0 0.0
    %2244 = vmatpush1.xpose.msra.mxu0 0.0
    %2245 = vmatprep.subr.mxu0 0.0
    %2246 = vmatpush1.xpose.msra.mxu0 0.0
    %2247 = vmatprep.subr.mxu0 0.0
    %2248 = vmatpush1.xpose.msra.mxu0 0.0
    %2249 = vmatprep.subr.mxu0 0.0
    %2250 = vmatpush1.xpose.msra.mxu0 0.0
    %2251 = vmatprep.subr.mxu0 0.0
    %2252 = vmatpush1.xpose.msra.mxu0 0.0
    %2253 = vmatprep.subr.mxu0 0.0
    %2254 = vmatpush1.xpose.msra.mxu0 0.0
    %2255 = vmatprep.subr.mxu0 0.0
    %2256 = vmatpush1.xpose.msra.mxu0 0.0
    %2257 = vmatprep.subr.mxu0 0.0
    %2258 = vmatpush1.xpose.msra.mxu0 0.0
    %2259 = vmatprep.subr.mxu0 0.0
    %2260 = vmatpush1.xpose.msra.mxu0 0.0
    %2261 = vmatprep.subr.mxu0 0.0
    %2262 = vmatpush1.xpose.msra.mxu0 0.0
    %2263 = vmatprep.subr.mxu0 0.0
    %2264 = vmatpush1.xpose.msra.mxu0 0.0
    %2265 = vmatprep.subr.mxu0 0.0
    %2266 = vmatpush1.xpose.msra.mxu0 0.0
    %2267 = vmatprep.subr.mxu0 0.0
    %2268 = vmatpush1.xpose.msra.mxu0 0.0
    %2269 = vmatprep.subr.mxu0 0.0
    %2270 = vmatpush1.xpose.msra.mxu0 0.0
    %2271 = vmatprep.subr.mxu0 0.0
    %2272 = vmatpush1.xpose.msra.mxu0 0.0
    %2273 = vmatprep.mubr.f32.mxu0 0.0
    %2274 = vmatmul.mubr.f32.gmra.mrb[0].mxu0 %v2207
    %v2275 = vpop.f32.mrb[0].mxu0
    %v2276 = vadd.f32 0.0, %v2275
    %v2277 = vpop.f32.mrb[0].mxu0
    %2278 = vdwg.mxu0
    %v2280 = vsel %vm61, %v1912, 0
    %2282 = vmatprep.subr.mxu0 0.0
    %2283 = vmatpush1.xpose.msra.mxu0 %v2280
    %2284 = vmatprep.subr.mxu0 0.0
    %2285 = vmatpush1.xpose.msra.mxu0 0.0
    %2286 = vmatprep.subr.mxu0 0.0
    %2287 = vmatpush1.xpose.msra.mxu0 0.0
    %2288 = vmatprep.subr.mxu0 0.0
    %2289 = vmatpush1.xpose.msra.mxu0 0.0
    %2290 = vmatprep.subr.mxu0 0.0
    %2291 = vmatpush1.xpose.msra.mxu0 0.0
    %2292 = vmatprep.subr.mxu0 0.0
    %2293 = vmatpush1.xpose.msra.mxu0 0.0
    %2294 = vmatprep.subr.mxu0 0.0
    %2295 = vmatpush1.xpose.msra.mxu0 0.0
    %2296 = vmatprep.subr.mxu0 0.0
    %2297 = vmatpush1.xpose.msra.mxu0 0.0
    %2298 = vmatprep.subr.mxu0 0.0
    %2299 = vmatpush1.xpose.msra.mxu0 0.0
    %2300 = vmatprep.subr.mxu0 0.0
    %2301 = vmatpush1.xpose.msra.mxu0 0.0
    %2302 = vmatprep.subr.mxu0 0.0
    %2303 = vmatpush1.xpose.msra.mxu0 0.0
    %2304 = vmatprep.subr.mxu0 0.0
    %2305 = vmatpush1.xpose.msra.mxu0 0.0
    %2306 = vmatprep.subr.mxu0 0.0
    %2307 = vmatpush1.xpose.msra.mxu0 0.0
    %2308 = vmatprep.subr.mxu0 0.0
    %2309 = vmatpush1.xpose.msra.mxu0 0.0
    %2310 = vmatprep.subr.mxu0 0.0
    %2311 = vmatpush1.xpose.msra.mxu0 0.0
    %2312 = vmatprep.subr.mxu0 0.0
    %2313 = vmatpush1.xpose.msra.mxu0 0.0
    %2314 = vmatprep.subr.mxu0 0.0
    %2315 = vmatpush1.xpose.msra.mxu0 0.0
    %2316 = vmatprep.subr.mxu0 0.0
    %2317 = vmatpush1.xpose.msra.mxu0 0.0
    %2318 = vmatprep.subr.mxu0 0.0
    %2319 = vmatpush1.xpose.msra.mxu0 0.0
    %2320 = vmatprep.subr.mxu0 0.0
    %2321 = vmatpush1.xpose.msra.mxu0 0.0
    %2322 = vmatprep.subr.mxu0 0.0
    %2323 = vmatpush1.xpose.msra.mxu0 0.0
    %2324 = vmatprep.subr.mxu0 0.0
    %2325 = vmatpush1.xpose.msra.mxu0 0.0
    %2326 = vmatprep.subr.mxu0 0.0
    %2327 = vmatpush1.xpose.msra.mxu0 0.0
    %2328 = vmatprep.subr.mxu0 0.0
    %2329 = vmatpush1.xpose.msra.mxu0 0.0
    %2330 = vmatprep.subr.mxu0 0.0
    %2331 = vmatpush1.xpose.msra.mxu0 0.0
    %2332 = vmatprep.subr.mxu0 0.0
    %2333 = vmatpush1.xpose.msra.mxu0 0.0
    %2334 = vmatprep.subr.mxu0 0.0
    %2335 = vmatpush1.xpose.msra.mxu0 0.0
    %2336 = vmatprep.subr.mxu0 0.0
    %2337 = vmatpush1.xpose.msra.mxu0 0.0
    %2338 = vmatprep.subr.mxu0 0.0
    %2339 = vmatpush1.xpose.msra.mxu0 0.0
    %2340 = vmatprep.subr.mxu0 0.0
    %2341 = vmatpush1.xpose.msra.mxu0 0.0
    %2342 = vmatprep.subr.mxu0 0.0
    %2343 = vmatpush1.xpose.msra.mxu0 0.0
    %2344 = vmatprep.subr.mxu0 0.0
    %2345 = vmatpush1.xpose.msra.mxu0 0.0
    %2346 = vmatprep.mubr.f32.mxu0 0.0
    %2347 = vmatmul.mubr.f32.gmra.mrb[0].mxu0 %v2280
    %v2348 = vpop.f32.mrb[0].mxu0
    %v2349 = vadd.f32 0.0, %v2348
    %v2350 = vpop.f32.mrb[0].mxu0
    %2351 = vdwg.mxu0
    %v2352 = vsub.f32 %v2276, %v2349
    %v2353 = vmul.f32 %v2352, %v2352
    %v2354 = vadd.f32 %v1900, %v2353
    %v2355 = vmul.f32 %v59, 0.25
    %v2356 = vsel %vm61, %v2355, -inf
    %2357 = vmax.xlane.f32.xlu0 %v2356
    %v2358 = vpop.xlane.xlu0 %2357
    %v2359 = vsub.f32 %v2355, %v2358
    %v2360 = vmul.f32 %v2359, 1.442695
    %v2361 = vpow.pop %v2360
    %v2362 = vsel %vm61, %v2361, 0.0
    %2363 = vadd.xlane.f32.xlu0 %v2362
    %v2364 = vpop.xlane.xlu0 %2363
    %v2365 = vlog2.pop %v2364
    %v2366 = vmul.f32 %v2365, 0.6931472
    %v2367 = vsub.f32 %v2359, %v2366
    %v2368 = vmul.f32 %v60, 0.25
    %v2369 = vsel %vm61, %v2368, -inf
    %2370 = vmax.xlane.f32.xlu0 %v2369
    %v2371 = vpop.xlane.xlu0 %2370
    %v2372 = vsub.f32 %v2368, %v2371
    %v2373 = vmul.f32 %v2372, 1.442695
    %v2374 = vpow.pop %v2373
    %v2375 = vsel %vm61, %v2374, 0.0
    %2376 = vadd.xlane.f32.xlu0 %v2375
    %v2377 = vpop.xlane.xlu0 %2376
    %v2378 = vrcp.pop %v2377
    %v2379 = vmul.f32 %v2374, %v2378
    %v2380 = vlog2.pop %v2377
    %v2381 = vmul.f32 %v2380, 0.6931472
    %v2382 = vsub.f32 %v2372, %v2381
    %v2383 = vsub.f32 %v2382, %v2367
    %v2384 = vmul.f32 %v2379, %v2383
    %v2385 = vmul.f32 %v2384, 16.0
    %v2386 = vadd.f32 %v1935, %v2385
    %v2387 = vmul.f32 %v59, 0.33333334
    %v2388 = vsel %vm61, %v2387, -inf
    %2389 = vmax.xlane.f32.xlu0 %v2388
    %v2390 = vpop.xlane.xlu0 %2389
    %v2391 = vsub.f32 %v2387, %v2390
    %v2392 = vmul.f32 %v2391, 1.442695
    %v2393 = vpow.pop %v2392
    %v2394 = vsel %vm61, %v2393, 0.0
    %2395 = vadd.xlane.f32.xlu0 %v2394
    %v2396 = vpop.xlane.xlu0 %2395
    %v2397 = vlog2.pop %v2396
    %v2398 = vmul.f32 %v2397, 0.6931472
    %v2399 = vsub.f32 %v2391, %v2398
    %v2400 = vmul.f32 %v60, 0.33333334
    %v2401 = vsel %vm61, %v2400, -inf
    %2402 = vmax.xlane.f32.xlu0 %v2401
    %v2403 = vpop.xlane.xlu0 %2402
    %v2404 = vsub.f32 %v2400, %v2403
    %v2405 = vmul.f32 %v2404, 1.442695
    %v2406 = vpow.pop %v2405
    %v2407 = vsel %vm61, %v2406, 0.0
    %2408 = vadd.xlane.f32.xlu0 %v2407
    %v2409 = vpop.xlane.xlu0 %2408
    %v2410 = vrcp.pop %v2409
    %v2411 = vmul.f32 %v2406, %v2410
    %v2412 = vlog2.pop %v2409
    %v2413 = vmul.f32 %v2412, 0.6931472
    %v2414 = vsub.f32 %v2404, %v2413
    %v2415 = vsub.f32 %v2414, %v2399
    %v2416 = vmul.f32 %v2411, %v2415
    %v2417 = vmul.f32 %v2416, 9.0
    %v2418 = vadd.f32 %v2386, %v2417
    %v2419 = vmul.f32 %v59, 0.2
    %v2420 = vsel %vm61, %v2419, -inf
    %2421 = vmax.xlane.f32.xlu0 %v2420
    %v2422 = vpop.xlane.xlu0 %2421
    %v2423 = vsub.f32 %v2419, %v2422
    %v2424 = vmul.f32 %v2423, 1.442695
    %v2425 = vpow.pop %v2424
    %v2426 = vsel %vm61, %v2425, 0.0
    %2427 = vadd.xlane.f32.xlu0 %v2426
    %v2428 = vpop.xlane.xlu0 %2427
    %v2429 = vlog2.pop %v2428
    %v2430 = vmul.f32 %v2429, 0.6931472
    %v2431 = vsub.f32 %v2423, %v2430
    %v2432 = vmul.f32 %v60, 0.2
    %v2433 = vsel %vm61, %v2432, -inf
    %2434 = vmax.xlane.f32.xlu0 %v2433
    %v2435 = vpop.xlane.xlu0 %2434
    %v2436 = vsub.f32 %v2432, %v2435
    %v2437 = vmul.f32 %v2436, 1.442695
    %v2438 = vpow.pop %v2437
    %v2439 = vsel %vm61, %v2438, 0.0
    %2440 = vadd.xlane.f32.xlu0 %v2439
    %v2441 = vpop.xlane.xlu0 %2440
    %v2442 = vrcp.pop %v2441
    %v2443 = vmul.f32 %v2438, %v2442
    %v2444 = vlog2.pop %v2441
    %v2445 = vmul.f32 %v2444, 0.6931472
    %v2446 = vsub.f32 %v2436, %v2445
    %v2447 = vsub.f32 %v2446, %v2431
    %v2448 = vmul.f32 %v2443, %v2447
    %v2449 = vmul.f32 %v2448, 25.0
    %v2450 = vadd.f32 %v2418, %v2449
    %v2451 = vsel %vm61, %v1934, 0.0
    %2452 = vadd.xlane.f32.xlu0 %v2451
    %v2453 = vpop.xlane.xlu0 %2452
    %v2454 = vrot.slane %v2453, 4
    %v2455 = vadd.f32 %v2453, %v2454
    %v2456 = vrot.slane %v2455, 2
    %v2457 = vadd.f32 %v2455, %v2456
    %v2458 = vrot.slane %v2457, 1
    %v2459 = vadd.f32 %v2457, %v2458
    %s2460 = vtos %v2459
    %s2461 = smul.f32 %s2460, 0.125
    %s2462 = scalar_lea.smem [#allocation9], 0
    %2463 = sst [smem:[%s2462]] %s2461
    %v2464 = vsel %vm61, %v2450, 0.0
    %2465 = vadd.xlane.f32.xlu0 %v2464
    %v2466 = vpop.xlane.xlu0 %2465
    %v2467 = vrot.slane %v2466, 4
    %v2468 = vadd.f32 %v2466, %v2467
    %v2469 = vrot.slane %v2468, 2
    %v2470 = vadd.f32 %v2468, %v2469
    %v2471 = vrot.slane %v2470, 1
    %v2472 = vadd.f32 %v2470, %v2471
    %s2473 = vtos %v2472
    %s2474 = smul.f32 %s2473, 0.125
    %s2475 = scalar_lea.smem [#allocation9], 1
    %2476 = sst [smem:[%s2475]] %s2474
    %v2477 = vsel %vm61, %v2202, 0.0
    %v2478 = vsel %vm61, %v2203, 0.0
    %v2479 = vadd.f32 %v2477, %v2478
    %v2480 = vsel %vm61, %v2204, 0.0
    %v2481 = vadd.f32 %v2479, %v2480
    %v2482 = vsel %vm61, %v2205, 0.0
    %v2483 = vadd.f32 %v2481, %v2482
    %2484 = vadd.xlane.f32.xlu0 %v2483
    %v2485 = vpop.xlane.xlu0 %2484
    %v2486 = vrot.slane %v2485, 4
    %v2487 = vadd.f32 %v2485, %v2486
    %v2488 = vrot.slane %v2487, 2
    %v2489 = vadd.f32 %v2487, %v2488
    %v2490 = vrot.slane %v2489, 1
    %v2491 = vadd.f32 %v2489, %v2490
    %s2492 = vtos %v2491
    %s2493 = smul.f32 %s2492, 0.03125
    %s2494 = scalar_lea.smem [#allocation9], 2
    %2495 = sst [smem:[%s2494]] %s2493
    %v2496 = vsel %vm153, %v2354, 0.0
    %2497 = vadd.xlane.f32.xlu0 %v2496
    %v2498 = vpop.xlane.xlu0 %2497
    %v2499 = vrot.slane %v2498, 4
    %v2500 = vadd.f32 %v2498, %v2499
    %v2501 = vrot.slane %v2500, 2
    %v2502 = vadd.f32 %v2500, %v2501
    %v2503 = vrot.slane %v2502, 1
    %v2504 = vadd.f32 %v2502, %v2503
    %s2505 = vtos %v2504
    %s2506 = smul.f32 %s2505, 0.125
    %s2507 = scalar_lea.smem [#allocation9], 3
    %2508 = sst [smem:[%s2507]] %s2506
    // Predicated region
    $region30: #{tpu_custom_call.1} parent=1 // pred_check
      _
    $region31: #{tpu_custom_call.1} parent=1 // pred_check_branch
      %2510 = sbr.rel (0) target = $region33
    $region32: #{tpu_custom_call.1} parent=1 // pred_region
      %s2512 = ssub.s32 16, 16
      %2513 = vsyncadd [#allocation5], %s2512
      %2516 = dma.smem_to_hbm [#allocation9], 16, %s4, [#allocation5]
    $region33: #{tpu_custom_call.1} parent=1 // pred_fallthru
      _
    // Predicated region
    $region34: #{tpu_custom_call.1} parent=1 // pred_check
      _
    $region35: #{tpu_custom_call.1} parent=1 // pred_check_branch
      %2518 = sbr.rel (0) target = $region37
    $region36: #{tpu_custom_call.1} parent=1 // pred_region
      _
    $region37: #{tpu_custom_call.1} parent=1 // pred_fallthru
      _
    // Predicated region
    $region38: #{tpu_custom_call.1} parent=1 // pred_check
      _
    $region39: #{tpu_custom_call.1} parent=1 // pred_check_branch
      %2520 = sbr.rel (0) target = $region41
    $region40: #{tpu_custom_call.1} parent=1 // pred_region
      %s2522 = ssub.s32 16, 16
      %2523 = vsyncadd [#allocation4], %s2522
      %s2525 = sshll.u32 [#allocation10], 4
      %s2526 = int_to_ptr.vmem [resolvable:$true] %s2525
      %2528 = dma.vmem_to_hbm [thread:$0]  %s2526, 16, %s6, [#allocation4]
    $region41: #{tpu_custom_call.1} parent=1 // pred_fallthru
      _
    // Predicated region
    $region42: #{tpu_custom_call.1} parent=1 // pred_check
      _
    $region43: #{tpu_custom_call.1} parent=1 // pred_check_branch
      %2530 = sbr.rel (0) target = $region45
    $region44: #{tpu_custom_call.1} parent=1 // pred_region
      %2531 = dma.done [#allocation5], 16
    $region45: #{tpu_custom_call.1} parent=1 // pred_fallthru
      _
    // Predicated region
    $region46: #{tpu_custom_call.1} parent=1 // pred_check
      _
    $region47: #{tpu_custom_call.1} parent=1 // pred_check_branch
      %2533 = sbr.rel (0) target = $region49
    $region48: #{tpu_custom_call.1} parent=1 // pred_region
      _
    $region49: #{tpu_custom_call.1} parent=1 // pred_fallthru
      _
    // Predicated region
    $region50: #{tpu_custom_call.1} parent=1 // pred_check
      _
    $region51: #{tpu_custom_call.1} parent=1 // pred_check_branch
      %2535 = sbr.rel (0) target = $region53
    $region52: #{tpu_custom_call.1} parent=1 // pred_region
      %2536 = dma.done [#allocation4], 16
    $region53: #{tpu_custom_call.1} parent=1 // pred_fallthru
      _
    %2537 = sfence
    %2538 = vsyncpa [#allocation3], 1
    %2539 = vsyncpa [#allocation7], 1
    %2540 = vsyncpa [#allocation4], 1
    %2541 = vsyncpa [#allocation5], 1

</llo_original>
